<compile_context>
chip_gen: v6e
topology: v6e:2x2x1
jax: 0.10.0
libtpu: 0.0.40
codegen_flags: <defaults>
</compile_context>

<pallas_src>
import functools
import math

import jax
import jax.numpy as jnp
import numpy as np
from jax.experimental import pallas as pl
from jax.experimental.pallas import tpu as pltpu


# ----------------------------------------------------------------------------
# Pallas kernel
# ----------------------------------------------------------------------------
def _layernorm(x, g, b, eps=1e-5):
    mu = jnp.mean(x, axis=-1, keepdims=True)
    xc = x - mu
    var = jnp.mean(xc * xc, axis=-1, keepdims=True)
    return xc * jax.lax.rsqrt(var + eps) * g + b


def model_kernel(T, L, B, H, dk, O,
                 s_ref, a_ref, pe_ref, mmt_ref,
                 ws_ref, wa_ref, wqk_ref, wv_ref, wo_ref, wfc_ref,
                 g1_ref, b1_ref, g2_ref, b2_ref, wheads_ref,
                 r_out_ref, s_out_ref):
    f32, bf16 = jnp.float32, jnp.bfloat16
    inv_sqrt_dk = 1.0 / math.sqrt(dk)

    def dot(x, w):                       # bf16 MXU operands, f32 accumulation
        return jnp.dot(x.astype(bf16), w, preferred_element_type=f32)

    def swap(x):                         # exchange the two position blocks
        return jnp.concatenate([x[B:], x[:B]], axis=0)

    # ---- hoist every weight / parameter load out of the unrolled loops ----
    Ws, Wa, Wheads = ws_ref[...], wa_ref[...], wheads_ref[...]
    MMT = mmt_ref[...]
    pe = pe_ref[...]
    Wqk = [wqk_ref[j] for j in range(L)]
    Wv = [wv_ref[j] for j in range(L)]
    Wo = [wo_ref[j] for j in range(L)]
    Wfc = [wfc_ref[j] for j in range(L)]
    G1 = [g1_ref[j] for j in range(L)]
    B1 = [b1_ref[j] for j in range(L)]
    G2 = [g2_ref[j] for j in range(L)]
    B2 = [b2_ref[j] for j in range(L)]

    # ---- hoisted action encoding: one (T*B, Din) matmul for all timesteps ----
    a_all = jnp.tanh(dot(a_ref[...], Wa))            # (T*B, H)

    # s = hidden_activation(state_linear(s))
    s_enc = jnp.tanh(dot(s_ref[...], Ws))            # (B, H)
    prev = None
    r_steps, s_steps = [], []
    for i in range(T):                               # unrolled time loop (T=4)
        a_enc = a_all[i * B:(i + 1) * B]             # static sublane slice
        # torch: stack([s, a], 0).view(B, 2, H)  ==>  fused (2B, H) layout
        # where row r is (pos p = r // B, batch b = r % B) and holds
        # flat[2b + p] with flat = [s rows ; a rows].  Static row gather only
        # (deliberately replicates the torch batch/position mixing).
        rows = []
        for r in range(2 * B):
            k = 2 * (r % B) + r // B
            rows.append(s_enc[k:k + 1] if k < B else a_enc[k - B:k - B + 1])
        h = jnp.concatenate(rows, axis=0) + pe       # + positional encoding

        pres = []
        for j in range(L):                           # unrolled layer loop
            V = dot(h, Wv[j])                        # (2B, H)
            Vsw = swap(V)
            if i == 0:
                # attention(Q=0, K=0, V=h): all scores 0 -> uniform probs
                ctx = 0.5 * (V + Vsw)
            else:
                qk = dot(prev[j], Wqk[j])            # fused (2B, 2H) = Q | K
                Q, K = qk[:, :H], qk[:, H:]
                # 2-element softmax as a sigmoid gate on the per-head score
                # difference; MMT broadcasts the head-sum back to (2B, H) and
                # the difference is folded into a single matmul.
                d = dot(Q * (swap(K) - K), MMT) * inv_sqrt_dk
                p = pl.reciprocal(1.0 + jnp.exp(-d), approx=True)   # p_cross
                ctx = V + p * (Vsw - V)
            h = _layernorm(h + dot(ctx, Wo[j]), G1[j], B1[j])
            h = _layernorm(h + dot(h, Wfc[j]), G2[j], B2[j])
            pres.append(h)
        prev = pres

        out = dot(h, Wheads)                         # fused (2B, O+Hin) heads
        # exact sigmoid on the model output (reward head)
        r_steps.append(1.0 / (1.0 + jnp.exp(-out[:B, :O])))
        s_raw = jnp.tanh(out[B:, O:])                # pos-1 rows -> next state
        s_steps.append(s_raw)
        if i + 1 < T:                                # skip dead final re-encode
            s_enc = jnp.tanh(dot(s_raw, Ws))

    # single lane-dense stores (no per-step masked partial stores)
    r_out_ref[...] = jnp.concatenate(r_steps, axis=1)    # (B, T*O)
    s_out_ref[...] = jnp.concatenate(s_steps, axis=1)    # (B, T*Hin)


# ----------------------------------------------------------------------------
# Wrapper
# ----------------------------------------------------------------------------
def build_model_forward(s, a_list, params, *, num_layers, num_heads):
    B, Hin = s.shape
    _, T, Din = a_list.shape
    H = params["ws"].shape[1]
    O = params["wr"].shape[1]
    dk = H // num_heads
    bf16 = jnp.bfloat16

    # time-major, flattened to (T*B, Din): kernel encodes all actions at once
    a2d = jnp.transpose(a_list, (1, 0, 2)).reshape(T * B, Din)

    # positional encoding in the fused (2B, H) row layout: [pe0]*B then [pe1]*B
    pe_fused = jnp.repeat(params["pe"], B, axis=0)

    # block-diagonal head indicator: MMT[d, d'] = 1 iff d, d' in the same head
    head = np.arange(H) // dk
    mmt = jnp.asarray((head[:, None] == head[None, :]).astype(np.float32), bf16)

    # pack Wq|Wk and Wr|Wsb, cast all weights to bf16 once (single-pass MXU
    # operands); in a real deployment these would be prepared offline.
    wqk = jnp.concatenate([params["wq"], params["wk"]], axis=-1).astype(bf16)
    wheads = jnp.concatenate([params["wr"], params["wsb"]], axis=-1).astype(bf16)

    kernel = functools.partial(model_kernel, T, num_layers, B, H, dk, O)
    vmem = pl.BlockSpec(memory_space=pltpu.MemorySpace.VMEM)
    args = (s, a2d, pe_fused, mmt,
            params["ws"].astype(bf16), params["wa"].astype(bf16),
            wqk, params["wv"].astype(bf16), params["wo"].astype(bf16),
            params["wfc"].astype(bf16),
            params["g1"], params["b1"], params["g2"], params["b2"],
            wheads)

    # rough advisory cost so XLA can schedule neighbours around the tiny call
    mm_flops = int(
        2 * T * B * Din * H                                   # action encoder
        + 2 * T * B * Hin * H                                 # state encoder
        + 2 * (T - 1) * num_layers * (2 * B) * H * (2 * H)    # Q|K
        + 2 * (T - 1) * num_layers * (2 * B) * H * H          # MMT score diff
        + 2 * T * num_layers * 3 * (2 * B) * H * H            # V, O, FC
        + 2 * T * (2 * B) * H * (O + Hin))                    # fused heads
    transc = int(2 * T * B * H + (T - 1) * num_layers * (2 * B) * H
                 + T * B * (O + Hin))
    nbytes = int(sum(int(np.prod(x.shape)) * x.dtype.itemsize for x in args)
                 + B * T * (O + Hin) * 4)
    cost = pl.CostEstimate(flops=mm_flops, transcendentals=transc,
                           bytes_accessed=nbytes)

    r_flat, s_flat = pl.pallas_call(
        kernel,
        out_shape=(jax.ShapeDtypeStruct((B, T * O), jnp.float32),
                   jax.ShapeDtypeStruct((B, T * Hin), jnp.float32)),
        in_specs=[vmem] * len(args),
        out_specs=(vmem, vmem),
        cost_estimate=cost,
    )(*args)

    r_list = r_flat.reshape(B, T, O)                     # (B, T, O)
    s_list = s_flat.reshape(B, T, Hin)                   # (B, T, Hin)
    # torch: s_list.repeat(1, num_layers, 1, 1) on a 3-D tensor
    s_list = jnp.tile(s_list[None], (1, num_layers, 1, 1))   # (1, L*B, T, Hin)
    return r_list, s_list


# ----------------------------------------------------------------------------
# Pure-JAX reference (structurally follows the torch code; matmul operands are
# rounded to bf16 so the comparison isolates implementation differences rather
# than matmul precision policy, which on TPU defaults to bf16 anyway)
# ----------------------------------------------------------------------------
def ref_forward(s, a_list, params, *, num_layers, num_heads):
    H = params["ws"].shape[1]
    nh = num_heads
    dk = H // nh
    B = s.shape[0]
    T = a_list.shape[1]
    pe = params["pe"]
    bf16, f32 = jnp.bfloat16, jnp.float32

    def rdot(x, w):      # bf16 MXU operands, f32 accumulation
        return jnp.dot(x.astype(bf16), w.astype(bf16), preferred_element_type=f32)

    def attn(Qi, Ki, Vi, Wq, Wk, Wv, Wo):
        def split(x):
            return x.reshape(B, 2, nh, dk).transpose(0, 2, 1, 3)
        Qh, Kh, Vh = split(rdot(Qi, Wq)), split(rdot(Ki, Wk)), split(rdot(Vi, Wv))
        scores = jnp.einsum("bhqd,bhkd->bhqk", Qh.astype(bf16), Kh.astype(bf16),
                            preferred_element_type=f32) / math.sqrt(dk)
        probs = jax.nn.softmax(scores, axis=-1)
        out = jnp.einsum("bhqk,bhkd->bhqd", probs, Vh, precision="highest")
        out = out.transpose(0, 2, 1, 3).reshape(B, 2, H)
        return rdot(out, Wo)

    def ln(x, g, b, eps=1e-5):
        mu = x.mean(-1, keepdims=True)
        var = ((x - mu) ** 2).mean(-1, keepdims=True)
        return (x - mu) * jax.lax.rsqrt(var + eps) * g + b

    s_h = jnp.tanh(rdot(s, params["ws"]))
    prev = None
    r_list, s_list = [], []
    for i in range(T):
        a = jnp.tanh(rdot(a_list[:, i], params["wa"]))
        h = jnp.stack([s_h, a], axis=0).reshape(B, 2, H) + pe[None]
        pres = []
        for j in range(num_layers):
            if i == 0:
                z = jnp.zeros_like(h)
                h_ = attn(z, z, h, params["wq"][j], params["wk"][j],
                          params["wv"][j], params["wo"][j])
            else:
                h_ = attn(prev[j], prev[j], h, params["wq"][j], params["wk"][j],
                          params["wv"][j], params["wo"][j])
            h = ln(h + h_, params["g1"][j], params["b1"][j])
            h = ln(h + rdot(h, params["wfc"][j]), params["g2"][j], params["b2"][j])
            pres.append(h)
        prev = pres
        r = jax.nn.sigmoid(rdot(h[:, 0], params["wr"]))
        sn = jnp.tanh(rdot(h[:, 1], params["wsb"]))
        r_list.append(r)
        s_list.append(sn)
        s_h = jnp.tanh(rdot(sn, params["ws"]))
    r_list = jnp.stack(r_list, 0).transpose(1, 0, 2)
    s_list = jnp.stack(s_list, 0).transpose(1, 0, 2)
    s_list = jnp.tile(s_list[None], (1, num_layers, 1, 1))
    return r_list, s_list


# ----------------------------------------------------------------------------
# Deterministic parameter construction
# ----------------------------------------------------------------------------
def make_params(key, B, Hin, H, Din, O, L, nh):
    ks = jax.random.split(key, 9)

    def init(k, shape):
        fan_in = shape[-2]
        return jax.random.normal(k, shape, jnp.float32) / math.sqrt(fan_in)

    params = {
        "ws":  init(ks[0], (Hin, H)),
        "wa":  init(ks[1], (Din, H)),
        "wq":  init(ks[2], (L, H, H)),
        "wk":  init(ks[3], (L, H, H)),
        "wv":  init(ks[4], (L, H, H)),
        "wo":  init(ks[5], (L, H, H)),
        "wfc": init(ks[6], (L, H, H)),
        "wr":  init(ks[7], (H, O)),
        "wsb": init(ks[8], (H, Hin)),
        "g1":  jnp.ones((L, 1, H), jnp.float32),   # LayerNorm defaults (weight=1)
        "b1":  jnp.zeros((L, 1, H), jnp.float32),  # LayerNorm defaults (bias=0)
        "g2":  jnp.ones((L, 1, H), jnp.float32),
        "b2":  jnp.zeros((L, 1, H), jnp.float32),
    }

    # exact positional encoding formula from generate_positional_encoding
    pe = np.zeros((2, H), np.float32)
    for pos in range(2):
        for i in range(0, H, 2):
            pe[pos, i] = math.sin(pos / 10000 ** (2 * i / H))
            if i + 1 < H:
                pe[pos, i + 1] = math.cos(pos / 10000 ** (2 * i / H))
    params["pe"] = jnp.asarray(pe)
    return params


# ----------------------------------------------------------------------------
if __name__ == "__main__":
    # module hyper-params: h_input=16, hidden=32, input=8, seq=4, output=4,
    # num_layers=2, num_heads=4, hidden_activation='tanh',
    # output_activation='sigmoid', bias=False
    B, Hin, H, Din, T, O = 2, 16, 32, 8, 4, 4
    L, NH = 2, 4

    key = jax.random.PRNGKey(0)
    k_s, k_a, k_p = jax.random.split(key, 3)
    s = jax.random.normal(k_s, (B, Hin), jnp.float32)
    a_list = jax.random.normal(k_a, (B, T, Din), jnp.float32)
    params = make_params(k_p, B, Hin, H, Din, O, L, NH)

    r_out, s_out = build_model_forward(s, a_list, params, num_layers=L, num_heads=NH)
    jax.block_until_ready((r_out, s_out))

    r_ref, s_ref = ref_forward(s, a_list, params, num_layers=L, num_heads=NH)

    assert r_out.shape == (B, T, O)
    assert s_out.shape == (1, L * B, T, Hin)
    # kernel uses single-pass bf16 MXU operands, a sigmoid-form 2-way softmax
    # and an EUP approximate reciprocal in the attention gate; the reference
    # rounds matmul operands to bf16 too, so the residual divergence (different
    # rounding placement across the T*L recurrence) is a few 1e-3 — 2e-2 gives
    # safe margin without hiding real bugs.
    assert jnp.allclose(r_out, r_ref, rtol=2e-2, atol=2e-2)
    assert jnp.allclose(s_out, s_ref, rtol=2e-2, atol=2e-2)
    print("KERNEL_OK")
</pallas_src>

<mosaic_0001>
module attributes {stable_mosaic.version = 11 : i64} {
  func.func @model_kernel(%arg0: memref<2x16xf32, #tpu.memory_space<vmem>>, %arg1: memref<8x8xf32, #tpu.memory_space<vmem>>, %arg2: memref<4x32xf32, #tpu.memory_space<vmem>>, %arg3: memref<32x32xbf16, #tpu.memory_space<vmem>>, %arg4: memref<16x32xbf16, #tpu.memory_space<vmem>>, %arg5: memref<8x32xbf16, #tpu.memory_space<vmem>>, %arg6: memref<2x32x64xbf16, #tpu.memory_space<vmem>>, %arg7: memref<2x32x32xbf16, #tpu.memory_space<vmem>>, %arg8: memref<2x32x32xbf16, #tpu.memory_space<vmem>>, %arg9: memref<2x32x32xbf16, #tpu.memory_space<vmem>>, %arg10: memref<2x1x32xf32, #tpu.memory_space<vmem>>, %arg11: memref<2x1x32xf32, #tpu.memory_space<vmem>>, %arg12: memref<2x1x32xf32, #tpu.memory_space<vmem>>, %arg13: memref<2x1x32xf32, #tpu.memory_space<vmem>>, %arg14: memref<32x20xbf16, #tpu.memory_space<vmem>>, %arg15: memref<2x16xf32, #tpu.memory_space<vmem>>, %arg16: memref<2x64xf32, #tpu.memory_space<vmem>>) attributes {dimension_semantics = [], scalar_prefetch = 0 : i64, scratch_operands = 0 : i64, tpu.core_type = #tpu.core_type<tc>} {
    %c0 = arith.constant 0 : index
    %c0_0 = arith.constant 0 : index
    %0 = vector.load %arg4[%c0, %c0_0] : memref<16x32xbf16, #tpu.memory_space<vmem>>, vector<16x32xbf16>
    %c0_1 = arith.constant 0 : index
    %c0_2 = arith.constant 0 : index
    %1 = vector.load %arg5[%c0_1, %c0_2] : memref<8x32xbf16, #tpu.memory_space<vmem>>, vector<8x32xbf16>
    %c0_3 = arith.constant 0 : index
    %c0_4 = arith.constant 0 : index
    %2 = vector.load %arg14[%c0_3, %c0_4] : memref<32x20xbf16, #tpu.memory_space<vmem>>, vector<32x20xbf16>
    %c0_5 = arith.constant 0 : index
    %c0_6 = arith.constant 0 : index
    %3 = vector.load %arg3[%c0_5, %c0_6] : memref<32x32xbf16, #tpu.memory_space<vmem>>, vector<32x32xbf16>
    %c0_7 = arith.constant 0 : index
    %c0_8 = arith.constant 0 : index
    %4 = vector.load %arg2[%c0_7, %c0_8] : memref<4x32xf32, #tpu.memory_space<vmem>>, vector<4x32xf32>
    %c0_9 = arith.constant 0 : index
    %c0_10 = arith.constant 0 : index
    %c0_11 = arith.constant 0 : index
    %5 = vector.load %arg6[%c0_9, %c0_10, %c0_11] : memref<2x32x64xbf16, #tpu.memory_space<vmem>>, vector<1x32x64xbf16>
    %6 = vector.shape_cast %5 : vector<1x32x64xbf16> to vector<32x64xbf16>
    %c1 = arith.constant 1 : index
    %c0_12 = arith.constant 0 : index
    %c0_13 = arith.constant 0 : index
    %7 = vector.load %arg6[%c1, %c0_12, %c0_13] : memref<2x32x64xbf16, #tpu.memory_space<vmem>>, vector<1x32x64xbf16>
    %8 = vector.shape_cast %7 : vector<1x32x64xbf16> to vector<32x64xbf16>
    %c0_14 = arith.constant 0 : index
    %c0_15 = arith.constant 0 : index
    %c0_16 = arith.constant 0 : index
    %9 = vector.load %arg7[%c0_14, %c0_15, %c0_16] : memref<2x32x32xbf16, #tpu.memory_space<vmem>>, vector<1x32x32xbf16>
    %10 = vector.shape_cast %9 : vector<1x32x32xbf16> to vector<32x32xbf16>
    %c1_17 = arith.constant 1 : index
    %c0_18 = arith.constant 0 : index
    %c0_19 = arith.constant 0 : index
    %11 = vector.load %arg7[%c1_17, %c0_18, %c0_19] : memref<2x32x32xbf16, #tpu.memory_space<vmem>>, vector<1x32x32xbf16>
    %12 = vector.shape_cast %11 : vector<1x32x32xbf16> to vector<32x32xbf16>
    %c0_20 = arith.constant 0 : index
    %c0_21 = arith.constant 0 : index
    %c0_22 = arith.constant 0 : index
    %13 = vector.load %arg8[%c0_20, %c0_21, %c0_22] : memref<2x32x32xbf16, #tpu.memory_space<vmem>>, vector<1x32x32xbf16>
    %14 = vector.shape_cast %13 : vector<1x32x32xbf16> to vector<32x32xbf16>
    %c1_23 = arith.constant 1 : index
    %c0_24 = arith.constant 0 : index
    %c0_25 = arith.constant 0 : index
    %15 = vector.load %arg8[%c1_23, %c0_24, %c0_25] : memref<2x32x32xbf16, #tpu.memory_space<vmem>>, vector<1x32x32xbf16>
    %16 = vector.shape_cast %15 : vector<1x32x32xbf16> to vector<32x32xbf16>
    %c0_26 = arith.constant 0 : index
    %c0_27 = arith.constant 0 : index
    %c0_28 = arith.constant 0 : index
    %17 = vector.load %arg9[%c0_26, %c0_27, %c0_28] : memref<2x32x32xbf16, #tpu.memory_space<vmem>>, vector<1x32x32xbf16>
    %18 = vector.shape_cast %17 : vector<1x32x32xbf16> to vector<32x32xbf16>
    %c1_29 = arith.constant 1 : index
    %c0_30 = arith.constant 0 : index
    %c0_31 = arith.constant 0 : index
    %19 = vector.load %arg9[%c1_29, %c0_30, %c0_31] : memref<2x32x32xbf16, #tpu.memory_space<vmem>>, vector<1x32x32xbf16>
    %20 = vector.shape_cast %19 : vector<1x32x32xbf16> to vector<32x32xbf16>
    %c0_32 = arith.constant 0 : index
    %c0_33 = arith.constant 0 : index
    %c0_34 = arith.constant 0 : index
    %21 = vector.load %arg10[%c0_32, %c0_33, %c0_34] : memref<2x1x32xf32, #tpu.memory_space<vmem>>, vector<1x1x32xf32>
    %22 = vector.shape_cast %21 : vector<1x1x32xf32> to vector<1x32xf32>
    %c1_35 = arith.constant 1 : index
    %c0_36 = arith.constant 0 : index
    %c0_37 = arith.constant 0 : index
    %23 = vector.load %arg10[%c1_35, %c0_36, %c0_37] : memref<2x1x32xf32, #tpu.memory_space<vmem>>, vector<1x1x32xf32>
    %24 = vector.shape_cast %23 : vector<1x1x32xf32> to vector<1x32xf32>
    %c0_38 = arith.constant 0 : index
    %c0_39 = arith.constant 0 : index
    %c0_40 = arith.constant 0 : index
    %25 = vector.load %arg11[%c0_38, %c0_39, %c0_40] : memref<2x1x32xf32, #tpu.memory_space<vmem>>, vector<1x1x32xf32>
    %26 = vector.shape_cast %25 : vector<1x1x32xf32> to vector<1x32xf32>
    %c1_41 = arith.constant 1 : index
    %c0_42 = arith.constant 0 : index
    %c0_43 = arith.constant 0 : index
    %27 = vector.load %arg11[%c1_41, %c0_42, %c0_43] : memref<2x1x32xf32, #tpu.memory_space<vmem>>, vector<1x1x32xf32>
    %28 = vector.shape_cast %27 : vector<1x1x32xf32> to vector<1x32xf32>
    %c0_44 = arith.constant 0 : index
    %c0_45 = arith.constant 0 : index
    %c0_46 = arith.constant 0 : index
    %29 = vector.load %arg12[%c0_44, %c0_45, %c0_46] : memref<2x1x32xf32, #tpu.memory_space<vmem>>, vector<1x1x32xf32>
    %30 = vector.shape_cast %29 : vector<1x1x32xf32> to vector<1x32xf32>
    %c1_47 = arith.constant 1 : index
    %c0_48 = arith.constant 0 : index
    %c0_49 = arith.constant 0 : index
    %31 = vector.load %arg12[%c1_47, %c0_48, %c0_49] : memref<2x1x32xf32, #tpu.memory_space<vmem>>, vector<1x1x32xf32>
    %32 = vector.shape_cast %31 : vector<1x1x32xf32> to vector<1x32xf32>
    %c0_50 = arith.constant 0 : index
    %c0_51 = arith.constant 0 : index
    %c0_52 = arith.constant 0 : index
    %33 = vector.load %arg13[%c0_50, %c0_51, %c0_52] : memref<2x1x32xf32, #tpu.memory_space<vmem>>, vector<1x1x32xf32>
    %34 = vector.shape_cast %33 : vector<1x1x32xf32> to vector<1x32xf32>
    %c1_53 = arith.constant 1 : index
    %c0_54 = arith.constant 0 : index
    %c0_55 = arith.constant 0 : index
    %35 = vector.load %arg13[%c1_53, %c0_54, %c0_55] : memref<2x1x32xf32, #tpu.memory_space<vmem>>, vector<1x1x32xf32>
    %36 = vector.shape_cast %35 : vector<1x1x32xf32> to vector<1x32xf32>
    %c0_56 = arith.constant 0 : index
    %c0_57 = arith.constant 0 : index
    %37 = vector.load %arg1[%c0_56, %c0_57] : memref<8x8xf32, #tpu.memory_space<vmem>>, vector<8x8xf32>
    %38 = arith.truncf %37 : vector<8x8xf32> to vector<8x8xbf16>
    %cst = arith.constant dense<0.000000e+00> : vector<8x32xf32>
    %39 = tpu.matmul %38, %1, %cst {dimension_numbers = #tpu.dot_dimension_numbers<[1], [0], [0], [1], [0, 0, 1, 1], [], []>} : vector<8x8xbf16>, vector<8x32xbf16>, vector<8x32xf32> -> vector<8x32xf32>
    %40 = math.tanh %39 : vector<8x32xf32>
    %c0_58 = arith.constant 0 : index
    %c0_59 = arith.constant 0 : index
    %41 = vector.load %arg0[%c0_58, %c0_59] : memref<2x16xf32, #tpu.memory_space<vmem>>, vector<2x16xf32>
    %42 = arith.truncf %41 : vector<2x16xf32> to vector<2x16xbf16>
    %cst_60 = arith.constant dense<0.000000e+00> : vector<2x32xf32>
    %43 = tpu.matmul %42, %0, %cst_60 {dimension_numbers = #tpu.dot_dimension_numbers<[1], [0], [0], [1], [0, 0, 1, 1], [], []>} : vector<2x16xbf16>, vector<16x32xbf16>, vector<2x32xf32> -> vector<2x32xf32>
    %44 = math.tanh %43 : vector<2x32xf32>
    %45 = vector.extract_strided_slice %40 {offsets = [0, 0], sizes = [2, 32], strides = [1, 1]} : vector<8x32xf32> to vector<2x32xf32>
    %46 = vector.extract_strided_slice %44 {offsets = [0, 0], sizes = [1, 32], strides = [1, 1]} : vector<2x32xf32> to vector<1x32xf32>
    %47 = vector.extract_strided_slice %45 {offsets = [0, 0], sizes = [1, 32], strides = [1, 1]} : vector<2x32xf32> to vector<1x32xf32>
    %48 = vector.extract_strided_slice %44 {offsets = [1, 0], sizes = [1, 32], strides = [1, 1]} : vector<2x32xf32> to vector<1x32xf32>
    %49 = vector.extract_strided_slice %45 {offsets = [1, 0], sizes = [1, 32], strides = [1, 1]} : vector<2x32xf32> to vector<1x32xf32>
    %50 = tpu.concatenate %46, %47, %48, %49 in 0 : vector<1x32xf32>, vector<1x32xf32>, vector<1x32xf32>, vector<1x32xf32> -> vector<4x32xf32>
    %51 = arith.addf %50, %4 : vector<4x32xf32>
    %52 = arith.truncf %51 : vector<4x32xf32> to vector<4x32xbf16>
    %cst_61 = arith.constant dense<0.000000e+00> : vector<4x32xf32>
    %53 = tpu.matmul %52, %10, %cst_61 {dimension_numbers = #tpu.dot_dimension_numbers<[1], [0], [0], [1], [0, 0, 1, 1], [], []>} : vector<4x32xbf16>, vector<32x32xbf16>, vector<4x32xf32> -> vector<4x32xf32>
    %54 = vector.extract_strided_slice %53 {offsets = [2, 0], sizes = [2, 32], strides = [1, 1]} : vector<4x32xf32> to vector<2x32xf32>
    %55 = vector.extract_strided_slice %53 {offsets = [0, 0], sizes = [2, 32], strides = [1, 1]} : vector<4x32xf32> to vector<2x32xf32>
    %56 = tpu.concatenate %54, %55 in 0 : vector<2x32xf32>, vector<2x32xf32> -> vector<4x32xf32>
    %57 = arith.addf %53, %56 : vector<4x32xf32>
    %cst_62 = arith.constant 5.000000e-01 : f32
    %58 = vector.broadcast %cst_62 : f32 to vector<4x32xf32>
    %59 = arith.mulf %58, %57 : vector<4x32xf32>
    %60 = arith.truncf %59 : vector<4x32xf32> to vector<4x32xbf16>
    %cst_63 = arith.constant dense<0.000000e+00> : vector<4x32xf32>
    %61 = tpu.matmul %60, %14, %cst_63 {dimension_numbers = #tpu.dot_dimension_numbers<[1], [0], [0], [1], [0, 0, 1, 1], [], []>} : vector<4x32xbf16>, vector<32x32xbf16>, vector<4x32xf32> -> vector<4x32xf32>
    %62 = arith.addf %51, %61 : vector<4x32xf32>
    %cst_64 = arith.constant dense<0.000000e+00> : vector<4xf32>
    %63 = vector.multi_reduction <add>, %62, %cst_64 [1] : vector<4x32xf32> to vector<4xf32>
    %64 = vector.shape_cast %63 : vector<4xf32> to vector<4x1xf32>
    %cst_65 = arith.constant 3.200000e+01 : f32
    %65 = vector.broadcast %cst_65 : f32 to vector<4x1xf32>
    %66 = arith.divf %64, %65 : vector<4x1xf32>
    %67 = vector.broadcast %66 : vector<4x1xf32> to vector<4x32xf32>
    %68 = arith.subf %62, %67 : vector<4x32xf32>
    %69 = arith.mulf %68, %68 : vector<4x32xf32>
    %cst_66 = arith.constant dense<0.000000e+00> : vector<4xf32>
    %70 = vector.multi_reduction <add>, %69, %cst_66 [1] : vector<4x32xf32> to vector<4xf32>
    %71 = vector.shape_cast %70 : vector<4xf32> to vector<4x1xf32>
    %cst_67 = arith.constant 3.200000e+01 : f32
    %72 = vector.broadcast %cst_67 : f32 to vector<4x1xf32>
    %73 = arith.divf %71, %72 : vector<4x1xf32>
    %cst_68 = arith.constant 9.99999974E-6 : f32
    %74 = vector.broadcast %cst_68 : f32 to vector<4x1xf32>
    %75 = arith.addf %73, %74 : vector<4x1xf32>
    %76 = math.rsqrt %75 : vector<4x1xf32>
    %77 = vector.broadcast %76 : vector<4x1xf32> to vector<4x32xf32>
    %78 = arith.mulf %68, %77 : vector<4x32xf32>
    %79 = vector.broadcast %22 : vector<1x32xf32> to vector<4x32xf32>
    %80 = arith.mulf %78, %79 : vector<4x32xf32>
    %81 = vector.broadcast %26 : vector<1x32xf32> to vector<4x32xf32>
    %82 = arith.addf %80, %81 : vector<4x32xf32>
    %83 = arith.truncf %82 : vector<4x32xf32> to vector<4x32xbf16>
    %cst_69 = arith.constant dense<0.000000e+00> : vector<4x32xf32>
    %84 = tpu.matmul %83, %18, %cst_69 {dimension_numbers = #tpu.dot_dimension_numbers<[1], [0], [0], [1], [0, 0, 1, 1], [], []>} : vector<4x32xbf16>, vector<32x32xbf16>, vector<4x32xf32> -> vector<4x32xf32>
    %85 = arith.addf %82, %84 : vector<4x32xf32>
    %cst_70 = arith.constant dense<0.000000e+00> : vector<4xf32>
    %86 = vector.multi_reduction <add>, %85, %cst_70 [1] : vector<4x32xf32> to vector<4xf32>
    %87 = vector.shape_cast %86 : vector<4xf32> to vector<4x1xf32>
    %cst_71 = arith.constant 3.200000e+01 : f32
    %88 = vector.broadcast %cst_71 : f32 to vector<4x1xf32>
    %89 = arith.divf %87, %88 : vector<4x1xf32>
    %90 = vector.broadcast %89 : vector<4x1xf32> to vector<4x32xf32>
    %91 = arith.subf %85, %90 : vector<4x32xf32>
    %92 = arith.mulf %91, %91 : vector<4x32xf32>
    %cst_72 = arith.constant dense<0.000000e+00> : vector<4xf32>
    %93 = vector.multi_reduction <add>, %92, %cst_72 [1] : vector<4x32xf32> to vector<4xf32>
    %94 = vector.shape_cast %93 : vector<4xf32> to vector<4x1xf32>
    %cst_73 = arith.constant 3.200000e+01 : f32
    %95 = vector.broadcast %cst_73 : f32 to vector<4x1xf32>
    %96 = arith.divf %94, %95 : vector<4x1xf32>
    %cst_74 = arith.constant 9.99999974E-6 : f32
    %97 = vector.broadcast %cst_74 : f32 to vector<4x1xf32>
    %98 = arith.addf %96, %97 : vector<4x1xf32>
    %99 = math.rsqrt %98 : vector<4x1xf32>
    %100 = vector.broadcast %99 : vector<4x1xf32> to vector<4x32xf32>
    %101 = arith.mulf %91, %100 : vector<4x32xf32>
    %102 = vector.broadcast %30 : vector<1x32xf32> to vector<4x32xf32>
    %103 = arith.mulf %101, %102 : vector<4x32xf32>
    %104 = vector.broadcast %34 : vector<1x32xf32> to vector<4x32xf32>
    %105 = arith.addf %103, %104 : vector<4x32xf32>
    %106 = arith.truncf %105 : vector<4x32xf32> to vector<4x32xbf16>
    %cst_75 = arith.constant dense<0.000000e+00> : vector<4x32xf32>
    %107 = tpu.matmul %106, %12, %cst_75 {dimension_numbers = #tpu.dot_dimension_numbers<[1], [0], [0], [1], [0, 0, 1, 1], [], []>} : vector<4x32xbf16>, vector<32x32xbf16>, vector<4x32xf32> -> vector<4x32xf32>
    %108 = vector.extract_strided_slice %107 {offsets = [2, 0], sizes = [2, 32], strides = [1, 1]} : vector<4x32xf32> to vector<2x32xf32>
    %109 = vector.extract_strided_slice %107 {offsets = [0, 0], sizes = [2, 32], strides = [1, 1]} : vector<4x32xf32> to vector<2x32xf32>
    %110 = tpu.concatenate %108, %109 in 0 : vector<2x32xf32>, vector<2x32xf32> -> vector<4x32xf32>
    %111 = arith.addf %107, %110 : vector<4x32xf32>
    %cst_76 = arith.constant 5.000000e-01 : f32
    %112 = vector.broadcast %cst_76 : f32 to vector<4x32xf32>
    %113 = arith.mulf %112, %111 : vector<4x32xf32>
    %114 = arith.truncf %113 : vector<4x32xf32> to vector<4x32xbf16>
    %cst_77 = arith.constant dense<0.000000e+00> : vector<4x32xf32>
    %115 = tpu.matmul %114, %16, %cst_77 {dimension_numbers = #tpu.dot_dimension_numbers<[1], [0], [0], [1], [0, 0, 1, 1], [], []>} : vector<4x32xbf16>, vector<32x32xbf16>, vector<4x32xf32> -> vector<4x32xf32>
    %116 = arith.addf %105, %115 : vector<4x32xf32>
    %cst_78 = arith.constant dense<0.000000e+00> : vector<4xf32>
    %117 = vector.multi_reduction <add>, %116, %cst_78 [1] : vector<4x32xf32> to vector<4xf32>
    %118 = vector.shape_cast %117 : vector<4xf32> to vector<4x1xf32>
    %cst_79 = arith.constant 3.200000e+01 : f32
    %119 = vector.broadcast %cst_79 : f32 to vector<4x1xf32>
    %120 = arith.divf %118, %119 : vector<4x1xf32>
    %121 = vector.broadcast %120 : vector<4x1xf32> to vector<4x32xf32>
    %122 = arith.subf %116, %121 : vector<4x32xf32>
    %123 = arith.mulf %122, %122 : vector<4x32xf32>
    %cst_80 = arith.constant dense<0.000000e+00> : vector<4xf32>
    %124 = vector.multi_reduction <add>, %123, %cst_80 [1] : vector<4x32xf32> to vector<4xf32>
    %125 = vector.shape_cast %124 : vector<4xf32> to vector<4x1xf32>
    %cst_81 = arith.constant 3.200000e+01 : f32
    %126 = vector.broadcast %cst_81 : f32 to vector<4x1xf32>
    %127 = arith.divf %125, %126 : vector<4x1xf32>
    %cst_82 = arith.constant 9.99999974E-6 : f32
    %128 = vector.broadcast %cst_82 : f32 to vector<4x1xf32>
    %129 = arith.addf %127, %128 : vector<4x1xf32>
    %130 = math.rsqrt %129 : vector<4x1xf32>
    %131 = vector.broadcast %130 : vector<4x1xf32> to vector<4x32xf32>
    %132 = arith.mulf %122, %131 : vector<4x32xf32>
    %133 = vector.broadcast %24 : vector<1x32xf32> to vector<4x32xf32>
    %134 = arith.mulf %132, %133 : vector<4x32xf32>
    %135 = vector.broadcast %28 : vector<1x32xf32> to vector<4x32xf32>
    %136 = arith.addf %134, %135 : vector<4x32xf32>
    %137 = arith.truncf %136 : vector<4x32xf32> to vector<4x32xbf16>
    %cst_83 = arith.constant dense<0.000000e+00> : vector<4x32xf32>
    %138 = tpu.matmul %137, %20, %cst_83 {dimension_numbers = #tpu.dot_dimension_numbers<[1], [0], [0], [1], [0, 0, 1, 1], [], []>} : vector<4x32xbf16>, vector<32x32xbf16>, vector<4x32xf32> -> vector<4x32xf32>
    %139 = arith.addf %136, %138 : vector<4x32xf32>
    %cst_84 = arith.constant dense<0.000000e+00> : vector<4xf32>
    %140 = vector.multi_reduction <add>, %139, %cst_84 [1] : vector<4x32xf32> to vector<4xf32>
    %141 = vector.shape_cast %140 : vector<4xf32> to vector<4x1xf32>
    %cst_85 = arith.constant 3.200000e+01 : f32
    %142 = vector.broadcast %cst_85 : f32 to vector<4x1xf32>
    %143 = arith.divf %141, %142 : vector<4x1xf32>
    %144 = vector.broadcast %143 : vector<4x1xf32> to vector<4x32xf32>
    %145 = arith.subf %139, %144 : vector<4x32xf32>
    %146 = arith.mulf %145, %145 : vector<4x32xf32>
    %cst_86 = arith.constant dense<0.000000e+00> : vector<4xf32>
    %147 = vector.multi_reduction <add>, %146, %cst_86 [1] : vector<4x32xf32> to vector<4xf32>
    %148 = vector.shape_cast %147 : vector<4xf32> to vector<4x1xf32>
    %cst_87 = arith.constant 3.200000e+01 : f32
    %149 = vector.broadcast %cst_87 : f32 to vector<4x1xf32>
    %150 = arith.divf %148, %149 : vector<4x1xf32>
    %cst_88 = arith.constant 9.99999974E-6 : f32
    %151 = vector.broadcast %cst_88 : f32 to vector<4x1xf32>
    %152 = arith.addf %150, %151 : vector<4x1xf32>
    %153 = math.rsqrt %152 : vector<4x1xf32>
    %154 = vector.broadcast %153 : vector<4x1xf32> to vector<4x32xf32>
    %155 = arith.mulf %145, %154 : vector<4x32xf32>
    %156 = vector.broadcast %32 : vector<1x32xf32> to vector<4x32xf32>
    %157 = arith.mulf %155, %156 : vector<4x32xf32>
    %158 = vector.broadcast %36 : vector<1x32xf32> to vector<4x32xf32>
    %159 = arith.addf %157, %158 : vector<4x32xf32>
    %160 = arith.truncf %159 : vector<4x32xf32> to vector<4x32xbf16>
    %cst_89 = arith.constant dense<0.000000e+00> : vector<4x20xf32>
    %161 = tpu.matmul %160, %2, %cst_89 {dimension_numbers = #tpu.dot_dimension_numbers<[1], [0], [0], [1], [0, 0, 1, 1], [], []>} : vector<4x32xbf16>, vector<32x20xbf16>, vector<4x20xf32> -> vector<4x20xf32>
    %162 = vector.extract_strided_slice %161 {offsets = [0, 0], sizes = [2, 4], strides = [1, 1]} : vector<4x20xf32> to vector<2x4xf32>
    %cst_90 = arith.constant 0.000000e+00 : f32
    %163 = vector.broadcast %cst_90 : f32 to vector<2x4xf32>
    %164 = arith.subf %163, %162 : vector<2x4xf32>
    %165 = math.exp %164 : vector<2x4xf32>
    %cst_91 = arith.constant 1.000000e+00 : f32
    %166 = vector.broadcast %cst_91 : f32 to vector<2x4xf32>
    %167 = arith.addf %166, %165 : vector<2x4xf32>
    %cst_92 = arith.constant 1.000000e+00 : f32
    %168 = vector.broadcast %cst_92 : f32 to vector<2x4xf32>
    %169 = arith.divf %168, %167 : vector<2x4xf32>
    %170 = vector.extract_strided_slice %161 {offsets = [2, 4], sizes = [2, 16], strides = [1, 1]} : vector<4x20xf32> to vector<2x16xf32>
    %171 = math.tanh %170 : vector<2x16xf32>
    %172 = arith.truncf %171 : vector<2x16xf32> to vector<2x16xbf16>
    %cst_93 = arith.constant dense<0.000000e+00> : vector<2x32xf32>
    %173 = tpu.matmul %172, %0, %cst_93 {dimension_numbers = #tpu.dot_dimension_numbers<[1], [0], [0], [1], [0, 0, 1, 1], [], []>} : vector<2x16xbf16>, vector<16x32xbf16>, vector<2x32xf32> -> vector<2x32xf32>
    %174 = math.tanh %173 : vector<2x32xf32>
    %175 = vector.extract_strided_slice %40 {offsets = [2, 0], sizes = [2, 32], strides = [1, 1]} : vector<8x32xf32> to vector<2x32xf32>
    %176 = vector.extract_strided_slice %174 {offsets = [0, 0], sizes = [1, 32], strides = [1, 1]} : vector<2x32xf32> to vector<1x32xf32>
    %177 = vector.extract_strided_slice %175 {offsets = [0, 0], sizes = [1, 32], strides = [1, 1]} : vector<2x32xf32> to vector<1x32xf32>
    %178 = vector.extract_strided_slice %174 {offsets = [1, 0], sizes = [1, 32], strides = [1, 1]} : vector<2x32xf32> to vector<1x32xf32>
    %179 = vector.extract_strided_slice %175 {offsets = [1, 0], sizes = [1, 32], strides = [1, 1]} : vector<2x32xf32> to vector<1x32xf32>
    %180 = tpu.concatenate %176, %177, %178, %179 in 0 : vector<1x32xf32>, vector<1x32xf32>, vector<1x32xf32>, vector<1x32xf32> -> vector<4x32xf32>
    %181 = arith.addf %180, %4 : vector<4x32xf32>
    %182 = arith.truncf %181 : vector<4x32xf32> to vector<4x32xbf16>
    %cst_94 = arith.constant dense<0.000000e+00> : vector<4x32xf32>
    %183 = tpu.matmul %182, %10, %cst_94 {dimension_numbers = #tpu.dot_dimension_numbers<[1], [0], [0], [1], [0, 0, 1, 1], [], []>} : vector<4x32xbf16>, vector<32x32xbf16>, vector<4x32xf32> -> vector<4x32xf32>
    %184 = vector.extract_strided_slice %183 {offsets = [2, 0], sizes = [2, 32], strides = [1, 1]} : vector<4x32xf32> to vector<2x32xf32>
    %185 = vector.extract_strided_slice %183 {offsets = [0, 0], sizes = [2, 32], strides = [1, 1]} : vector<4x32xf32> to vector<2x32xf32>
    %186 = tpu.concatenate %184, %185 in 0 : vector<2x32xf32>, vector<2x32xf32> -> vector<4x32xf32>
    %187 = arith.truncf %105 : vector<4x32xf32> to vector<4x32xbf16>
    %cst_95 = arith.constant dense<0.000000e+00> : vector<4x64xf32>
    %188 = tpu.matmul %187, %6, %cst_95 {dimension_numbers = #tpu.dot_dimension_numbers<[1], [0], [0], [1], [0, 0, 1, 1], [], []>} : vector<4x32xbf16>, vector<32x64xbf16>, vector<4x64xf32> -> vector<4x64xf32>
    %189 = vector.extract_strided_slice %188 {offsets = [0, 0], sizes = [4, 32], strides = [1, 1]} : vector<4x64xf32> to vector<4x32xf32>
    %190 = vector.extract_strided_slice %188 {offsets = [0, 32], sizes = [4, 32], strides = [1, 1]} : vector<4x64xf32> to vector<4x32xf32>
    %191 = vector.extract_strided_slice %190 {offsets = [2, 0], sizes = [2, 32], strides = [1, 1]} : vector<4x32xf32> to vector<2x32xf32>
    %192 = vector.extract_strided_slice %190 {offsets = [0, 0], sizes = [2, 32], strides = [1, 1]} : vector<4x32xf32> to vector<2x32xf32>
    %193 = tpu.concatenate %191, %192 in 0 : vector<2x32xf32>, vector<2x32xf32> -> vector<4x32xf32>
    %194 = arith.subf %193, %190 : vector<4x32xf32>
    %195 = arith.mulf %189, %194 : vector<4x32xf32>
    %196 = arith.truncf %195 : vector<4x32xf32> to vector<4x32xbf16>
    %cst_96 = arith.constant dense<0.000000e+00> : vector<4x32xf32>
    %197 = tpu.matmul %196, %3, %cst_96 {dimension_numbers = #tpu.dot_dimension_numbers<[1], [0], [0], [1], [0, 0, 1, 1], [], []>} : vector<4x32xbf16>, vector<32x32xbf16>, vector<4x32xf32> -> vector<4x32xf32>
    %cst_97 = arith.constant 0.353553385 : f32
    %198 = vector.broadcast %cst_97 : f32 to vector<4x32xf32>
    %199 = arith.mulf %197, %198 : vector<4x32xf32>
    %cst_98 = arith.constant 0.000000e+00 : f32
    %200 = vector.broadcast %cst_98 : f32 to vector<4x32xf32>
    %201 = arith.subf %200, %199 : vector<4x32xf32>
    %202 = math.exp %201 : vector<4x32xf32>
    %cst_99 = arith.constant 1.000000e+00 : f32
    %203 = vector.broadcast %cst_99 : f32 to vector<4x32xf32>
    %204 = arith.addf %203, %202 : vector<4x32xf32>
    %205 = tpu.reciprocal %204 {approx = true} : vector<4x32xf32> -> vector<4x32xf32>
    %206 = arith.subf %186, %183 : vector<4x32xf32>
    %207 = arith.mulf %205, %206 : vector<4x32xf32>
    %208 = arith.addf %183, %207 : vector<4x32xf32>
    %209 = arith.truncf %208 : vector<4x32xf32> to vector<4x32xbf16>
    %cst_100 = arith.constant dense<0.000000e+00> : vector<4x32xf32>
    %210 = tpu.matmul %209, %14, %cst_100 {dimension_numbers = #tpu.dot_dimension_numbers<[1], [0], [0], [1], [0, 0, 1, 1], [], []>} : vector<4x32xbf16>, vector<32x32xbf16>, vector<4x32xf32> -> vector<4x32xf32>
    %211 = arith.addf %181, %210 : vector<4x32xf32>
    %cst_101 = arith.constant dense<0.000000e+00> : vector<4xf32>
    %212 = vector.multi_reduction <add>, %211, %cst_101 [1] : vector<4x32xf32> to vector<4xf32>
    %213 = vector.shape_cast %212 : vector<4xf32> to vector<4x1xf32>
    %cst_102 = arith.constant 3.200000e+01 : f32
    %214 = vector.broadcast %cst_102 : f32 to vector<4x1xf32>
    %215 = arith.divf %213, %214 : vector<4x1xf32>
    %216 = vector.broadcast %215 : vector<4x1xf32> to vector<4x32xf32>
    %217 = arith.subf %211, %216 : vector<4x32xf32>
    %218 = arith.mulf %217, %217 : vector<4x32xf32>
    %cst_103 = arith.constant dense<0.000000e+00> : vector<4xf32>
    %219 = vector.multi_reduction <add>, %218, %cst_103 [1] : vector<4x32xf32> to vector<4xf32>
    %220 = vector.shape_cast %219 : vector<4xf32> to vector<4x1xf32>
    %cst_104 = arith.constant 3.200000e+01 : f32
    %221 = vector.broadcast %cst_104 : f32 to vector<4x1xf32>
    %222 = arith.divf %220, %221 : vector<4x1xf32>
    %cst_105 = arith.constant 9.99999974E-6 : f32
    %223 = vector.broadcast %cst_105 : f32 to vector<4x1xf32>
    %224 = arith.addf %222, %223 : vector<4x1xf32>
    %225 = math.rsqrt %224 : vector<4x1xf32>
    %226 = vector.broadcast %225 : vector<4x1xf32> to vector<4x32xf32>
    %227 = arith.mulf %217, %226 : vector<4x32xf32>
    %228 = vector.broadcast %22 : vector<1x32xf32> to vector<4x32xf32>
    %229 = arith.mulf %227, %228 : vector<4x32xf32>
    %230 = vector.broadcast %26 : vector<1x32xf32> to vector<4x32xf32>
    %231 = arith.addf %229, %230 : vector<4x32xf32>
    %232 = arith.truncf %231 : vector<4x32xf32> to vector<4x32xbf16>
    %cst_106 = arith.constant dense<0.000000e+00> : vector<4x32xf32>
    %233 = tpu.matmul %232, %18, %cst_106 {dimension_numbers = #tpu.dot_dimension_numbers<[1], [0], [0], [1], [0, 0, 1, 1], [], []>} : vector<4x32xbf16>, vector<32x32xbf16>, vector<4x32xf32> -> vector<4x32xf32>
    %234 = arith.addf %231, %233 : vector<4x32xf32>
    %cst_107 = arith.constant dense<0.000000e+00> : vector<4xf32>
    %235 = vector.multi_reduction <add>, %234, %cst_107 [1] : vector<4x32xf32> to vector<4xf32>
    %236 = vector.shape_cast %235 : vector<4xf32> to vector<4x1xf32>
    %cst_108 = arith.constant 3.200000e+01 : f32
    %237 = vector.broadcast %cst_108 : f32 to vector<4x1xf32>
    %238 = arith.divf %236, %237 : vector<4x1xf32>
    %239 = vector.broadcast %238 : vector<4x1xf32> to vector<4x32xf32>
    %240 = arith.subf %234, %239 : vector<4x32xf32>
    %241 = arith.mulf %240, %240 : vector<4x32xf32>
    %cst_109 = arith.constant dense<0.000000e+00> : vector<4xf32>
    %242 = vector.multi_reduction <add>, %241, %cst_109 [1] : vector<4x32xf32> to vector<4xf32>
    %243 = vector.shape_cast %242 : vector<4xf32> to vector<4x1xf32>
    %cst_110 = arith.constant 3.200000e+01 : f32
    %244 = vector.broadcast %cst_110 : f32 to vector<4x1xf32>
    %245 = arith.divf %243, %244 : vector<4x1xf32>
    %cst_111 = arith.constant 9.99999974E-6 : f32
    %246 = vector.broadcast %cst_111 : f32 to vector<4x1xf32>
    %247 = arith.addf %245, %246 : vector<4x1xf32>
    %248 = math.rsqrt %247 : vector<4x1xf32>
    %249 = vector.broadcast %248 : vector<4x1xf32> to vector<4x32xf32>
    %250 = arith.mulf %240, %249 : vector<4x32xf32>
    %251 = vector.broadcast %30 : vector<1x32xf32> to vector<4x32xf32>
    %252 = arith.mulf %250, %251 : vector<4x32xf32>
    %253 = vector.broadcast %34 : vector<1x32xf32> to vector<4x32xf32>
    %254 = arith.addf %252, %253 : vector<4x32xf32>
    %255 = arith.truncf %254 : vector<4x32xf32> to vector<4x32xbf16>
    %cst_112 = arith.constant dense<0.000000e+00> : vector<4x32xf32>
    %256 = tpu.matmul %255, %12, %cst_112 {dimension_numbers = #tpu.dot_dimension_numbers<[1], [0], [0], [1], [0, 0, 1, 1], [], []>} : vector<4x32xbf16>, vector<32x32xbf16>, vector<4x32xf32> -> vector<4x32xf32>
    %257 = vector.extract_strided_slice %256 {offsets = [2, 0], sizes = [2, 32], strides = [1, 1]} : vector<4x32xf32> to vector<2x32xf32>
    %258 = vector.extract_strided_slice %256 {offsets = [0, 0], sizes = [2, 32], strides = [1, 1]} : vector<4x32xf32> to vector<2x32xf32>
    %259 = tpu.concatenate %257, %258 in 0 : vector<2x32xf32>, vector<2x32xf32> -> vector<4x32xf32>
    %260 = arith.truncf %159 : vector<4x32xf32> to vector<4x32xbf16>
    %cst_113 = arith.constant dense<0.000000e+00> : vector<4x64xf32>
    %261 = tpu.matmul %260, %8, %cst_113 {dimension_numbers = #tpu.dot_dimension_numbers<[1], [0], [0], [1], [0, 0, 1, 1], [], []>} : vector<4x32xbf16>, vector<32x64xbf16>, vector<4x64xf32> -> vector<4x64xf32>
    %262 = vector.extract_strided_slice %261 {offsets = [0, 0], sizes = [4, 32], strides = [1, 1]} : vector<4x64xf32> to vector<4x32xf32>
    %263 = vector.extract_strided_slice %261 {offsets = [0, 32], sizes = [4, 32], strides = [1, 1]} : vector<4x64xf32> to vector<4x32xf32>
    %264 = vector.extract_strided_slice %263 {offsets = [2, 0], sizes = [2, 32], strides = [1, 1]} : vector<4x32xf32> to vector<2x32xf32>
    %265 = vector.extract_strided_slice %263 {offsets = [0, 0], sizes = [2, 32], strides = [1, 1]} : vector<4x32xf32> to vector<2x32xf32>
    %266 = tpu.concatenate %264, %265 in 0 : vector<2x32xf32>, vector<2x32xf32> -> vector<4x32xf32>
    %267 = arith.subf %266, %263 : vector<4x32xf32>
    %268 = arith.mulf %262, %267 : vector<4x32xf32>
    %269 = arith.truncf %268 : vector<4x32xf32> to vector<4x32xbf16>
    %cst_114 = arith.constant dense<0.000000e+00> : vector<4x32xf32>
    %270 = tpu.matmul %269, %3, %cst_114 {dimension_numbers = #tpu.dot_dimension_numbers<[1], [0], [0], [1], [0, 0, 1, 1], [], []>} : vector<4x32xbf16>, vector<32x32xbf16>, vector<4x32xf32> -> vector<4x32xf32>
    %cst_115 = arith.constant 0.353553385 : f32
    %271 = vector.broadcast %cst_115 : f32 to vector<4x32xf32>
    %272 = arith.mulf %270, %271 : vector<4x32xf32>
    %cst_116 = arith.constant 0.000000e+00 : f32
    %273 = vector.broadcast %cst_116 : f32 to vector<4x32xf32>
    %274 = arith.subf %273, %272 : vector<4x32xf32>
    %275 = math.exp %274 : vector<4x32xf32>
    %cst_117 = arith.constant 1.000000e+00 : f32
    %276 = vector.broadcast %cst_117 : f32 to vector<4x32xf32>
    %277 = arith.addf %276, %275 : vector<4x32xf32>
    %278 = tpu.reciprocal %277 {approx = true} : vector<4x32xf32> -> vector<4x32xf32>
    %279 = arith.subf %259, %256 : vector<4x32xf32>
    %280 = arith.mulf %278, %279 : vector<4x32xf32>
    %281 = arith.addf %256, %280 : vector<4x32xf32>
    %282 = arith.truncf %281 : vector<4x32xf32> to vector<4x32xbf16>
    %cst_118 = arith.constant dense<0.000000e+00> : vector<4x32xf32>
    %283 = tpu.matmul %282, %16, %cst_118 {dimension_numbers = #tpu.dot_dimension_numbers<[1], [0], [0], [1], [0, 0, 1, 1], [], []>} : vector<4x32xbf16>, vector<32x32xbf16>, vector<4x32xf32> -> vector<4x32xf32>
    %284 = arith.addf %254, %283 : vector<4x32xf32>
    %cst_119 = arith.constant dense<0.000000e+00> : vector<4xf32>
    %285 = vector.multi_reduction <add>, %284, %cst_119 [1] : vector<4x32xf32> to vector<4xf32>
    %286 = vector.shape_cast %285 : vector<4xf32> to vector<4x1xf32>
    %cst_120 = arith.constant 3.200000e+01 : f32
    %287 = vector.broadcast %cst_120 : f32 to vector<4x1xf32>
    %288 = arith.divf %286, %287 : vector<4x1xf32>
    %289 = vector.broadcast %288 : vector<4x1xf32> to vector<4x32xf32>
    %290 = arith.subf %284, %289 : vector<4x32xf32>
    %291 = arith.mulf %290, %290 : vector<4x32xf32>
    %cst_121 = arith.constant dense<0.000000e+00> : vector<4xf32>
    %292 = vector.multi_reduction <add>, %291, %cst_121 [1] : vector<4x32xf32> to vector<4xf32>
    %293 = vector.shape_cast %292 : vector<4xf32> to vector<4x1xf32>
    %cst_122 = arith.constant 3.200000e+01 : f32
    %294 = vector.broadcast %cst_122 : f32 to vector<4x1xf32>
    %295 = arith.divf %293, %294 : vector<4x1xf32>
    %cst_123 = arith.constant 9.99999974E-6 : f32
    %296 = vector.broadcast %cst_123 : f32 to vector<4x1xf32>
    %297 = arith.addf %295, %296 : vector<4x1xf32>
    %298 = math.rsqrt %297 : vector<4x1xf32>
    %299 = vector.broadcast %298 : vector<4x1xf32> to vector<4x32xf32>
    %300 = arith.mulf %290, %299 : vector<4x32xf32>
    %301 = vector.broadcast %24 : vector<1x32xf32> to vector<4x32xf32>
    %302 = arith.mulf %300, %301 : vector<4x32xf32>
    %303 = vector.broadcast %28 : vector<1x32xf32> to vector<4x32xf32>
    %304 = arith.addf %302, %303 : vector<4x32xf32>
    %305 = arith.truncf %304 : vector<4x32xf32> to vector<4x32xbf16>
    %cst_124 = arith.constant dense<0.000000e+00> : vector<4x32xf32>
    %306 = tpu.matmul %305, %20, %cst_124 {dimension_numbers = #tpu.dot_dimension_numbers<[1], [0], [0], [1], [0, 0, 1, 1], [], []>} : vector<4x32xbf16>, vector<32x32xbf16>, vector<4x32xf32> -> vector<4x32xf32>
    %307 = arith.addf %304, %306 : vector<4x32xf32>
    %cst_125 = arith.constant dense<0.000000e+00> : vector<4xf32>
    %308 = vector.multi_reduction <add>, %307, %cst_125 [1] : vector<4x32xf32> to vector<4xf32>
    %309 = vector.shape_cast %308 : vector<4xf32> to vector<4x1xf32>
    %cst_126 = arith.constant 3.200000e+01 : f32
    %310 = vector.broadcast %cst_126 : f32 to vector<4x1xf32>
    %311 = arith.divf %309, %310 : vector<4x1xf32>
    %312 = vector.broadcast %311 : vector<4x1xf32> to vector<4x32xf32>
    %313 = arith.subf %307, %312 : vector<4x32xf32>
    %314 = arith.mulf %313, %313 : vector<4x32xf32>
    %cst_127 = arith.constant dense<0.000000e+00> : vector<4xf32>
    %315 = vector.multi_reduction <add>, %314, %cst_127 [1] : vector<4x32xf32> to vector<4xf32>
    %316 = vector.shape_cast %315 : vector<4xf32> to vector<4x1xf32>
    %cst_128 = arith.constant 3.200000e+01 : f32
    %317 = vector.broadcast %cst_128 : f32 to vector<4x1xf32>
    %318 = arith.divf %316, %317 : vector<4x1xf32>
    %cst_129 = arith.constant 9.99999974E-6 : f32
    %319 = vector.broadcast %cst_129 : f32 to vector<4x1xf32>
    %320 = arith.addf %318, %319 : vector<4x1xf32>
    %321 = math.rsqrt %320 : vector<4x1xf32>
    %322 = vector.broadcast %321 : vector<4x1xf32> to vector<4x32xf32>
    %323 = arith.mulf %313, %322 : vector<4x32xf32>
    %324 = vector.broadcast %32 : vector<1x32xf32> to vector<4x32xf32>
    %325 = arith.mulf %323, %324 : vector<4x32xf32>
    %326 = vector.broadcast %36 : vector<1x32xf32> to vector<4x32xf32>
    %327 = arith.addf %325, %326 : vector<4x32xf32>
    %328 = arith.truncf %327 : vector<4x32xf32> to vector<4x32xbf16>
    %cst_130 = arith.constant dense<0.000000e+00> : vector<4x20xf32>
    %329 = tpu.matmul %328, %2, %cst_130 {dimension_numbers = #tpu.dot_dimension_numbers<[1], [0], [0], [1], [0, 0, 1, 1], [], []>} : vector<4x32xbf16>, vector<32x20xbf16>, vector<4x20xf32> -> vector<4x20xf32>
    %330 = vector.extract_strided_slice %329 {offsets = [0, 0], sizes = [2, 4], strides = [1, 1]} : vector<4x20xf32> to vector<2x4xf32>
    %cst_131 = arith.constant 0.000000e+00 : f32
    %331 = vector.broadcast %cst_131 : f32 to vector<2x4xf32>
    %332 = arith.subf %331, %330 : vector<2x4xf32>
    %333 = math.exp %332 : vector<2x4xf32>
    %cst_132 = arith.constant 1.000000e+00 : f32
    %334 = vector.broadcast %cst_132 : f32 to vector<2x4xf32>
    %335 = arith.addf %334, %333 : vector<2x4xf32>
    %cst_133 = arith.constant 1.000000e+00 : f32
    %336 = vector.broadcast %cst_133 : f32 to vector<2x4xf32>
    %337 = arith.divf %336, %335 : vector<2x4xf32>
    %338 = vector.extract_strided_slice %329 {offsets = [2, 4], sizes = [2, 16], strides = [1, 1]} : vector<4x20xf32> to vector<2x16xf32>
    %339 = math.tanh %338 : vector<2x16xf32>
    %340 = arith.truncf %339 : vector<2x16xf32> to vector<2x16xbf16>
    %cst_134 = arith.constant dense<0.000000e+00> : vector<2x32xf32>
    %341 = tpu.matmul %340, %0, %cst_134 {dimension_numbers = #tpu.dot_dimension_numbers<[1], [0], [0], [1], [0, 0, 1, 1], [], []>} : vector<2x16xbf16>, vector<16x32xbf16>, vector<2x32xf32> -> vector<2x32xf32>
    %342 = math.tanh %341 : vector<2x32xf32>
    %343 = vector.extract_strided_slice %40 {offsets = [4, 0], sizes = [2, 32], strides = [1, 1]} : vector<8x32xf32> to vector<2x32xf32>
    %344 = vector.extract_strided_slice %342 {offsets = [0, 0], sizes = [1, 32], strides = [1, 1]} : vector<2x32xf32> to vector<1x32xf32>
    %345 = vector.extract_strided_slice %343 {offsets = [0, 0], sizes = [1, 32], strides = [1, 1]} : vector<2x32xf32> to vector<1x32xf32>
    %346 = vector.extract_strided_slice %342 {offsets = [1, 0], sizes = [1, 32], strides = [1, 1]} : vector<2x32xf32> to vector<1x32xf32>
    %347 = vector.extract_strided_slice %343 {offsets = [1, 0], sizes = [1, 32], strides = [1, 1]} : vector<2x32xf32> to vector<1x32xf32>
    %348 = tpu.concatenate %344, %345, %346, %347 in 0 : vector<1x32xf32>, vector<1x32xf32>, vector<1x32xf32>, vector<1x32xf32> -> vector<4x32xf32>
    %349 = arith.addf %348, %4 : vector<4x32xf32>
    %350 = arith.truncf %349 : vector<4x32xf32> to vector<4x32xbf16>
    %cst_135 = arith.constant dense<0.000000e+00> : vector<4x32xf32>
    %351 = tpu.matmul %350, %10, %cst_135 {dimension_numbers = #tpu.dot_dimension_numbers<[1], [0], [0], [1], [0, 0, 1, 1], [], []>} : vector<4x32xbf16>, vector<32x32xbf16>, vector<4x32xf32> -> vector<4x32xf32>
    %352 = vector.extract_strided_slice %351 {offsets = [2, 0], sizes = [2, 32], strides = [1, 1]} : vector<4x32xf32> to vector<2x32xf32>
    %353 = vector.extract_strided_slice %351 {offsets = [0, 0], sizes = [2, 32], strides = [1, 1]} : vector<4x32xf32> to vector<2x32xf32>
    %354 = tpu.concatenate %352, %353 in 0 : vector<2x32xf32>, vector<2x32xf32> -> vector<4x32xf32>
    %355 = arith.truncf %254 : vector<4x32xf32> to vector<4x32xbf16>
    %cst_136 = arith.constant dense<0.000000e+00> : vector<4x64xf32>
    %356 = tpu.matmul %355, %6, %cst_136 {dimension_numbers = #tpu.dot_dimension_numbers<[1], [0], [0], [1], [0, 0, 1, 1], [], []>} : vector<4x32xbf16>, vector<32x64xbf16>, vector<4x64xf32> -> vector<4x64xf32>
    %357 = vector.extract_strided_slice %356 {offsets = [0, 0], sizes = [4, 32], strides = [1, 1]} : vector<4x64xf32> to vector<4x32xf32>
    %358 = vector.extract_strided_slice %356 {offsets = [0, 32], sizes = [4, 32], strides = [1, 1]} : vector<4x64xf32> to vector<4x32xf32>
    %359 = vector.extract_strided_slice %358 {offsets = [2, 0], sizes = [2, 32], strides = [1, 1]} : vector<4x32xf32> to vector<2x32xf32>
    %360 = vector.extract_strided_slice %358 {offsets = [0, 0], sizes = [2, 32], strides = [1, 1]} : vector<4x32xf32> to vector<2x32xf32>
    %361 = tpu.concatenate %359, %360 in 0 : vector<2x32xf32>, vector<2x32xf32> -> vector<4x32xf32>
    %362 = arith.subf %361, %358 : vector<4x32xf32>
    %363 = arith.mulf %357, %362 : vector<4x32xf32>
    %364 = arith.truncf %363 : vector<4x32xf32> to vector<4x32xbf16>
    %cst_137 = arith.constant dense<0.000000e+00> : vector<4x32xf32>
    %365 = tpu.matmul %364, %3, %cst_137 {dimension_numbers = #tpu.dot_dimension_numbers<[1], [0], [0], [1], [0, 0, 1, 1], [], []>} : vector<4x32xbf16>, vector<32x32xbf16>, vector<4x32xf32> -> vector<4x32xf32>
    %cst_138 = arith.constant 0.353553385 : f32
    %366 = vector.broadcast %cst_138 : f32 to vector<4x32xf32>
    %367 = arith.mulf %365, %366 : vector<4x32xf32>
    %cst_139 = arith.constant 0.000000e+00 : f32
    %368 = vector.broadcast %cst_139 : f32 to vector<4x32xf32>
    %369 = arith.subf %368, %367 : vector<4x32xf32>
    %370 = math.exp %369 : vector<4x32xf32>
    %cst_140 = arith.constant 1.000000e+00 : f32
    %371 = vector.broadcast %cst_140 : f32 to vector<4x32xf32>
    %372 = arith.addf %371, %370 : vector<4x32xf32>
    %373 = tpu.reciprocal %372 {approx = true} : vector<4x32xf32> -> vector<4x32xf32>
    %374 = arith.subf %354, %351 : vector<4x32xf32>
    %375 = arith.mulf %373, %374 : vector<4x32xf32>
    %376 = arith.addf %351, %375 : vector<4x32xf32>
    %377 = arith.truncf %376 : vector<4x32xf32> to vector<4x32xbf16>
    %cst_141 = arith.constant dense<0.000000e+00> : vector<4x32xf32>
    %378 = tpu.matmul %377, %14, %cst_141 {dimension_numbers = #tpu.dot_dimension_numbers<[1], [0], [0], [1], [0, 0, 1, 1], [], []>} : vector<4x32xbf16>, vector<32x32xbf16>, vector<4x32xf32> -> vector<4x32xf32>
    %379 = arith.addf %349, %378 : vector<4x32xf32>
    %cst_142 = arith.constant dense<0.000000e+00> : vector<4xf32>
    %380 = vector.multi_reduction <add>, %379, %cst_142 [1] : vector<4x32xf32> to vector<4xf32>
    %381 = vector.shape_cast %380 : vector<4xf32> to vector<4x1xf32>
    %cst_143 = arith.constant 3.200000e+01 : f32
    %382 = vector.broadcast %cst_143 : f32 to vector<4x1xf32>
    %383 = arith.divf %381, %382 : vector<4x1xf32>
    %384 = vector.broadcast %383 : vector<4x1xf32> to vector<4x32xf32>
    %385 = arith.subf %379, %384 : vector<4x32xf32>
    %386 = arith.mulf %385, %385 : vector<4x32xf32>
    %cst_144 = arith.constant dense<0.000000e+00> : vector<4xf32>
    %387 = vector.multi_reduction <add>, %386, %cst_144 [1] : vector<4x32xf32> to vector<4xf32>
    %388 = vector.shape_cast %387 : vector<4xf32> to vector<4x1xf32>
    %cst_145 = arith.constant 3.200000e+01 : f32
    %389 = vector.broadcast %cst_145 : f32 to vector<4x1xf32>
    %390 = arith.divf %388, %389 : vector<4x1xf32>
    %cst_146 = arith.constant 9.99999974E-6 : f32
    %391 = vector.broadcast %cst_146 : f32 to vector<4x1xf32>
    %392 = arith.addf %390, %391 : vector<4x1xf32>
    %393 = math.rsqrt %392 : vector<4x1xf32>
    %394 = vector.broadcast %393 : vector<4x1xf32> to vector<4x32xf32>
    %395 = arith.mulf %385, %394 : vector<4x32xf32>
    %396 = vector.broadcast %22 : vector<1x32xf32> to vector<4x32xf32>
    %397 = arith.mulf %395, %396 : vector<4x32xf32>
    %398 = vector.broadcast %26 : vector<1x32xf32> to vector<4x32xf32>
    %399 = arith.addf %397, %398 : vector<4x32xf32>
    %400 = arith.truncf %399 : vector<4x32xf32> to vector<4x32xbf16>
    %cst_147 = arith.constant dense<0.000000e+00> : vector<4x32xf32>
    %401 = tpu.matmul %400, %18, %cst_147 {dimension_numbers = #tpu.dot_dimension_numbers<[1], [0], [0], [1], [0, 0, 1, 1], [], []>} : vector<4x32xbf16>, vector<32x32xbf16>, vector<4x32xf32> -> vector<4x32xf32>
    %402 = arith.addf %399, %401 : vector<4x32xf32>
    %cst_148 = arith.constant dense<0.000000e+00> : vector<4xf32>
    %403 = vector.multi_reduction <add>, %402, %cst_148 [1] : vector<4x32xf32> to vector<4xf32>
    %404 = vector.shape_cast %403 : vector<4xf32> to vector<4x1xf32>
    %cst_149 = arith.constant 3.200000e+01 : f32
    %405 = vector.broadcast %cst_149 : f32 to vector<4x1xf32>
    %406 = arith.divf %404, %405 : vector<4x1xf32>
    %407 = vector.broadcast %406 : vector<4x1xf32> to vector<4x32xf32>
    %408 = arith.subf %402, %407 : vector<4x32xf32>
    %409 = arith.mulf %408, %408 : vector<4x32xf32>
    %cst_150 = arith.constant dense<0.000000e+00> : vector<4xf32>
    %410 = vector.multi_reduction <add>, %409, %cst_150 [1] : vector<4x32xf32> to vector<4xf32>
    %411 = vector.shape_cast %410 : vector<4xf32> to vector<4x1xf32>
    %cst_151 = arith.constant 3.200000e+01 : f32
    %412 = vector.broadcast %cst_151 : f32 to vector<4x1xf32>
    %413 = arith.divf %411, %412 : vector<4x1xf32>
    %cst_152 = arith.constant 9.99999974E-6 : f32
    %414 = vector.broadcast %cst_152 : f32 to vector<4x1xf32>
    %415 = arith.addf %413, %414 : vector<4x1xf32>
    %416 = math.rsqrt %415 : vector<4x1xf32>
    %417 = vector.broadcast %416 : vector<4x1xf32> to vector<4x32xf32>
    %418 = arith.mulf %408, %417 : vector<4x32xf32>
    %419 = vector.broadcast %30 : vector<1x32xf32> to vector<4x32xf32>
    %420 = arith.mulf %418, %419 : vector<4x32xf32>
    %421 = vector.broadcast %34 : vector<1x32xf32> to vector<4x32xf32>
    %422 = arith.addf %420, %421 : vector<4x32xf32>
    %423 = arith.truncf %422 : vector<4x32xf32> to vector<4x32xbf16>
    %cst_153 = arith.constant dense<0.000000e+00> : vector<4x32xf32>
    %424 = tpu.matmul %423, %12, %cst_153 {dimension_numbers = #tpu.dot_dimension_numbers<[1], [0], [0], [1], [0, 0, 1, 1], [], []>} : vector<4x32xbf16>, vector<32x32xbf16>, vector<4x32xf32> -> vector<4x32xf32>
    %425 = vector.extract_strided_slice %424 {offsets = [2, 0], sizes = [2, 32], strides = [1, 1]} : vector<4x32xf32> to vector<2x32xf32>
    %426 = vector.extract_strided_slice %424 {offsets = [0, 0], sizes = [2, 32], strides = [1, 1]} : vector<4x32xf32> to vector<2x32xf32>
    %427 = tpu.concatenate %425, %426 in 0 : vector<2x32xf32>, vector<2x32xf32> -> vector<4x32xf32>
    %428 = arith.truncf %327 : vector<4x32xf32> to vector<4x32xbf16>
    %cst_154 = arith.constant dense<0.000000e+00> : vector<4x64xf32>
    %429 = tpu.matmul %428, %8, %cst_154 {dimension_numbers = #tpu.dot_dimension_numbers<[1], [0], [0], [1], [0, 0, 1, 1], [], []>} : vector<4x32xbf16>, vector<32x64xbf16>, vector<4x64xf32> -> vector<4x64xf32>
    %430 = vector.extract_strided_slice %429 {offsets = [0, 0], sizes = [4, 32], strides = [1, 1]} : vector<4x64xf32> to vector<4x32xf32>
    %431 = vector.extract_strided_slice %429 {offsets = [0, 32], sizes = [4, 32], strides = [1, 1]} : vector<4x64xf32> to vector<4x32xf32>
    %432 = vector.extract_strided_slice %431 {offsets = [2, 0], sizes = [2, 32], strides = [1, 1]} : vector<4x32xf32> to vector<2x32xf32>
    %433 = vector.extract_strided_slice %431 {offsets = [0, 0], sizes = [2, 32], strides = [1, 1]} : vector<4x32xf32> to vector<2x32xf32>
    %434 = tpu.concatenate %432, %433 in 0 : vector<2x32xf32>, vector<2x32xf32> -> vector<4x32xf32>
    %435 = arith.subf %434, %431 : vector<4x32xf32>
    %436 = arith.mulf %430, %435 : vector<4x32xf32>
    %437 = arith.truncf %436 : vector<4x32xf32> to vector<4x32xbf16>
    %cst_155 = arith.constant dense<0.000000e+00> : vector<4x32xf32>
    %438 = tpu.matmul %437, %3, %cst_155 {dimension_numbers = #tpu.dot_dimension_numbers<[1], [0], [0], [1], [0, 0, 1, 1], [], []>} : vector<4x32xbf16>, vector<32x32xbf16>, vector<4x32xf32> -> vector<4x32xf32>
    %cst_156 = arith.constant 0.353553385 : f32
    %439 = vector.broadcast %cst_156 : f32 to vector<4x32xf32>
    %440 = arith.mulf %438, %439 : vector<4x32xf32>
    %cst_157 = arith.constant 0.000000e+00 : f32
    %441 = vector.broadcast %cst_157 : f32 to vector<4x32xf32>
    %442 = arith.subf %441, %440 : vector<4x32xf32>
    %443 = math.exp %442 : vector<4x32xf32>
    %cst_158 = arith.constant 1.000000e+00 : f32
    %444 = vector.broadcast %cst_158 : f32 to vector<4x32xf32>
    %445 = arith.addf %444, %443 : vector<4x32xf32>
    %446 = tpu.reciprocal %445 {approx = true} : vector<4x32xf32> -> vector<4x32xf32>
    %447 = arith.subf %427, %424 : vector<4x32xf32>
    %448 = arith.mulf %446, %447 : vector<4x32xf32>
    %449 = arith.addf %424, %448 : vector<4x32xf32>
    %450 = arith.truncf %449 : vector<4x32xf32> to vector<4x32xbf16>
    %cst_159 = arith.constant dense<0.000000e+00> : vector<4x32xf32>
    %451 = tpu.matmul %450, %16, %cst_159 {dimension_numbers = #tpu.dot_dimension_numbers<[1], [0], [0], [1], [0, 0, 1, 1], [], []>} : vector<4x32xbf16>, vector<32x32xbf16>, vector<4x32xf32> -> vector<4x32xf32>
    %452 = arith.addf %422, %451 : vector<4x32xf32>
    %cst_160 = arith.constant dense<0.000000e+00> : vector<4xf32>
    %453 = vector.multi_reduction <add>, %452, %cst_160 [1] : vector<4x32xf32> to vector<4xf32>
    %454 = vector.shape_cast %453 : vector<4xf32> to vector<4x1xf32>
    %cst_161 = arith.constant 3.200000e+01 : f32
    %455 = vector.broadcast %cst_161 : f32 to vector<4x1xf32>
    %456 = arith.divf %454, %455 : vector<4x1xf32>
    %457 = vector.broadcast %456 : vector<4x1xf32> to vector<4x32xf32>
    %458 = arith.subf %452, %457 : vector<4x32xf32>
    %459 = arith.mulf %458, %458 : vector<4x32xf32>
    %cst_162 = arith.constant dense<0.000000e+00> : vector<4xf32>
    %460 = vector.multi_reduction <add>, %459, %cst_162 [1] : vector<4x32xf32> to vector<4xf32>
    %461 = vector.shape_cast %460 : vector<4xf32> to vector<4x1xf32>
    %cst_163 = arith.constant 3.200000e+01 : f32
    %462 = vector.broadcast %cst_163 : f32 to vector<4x1xf32>
    %463 = arith.divf %461, %462 : vector<4x1xf32>
    %cst_164 = arith.constant 9.99999974E-6 : f32
    %464 = vector.broadcast %cst_164 : f32 to vector<4x1xf32>
    %465 = arith.addf %463, %464 : vector<4x1xf32>
    %466 = math.rsqrt %465 : vector<4x1xf32>
    %467 = vector.broadcast %466 : vector<4x1xf32> to vector<4x32xf32>
    %468 = arith.mulf %458, %467 : vector<4x32xf32>
    %469 = vector.broadcast %24 : vector<1x32xf32> to vector<4x32xf32>
    %470 = arith.mulf %468, %469 : vector<4x32xf32>
    %471 = vector.broadcast %28 : vector<1x32xf32> to vector<4x32xf32>
    %472 = arith.addf %470, %471 : vector<4x32xf32>
    %473 = arith.truncf %472 : vector<4x32xf32> to vector<4x32xbf16>
    %cst_165 = arith.constant dense<0.000000e+00> : vector<4x32xf32>
    %474 = tpu.matmul %473, %20, %cst_165 {dimension_numbers = #tpu.dot_dimension_numbers<[1], [0], [0], [1], [0, 0, 1, 1], [], []>} : vector<4x32xbf16>, vector<32x32xbf16>, vector<4x32xf32> -> vector<4x32xf32>
    %475 = arith.addf %472, %474 : vector<4x32xf32>
    %cst_166 = arith.constant dense<0.000000e+00> : vector<4xf32>
    %476 = vector.multi_reduction <add>, %475, %cst_166 [1] : vector<4x32xf32> to vector<4xf32>
    %477 = vector.shape_cast %476 : vector<4xf32> to vector<4x1xf32>
    %cst_167 = arith.constant 3.200000e+01 : f32
    %478 = vector.broadcast %cst_167 : f32 to vector<4x1xf32>
    %479 = arith.divf %477, %478 : vector<4x1xf32>
    %480 = vector.broadcast %479 : vector<4x1xf32> to vector<4x32xf32>
    %481 = arith.subf %475, %480 : vector<4x32xf32>
    %482 = arith.mulf %481, %481 : vector<4x32xf32>
    %cst_168 = arith.constant dense<0.000000e+00> : vector<4xf32>
    %483 = vector.multi_reduction <add>, %482, %cst_168 [1] : vector<4x32xf32> to vector<4xf32>
    %484 = vector.shape_cast %483 : vector<4xf32> to vector<4x1xf32>
    %cst_169 = arith.constant 3.200000e+01 : f32
    %485 = vector.broadcast %cst_169 : f32 to vector<4x1xf32>
    %486 = arith.divf %484, %485 : vector<4x1xf32>
    %cst_170 = arith.constant 9.99999974E-6 : f32
    %487 = vector.broadcast %cst_170 : f32 to vector<4x1xf32>
    %488 = arith.addf %486, %487 : vector<4x1xf32>
    %489 = math.rsqrt %488 : vector<4x1xf32>
    %490 = vector.broadcast %489 : vector<4x1xf32> to vector<4x32xf32>
    %491 = arith.mulf %481, %490 : vector<4x32xf32>
    %492 = vector.broadcast %32 : vector<1x32xf32> to vector<4x32xf32>
    %493 = arith.mulf %491, %492 : vector<4x32xf32>
    %494 = vector.broadcast %36 : vector<1x32xf32> to vector<4x32xf32>
    %495 = arith.addf %493, %494 : vector<4x32xf32>
    %496 = arith.truncf %495 : vector<4x32xf32> to vector<4x32xbf16>
    %cst_171 = arith.constant dense<0.000000e+00> : vector<4x20xf32>
    %497 = tpu.matmul %496, %2, %cst_171 {dimension_numbers = #tpu.dot_dimension_numbers<[1], [0], [0], [1], [0, 0, 1, 1], [], []>} : vector<4x32xbf16>, vector<32x20xbf16>, vector<4x20xf32> -> vector<4x20xf32>
    %498 = vector.extract_strided_slice %497 {offsets = [0, 0], sizes = [2, 4], strides = [1, 1]} : vector<4x20xf32> to vector<2x4xf32>
    %cst_172 = arith.constant 0.000000e+00 : f32
    %499 = vector.broadcast %cst_172 : f32 to vector<2x4xf32>
    %500 = arith.subf %499, %498 : vector<2x4xf32>
    %501 = math.exp %500 : vector<2x4xf32>
    %cst_173 = arith.constant 1.000000e+00 : f32
    %502 = vector.broadcast %cst_173 : f32 to vector<2x4xf32>
    %503 = arith.addf %502, %501 : vector<2x4xf32>
    %cst_174 = arith.constant 1.000000e+00 : f32
    %504 = vector.broadcast %cst_174 : f32 to vector<2x4xf32>
    %505 = arith.divf %504, %503 : vector<2x4xf32>
    %506 = vector.extract_strided_slice %497 {offsets = [2, 4], sizes = [2, 16], strides = [1, 1]} : vector<4x20xf32> to vector<2x16xf32>
    %507 = math.tanh %506 : vector<2x16xf32>
    %508 = arith.truncf %507 : vector<2x16xf32> to vector<2x16xbf16>
    %cst_175 = arith.constant dense<0.000000e+00> : vector<2x32xf32>
    %509 = tpu.matmul %508, %0, %cst_175 {dimension_numbers = #tpu.dot_dimension_numbers<[1], [0], [0], [1], [0, 0, 1, 1], [], []>} : vector<2x16xbf16>, vector<16x32xbf16>, vector<2x32xf32> -> vector<2x32xf32>
    %510 = math.tanh %509 : vector<2x32xf32>
    %511 = vector.extract_strided_slice %40 {offsets = [6, 0], sizes = [2, 32], strides = [1, 1]} : vector<8x32xf32> to vector<2x32xf32>
    %512 = vector.extract_strided_slice %510 {offsets = [0, 0], sizes = [1, 32], strides = [1, 1]} : vector<2x32xf32> to vector<1x32xf32>
    %513 = vector.extract_strided_slice %511 {offsets = [0, 0], sizes = [1, 32], strides = [1, 1]} : vector<2x32xf32> to vector<1x32xf32>
    %514 = vector.extract_strided_slice %510 {offsets = [1, 0], sizes = [1, 32], strides = [1, 1]} : vector<2x32xf32> to vector<1x32xf32>
    %515 = vector.extract_strided_slice %511 {offsets = [1, 0], sizes = [1, 32], strides = [1, 1]} : vector<2x32xf32> to vector<1x32xf32>
    %516 = tpu.concatenate %512, %513, %514, %515 in 0 : vector<1x32xf32>, vector<1x32xf32>, vector<1x32xf32>, vector<1x32xf32> -> vector<4x32xf32>
    %517 = arith.addf %516, %4 : vector<4x32xf32>
    %518 = arith.truncf %517 : vector<4x32xf32> to vector<4x32xbf16>
    %cst_176 = arith.constant dense<0.000000e+00> : vector<4x32xf32>
    %519 = tpu.matmul %518, %10, %cst_176 {dimension_numbers = #tpu.dot_dimension_numbers<[1], [0], [0], [1], [0, 0, 1, 1], [], []>} : vector<4x32xbf16>, vector<32x32xbf16>, vector<4x32xf32> -> vector<4x32xf32>
    %520 = vector.extract_strided_slice %519 {offsets = [2, 0], sizes = [2, 32], strides = [1, 1]} : vector<4x32xf32> to vector<2x32xf32>
    %521 = vector.extract_strided_slice %519 {offsets = [0, 0], sizes = [2, 32], strides = [1, 1]} : vector<4x32xf32> to vector<2x32xf32>
    %522 = tpu.concatenate %520, %521 in 0 : vector<2x32xf32>, vector<2x32xf32> -> vector<4x32xf32>
    %523 = arith.truncf %422 : vector<4x32xf32> to vector<4x32xbf16>
    %cst_177 = arith.constant dense<0.000000e+00> : vector<4x64xf32>
    %524 = tpu.matmul %523, %6, %cst_177 {dimension_numbers = #tpu.dot_dimension_numbers<[1], [0], [0], [1], [0, 0, 1, 1], [], []>} : vector<4x32xbf16>, vector<32x64xbf16>, vector<4x64xf32> -> vector<4x64xf32>
    %525 = vector.extract_strided_slice %524 {offsets = [0, 0], sizes = [4, 32], strides = [1, 1]} : vector<4x64xf32> to vector<4x32xf32>
    %526 = vector.extract_strided_slice %524 {offsets = [0, 32], sizes = [4, 32], strides = [1, 1]} : vector<4x64xf32> to vector<4x32xf32>
    %527 = vector.extract_strided_slice %526 {offsets = [2, 0], sizes = [2, 32], strides = [1, 1]} : vector<4x32xf32> to vector<2x32xf32>
    %528 = vector.extract_strided_slice %526 {offsets = [0, 0], sizes = [2, 32], strides = [1, 1]} : vector<4x32xf32> to vector<2x32xf32>
    %529 = tpu.concatenate %527, %528 in 0 : vector<2x32xf32>, vector<2x32xf32> -> vector<4x32xf32>
    %530 = arith.subf %529, %526 : vector<4x32xf32>
    %531 = arith.mulf %525, %530 : vector<4x32xf32>
    %532 = arith.truncf %531 : vector<4x32xf32> to vector<4x32xbf16>
    %cst_178 = arith.constant dense<0.000000e+00> : vector<4x32xf32>
    %533 = tpu.matmul %532, %3, %cst_178 {dimension_numbers = #tpu.dot_dimension_numbers<[1], [0], [0], [1], [0, 0, 1, 1], [], []>} : vector<4x32xbf16>, vector<32x32xbf16>, vector<4x32xf32> -> vector<4x32xf32>
    %cst_179 = arith.constant 0.353553385 : f32
    %534 = vector.broadcast %cst_179 : f32 to vector<4x32xf32>
    %535 = arith.mulf %533, %534 : vector<4x32xf32>
    %cst_180 = arith.constant 0.000000e+00 : f32
    %536 = vector.broadcast %cst_180 : f32 to vector<4x32xf32>
    %537 = arith.subf %536, %535 : vector<4x32xf32>
    %538 = math.exp %537 : vector<4x32xf32>
    %cst_181 = arith.constant 1.000000e+00 : f32
    %539 = vector.broadcast %cst_181 : f32 to vector<4x32xf32>
    %540 = arith.addf %539, %538 : vector<4x32xf32>
    %541 = tpu.reciprocal %540 {approx = true} : vector<4x32xf32> -> vector<4x32xf32>
    %542 = arith.subf %522, %519 : vector<4x32xf32>
    %543 = arith.mulf %541, %542 : vector<4x32xf32>
    %544 = arith.addf %519, %543 : vector<4x32xf32>
    %545 = arith.truncf %544 : vector<4x32xf32> to vector<4x32xbf16>
    %cst_182 = arith.constant dense<0.000000e+00> : vector<4x32xf32>
    %546 = tpu.matmul %545, %14, %cst_182 {dimension_numbers = #tpu.dot_dimension_numbers<[1], [0], [0], [1], [0, 0, 1, 1], [], []>} : vector<4x32xbf16>, vector<32x32xbf16>, vector<4x32xf32> -> vector<4x32xf32>
    %547 = arith.addf %517, %546 : vector<4x32xf32>
    %cst_183 = arith.constant dense<0.000000e+00> : vector<4xf32>
    %548 = vector.multi_reduction <add>, %547, %cst_183 [1] : vector<4x32xf32> to vector<4xf32>
    %549 = vector.shape_cast %548 : vector<4xf32> to vector<4x1xf32>
    %cst_184 = arith.constant 3.200000e+01 : f32
    %550 = vector.broadcast %cst_184 : f32 to vector<4x1xf32>
    %551 = arith.divf %549, %550 : vector<4x1xf32>
    %552 = vector.broadcast %551 : vector<4x1xf32> to vector<4x32xf32>
    %553 = arith.subf %547, %552 : vector<4x32xf32>
    %554 = arith.mulf %553, %553 : vector<4x32xf32>
    %cst_185 = arith.constant dense<0.000000e+00> : vector<4xf32>
    %555 = vector.multi_reduction <add>, %554, %cst_185 [1] : vector<4x32xf32> to vector<4xf32>
    %556 = vector.shape_cast %555 : vector<4xf32> to vector<4x1xf32>
    %cst_186 = arith.constant 3.200000e+01 : f32
    %557 = vector.broadcast %cst_186 : f32 to vector<4x1xf32>
    %558 = arith.divf %556, %557 : vector<4x1xf32>
    %cst_187 = arith.constant 9.99999974E-6 : f32
    %559 = vector.broadcast %cst_187 : f32 to vector<4x1xf32>
    %560 = arith.addf %558, %559 : vector<4x1xf32>
    %561 = math.rsqrt %560 : vector<4x1xf32>
    %562 = vector.broadcast %561 : vector<4x1xf32> to vector<4x32xf32>
    %563 = arith.mulf %553, %562 : vector<4x32xf32>
    %564 = vector.broadcast %22 : vector<1x32xf32> to vector<4x32xf32>
    %565 = arith.mulf %563, %564 : vector<4x32xf32>
    %566 = vector.broadcast %26 : vector<1x32xf32> to vector<4x32xf32>
    %567 = arith.addf %565, %566 : vector<4x32xf32>
    %568 = arith.truncf %567 : vector<4x32xf32> to vector<4x32xbf16>
    %cst_188 = arith.constant dense<0.000000e+00> : vector<4x32xf32>
    %569 = tpu.matmul %568, %18, %cst_188 {dimension_numbers = #tpu.dot_dimension_numbers<[1], [0], [0], [1], [0, 0, 1, 1], [], []>} : vector<4x32xbf16>, vector<32x32xbf16>, vector<4x32xf32> -> vector<4x32xf32>
    %570 = arith.addf %567, %569 : vector<4x32xf32>
    %cst_189 = arith.constant dense<0.000000e+00> : vector<4xf32>
    %571 = vector.multi_reduction <add>, %570, %cst_189 [1] : vector<4x32xf32> to vector<4xf32>
    %572 = vector.shape_cast %571 : vector<4xf32> to vector<4x1xf32>
    %cst_190 = arith.constant 3.200000e+01 : f32
    %573 = vector.broadcast %cst_190 : f32 to vector<4x1xf32>
    %574 = arith.divf %572, %573 : vector<4x1xf32>
    %575 = vector.broadcast %574 : vector<4x1xf32> to vector<4x32xf32>
    %576 = arith.subf %570, %575 : vector<4x32xf32>
    %577 = arith.mulf %576, %576 : vector<4x32xf32>
    %cst_191 = arith.constant dense<0.000000e+00> : vector<4xf32>
    %578 = vector.multi_reduction <add>, %577, %cst_191 [1] : vector<4x32xf32> to vector<4xf32>
    %579 = vector.shape_cast %578 : vector<4xf32> to vector<4x1xf32>
    %cst_192 = arith.constant 3.200000e+01 : f32
    %580 = vector.broadcast %cst_192 : f32 to vector<4x1xf32>
    %581 = arith.divf %579, %580 : vector<4x1xf32>
    %cst_193 = arith.constant 9.99999974E-6 : f32
    %582 = vector.broadcast %cst_193 : f32 to vector<4x1xf32>
    %583 = arith.addf %581, %582 : vector<4x1xf32>
    %584 = math.rsqrt %583 : vector<4x1xf32>
    %585 = vector.broadcast %584 : vector<4x1xf32> to vector<4x32xf32>
    %586 = arith.mulf %576, %585 : vector<4x32xf32>
    %587 = vector.broadcast %30 : vector<1x32xf32> to vector<4x32xf32>
    %588 = arith.mulf %586, %587 : vector<4x32xf32>
    %589 = vector.broadcast %34 : vector<1x32xf32> to vector<4x32xf32>
    %590 = arith.addf %588, %589 : vector<4x32xf32>
    %591 = arith.truncf %590 : vector<4x32xf32> to vector<4x32xbf16>
    %cst_194 = arith.constant dense<0.000000e+00> : vector<4x32xf32>
    %592 = tpu.matmul %591, %12, %cst_194 {dimension_numbers = #tpu.dot_dimension_numbers<[1], [0], [0], [1], [0, 0, 1, 1], [], []>} : vector<4x32xbf16>, vector<32x32xbf16>, vector<4x32xf32> -> vector<4x32xf32>
    %593 = vector.extract_strided_slice %592 {offsets = [2, 0], sizes = [2, 32], strides = [1, 1]} : vector<4x32xf32> to vector<2x32xf32>
    %594 = vector.extract_strided_slice %592 {offsets = [0, 0], sizes = [2, 32], strides = [1, 1]} : vector<4x32xf32> to vector<2x32xf32>
    %595 = tpu.concatenate %593, %594 in 0 : vector<2x32xf32>, vector<2x32xf32> -> vector<4x32xf32>
    %596 = arith.truncf %495 : vector<4x32xf32> to vector<4x32xbf16>
    %cst_195 = arith.constant dense<0.000000e+00> : vector<4x64xf32>
    %597 = tpu.matmul %596, %8, %cst_195 {dimension_numbers = #tpu.dot_dimension_numbers<[1], [0], [0], [1], [0, 0, 1, 1], [], []>} : vector<4x32xbf16>, vector<32x64xbf16>, vector<4x64xf32> -> vector<4x64xf32>
    %598 = vector.extract_strided_slice %597 {offsets = [0, 0], sizes = [4, 32], strides = [1, 1]} : vector<4x64xf32> to vector<4x32xf32>
    %599 = vector.extract_strided_slice %597 {offsets = [0, 32], sizes = [4, 32], strides = [1, 1]} : vector<4x64xf32> to vector<4x32xf32>
    %600 = vector.extract_strided_slice %599 {offsets = [2, 0], sizes = [2, 32], strides = [1, 1]} : vector<4x32xf32> to vector<2x32xf32>
    %601 = vector.extract_strided_slice %599 {offsets = [0, 0], sizes = [2, 32], strides = [1, 1]} : vector<4x32xf32> to vector<2x32xf32>
    %602 = tpu.concatenate %600, %601 in 0 : vector<2x32xf32>, vector<2x32xf32> -> vector<4x32xf32>
    %603 = arith.subf %602, %599 : vector<4x32xf32>
    %604 = arith.mulf %598, %603 : vector<4x32xf32>
    %605 = arith.truncf %604 : vector<4x32xf32> to vector<4x32xbf16>
    %cst_196 = arith.constant dense<0.000000e+00> : vector<4x32xf32>
    %606 = tpu.matmul %605, %3, %cst_196 {dimension_numbers = #tpu.dot_dimension_numbers<[1], [0], [0], [1], [0, 0, 1, 1], [], []>} : vector<4x32xbf16>, vector<32x32xbf16>, vector<4x32xf32> -> vector<4x32xf32>
    %cst_197 = arith.constant 0.353553385 : f32
    %607 = vector.broadcast %cst_197 : f32 to vector<4x32xf32>
    %608 = arith.mulf %606, %607 : vector<4x32xf32>
    %cst_198 = arith.constant 0.000000e+00 : f32
    %609 = vector.broadcast %cst_198 : f32 to vector<4x32xf32>
    %610 = arith.subf %609, %608 : vector<4x32xf32>
    %611 = math.exp %610 : vector<4x32xf32>
    %cst_199 = arith.constant 1.000000e+00 : f32
    %612 = vector.broadcast %cst_199 : f32 to vector<4x32xf32>
    %613 = arith.addf %612, %611 : vector<4x32xf32>
    %614 = tpu.reciprocal %613 {approx = true} : vector<4x32xf32> -> vector<4x32xf32>
    %615 = arith.subf %595, %592 : vector<4x32xf32>
    %616 = arith.mulf %614, %615 : vector<4x32xf32>
    %617 = arith.addf %592, %616 : vector<4x32xf32>
    %618 = arith.truncf %617 : vector<4x32xf32> to vector<4x32xbf16>
    %cst_200 = arith.constant dense<0.000000e+00> : vector<4x32xf32>
    %619 = tpu.matmul %618, %16, %cst_200 {dimension_numbers = #tpu.dot_dimension_numbers<[1], [0], [0], [1], [0, 0, 1, 1], [], []>} : vector<4x32xbf16>, vector<32x32xbf16>, vector<4x32xf32> -> vector<4x32xf32>
    %620 = arith.addf %590, %619 : vector<4x32xf32>
    %cst_201 = arith.constant dense<0.000000e+00> : vector<4xf32>
    %621 = vector.multi_reduction <add>, %620, %cst_201 [1] : vector<4x32xf32> to vector<4xf32>
    %622 = vector.shape_cast %621 : vector<4xf32> to vector<4x1xf32>
    %cst_202 = arith.constant 3.200000e+01 : f32
    %623 = vector.broadcast %cst_202 : f32 to vector<4x1xf32>
    %624 = arith.divf %622, %623 : vector<4x1xf32>
    %625 = vector.broadcast %624 : vector<4x1xf32> to vector<4x32xf32>
    %626 = arith.subf %620, %625 : vector<4x32xf32>
    %627 = arith.mulf %626, %626 : vector<4x32xf32>
    %cst_203 = arith.constant dense<0.000000e+00> : vector<4xf32>
    %628 = vector.multi_reduction <add>, %627, %cst_203 [1] : vector<4x32xf32> to vector<4xf32>
    %629 = vector.shape_cast %628 : vector<4xf32> to vector<4x1xf32>
    %cst_204 = arith.constant 3.200000e+01 : f32
    %630 = vector.broadcast %cst_204 : f32 to vector<4x1xf32>
    %631 = arith.divf %629, %630 : vector<4x1xf32>
    %cst_205 = arith.constant 9.99999974E-6 : f32
    %632 = vector.broadcast %cst_205 : f32 to vector<4x1xf32>
    %633 = arith.addf %631, %632 : vector<4x1xf32>
    %634 = math.rsqrt %633 : vector<4x1xf32>
    %635 = vector.broadcast %634 : vector<4x1xf32> to vector<4x32xf32>
    %636 = arith.mulf %626, %635 : vector<4x32xf32>
    %637 = vector.broadcast %24 : vector<1x32xf32> to vector<4x32xf32>
    %638 = arith.mulf %636, %637 : vector<4x32xf32>
    %639 = vector.broadcast %28 : vector<1x32xf32> to vector<4x32xf32>
    %640 = arith.addf %638, %639 : vector<4x32xf32>
    %641 = arith.truncf %640 : vector<4x32xf32> to vector<4x32xbf16>
    %cst_206 = arith.constant dense<0.000000e+00> : vector<4x32xf32>
    %642 = tpu.matmul %641, %20, %cst_206 {dimension_numbers = #tpu.dot_dimension_numbers<[1], [0], [0], [1], [0, 0, 1, 1], [], []>} : vector<4x32xbf16>, vector<32x32xbf16>, vector<4x32xf32> -> vector<4x32xf32>
    %643 = arith.addf %640, %642 : vector<4x32xf32>
    %cst_207 = arith.constant dense<0.000000e+00> : vector<4xf32>
    %644 = vector.multi_reduction <add>, %643, %cst_207 [1] : vector<4x32xf32> to vector<4xf32>
    %645 = vector.shape_cast %644 : vector<4xf32> to vector<4x1xf32>
    %cst_208 = arith.constant 3.200000e+01 : f32
    %646 = vector.broadcast %cst_208 : f32 to vector<4x1xf32>
    %647 = arith.divf %645, %646 : vector<4x1xf32>
    %648 = vector.broadcast %647 : vector<4x1xf32> to vector<4x32xf32>
    %649 = arith.subf %643, %648 : vector<4x32xf32>
    %650 = arith.mulf %649, %649 : vector<4x32xf32>
    %cst_209 = arith.constant dense<0.000000e+00> : vector<4xf32>
    %651 = vector.multi_reduction <add>, %650, %cst_209 [1] : vector<4x32xf32> to vector<4xf32>
    %652 = vector.shape_cast %651 : vector<4xf32> to vector<4x1xf32>
    %cst_210 = arith.constant 3.200000e+01 : f32
    %653 = vector.broadcast %cst_210 : f32 to vector<4x1xf32>
    %654 = arith.divf %652, %653 : vector<4x1xf32>
    %cst_211 = arith.constant 9.99999974E-6 : f32
    %655 = vector.broadcast %cst_211 : f32 to vector<4x1xf32>
    %656 = arith.addf %654, %655 : vector<4x1xf32>
    %657 = math.rsqrt %656 : vector<4x1xf32>
    %658 = vector.broadcast %657 : vector<4x1xf32> to vector<4x32xf32>
    %659 = arith.mulf %649, %658 : vector<4x32xf32>
    %660 = vector.broadcast %32 : vector<1x32xf32> to vector<4x32xf32>
    %661 = arith.mulf %659, %660 : vector<4x32xf32>
    %662 = vector.broadcast %36 : vector<1x32xf32> to vector<4x32xf32>
    %663 = arith.addf %661, %662 : vector<4x32xf32>
    %664 = arith.truncf %663 : vector<4x32xf32> to vector<4x32xbf16>
    %cst_212 = arith.constant dense<0.000000e+00> : vector<4x20xf32>
    %665 = tpu.matmul %664, %2, %cst_212 {dimension_numbers = #tpu.dot_dimension_numbers<[1], [0], [0], [1], [0, 0, 1, 1], [], []>} : vector<4x32xbf16>, vector<32x20xbf16>, vector<4x20xf32> -> vector<4x20xf32>
    %666 = vector.extract_strided_slice %665 {offsets = [0, 0], sizes = [2, 4], strides = [1, 1]} : vector<4x20xf32> to vector<2x4xf32>
    %cst_213 = arith.constant 0.000000e+00 : f32
    %667 = vector.broadcast %cst_213 : f32 to vector<2x4xf32>
    %668 = arith.subf %667, %666 : vector<2x4xf32>
    %669 = math.exp %668 : vector<2x4xf32>
    %cst_214 = arith.constant 1.000000e+00 : f32
    %670 = vector.broadcast %cst_214 : f32 to vector<2x4xf32>
    %671 = arith.addf %670, %669 : vector<2x4xf32>
    %cst_215 = arith.constant 1.000000e+00 : f32
    %672 = vector.broadcast %cst_215 : f32 to vector<2x4xf32>
    %673 = arith.divf %672, %671 : vector<2x4xf32>
    %674 = vector.extract_strided_slice %665 {offsets = [2, 4], sizes = [2, 16], strides = [1, 1]} : vector<4x20xf32> to vector<2x16xf32>
    %675 = math.tanh %674 : vector<2x16xf32>
    %676 = tpu.concatenate %169, %337, %505, %673 in 1 : vector<2x4xf32>, vector<2x4xf32>, vector<2x4xf32>, vector<2x4xf32> -> vector<2x16xf32>
    %c0_216 = arith.constant 0 : index
    %c0_217 = arith.constant 0 : index
    %677 = vector.load %arg15[%c0_216, %c0_217] : memref<2x16xf32, #tpu.memory_space<vmem>>, vector<2x16xf32>
    tpu.vector_store %arg15[%c0_216, %c0_217], %676 {strides = array<i32>} : memref<2x16xf32, #tpu.memory_space<vmem>>, vector<2x16xf32>,
    %678 = tpu.concatenate %171, %339, %507, %675 in 1 : vector<2x16xf32>, vector<2x16xf32>, vector<2x16xf32>, vector<2x16xf32> -> vector<2x64xf32>
    %c0_218 = arith.constant 0 : index
    %c0_219 = arith.constant 0 : index
    %679 = vector.load %arg16[%c0_218, %c0_219] : memref<2x64xf32, #tpu.memory_space<vmem>>, vector<2x64xf32>
    tpu.vector_store %arg16[%c0_218, %c0_219], %678 {strides = array<i32>} : memref<2x64xf32, #tpu.memory_space<vmem>>, vector<2x64xf32>,
    return
  }
}

</mosaic_0001>

<llo_original>
// kernel: tpu_custom_call.1
$region0: #{tpu_custom_call.1}
  #allocation0 [shape = 'u32[]', space=smem, size = 0x4, offset = 0x4, fixed_abs, tag = 'smem constant byte address 0x4 - core index']
  #allocation1 [shape = 'u32[144,128]{1,0:T(1,128)}', space=vmem, size = 0x12000, scoped, tag = 'internal scratch']
  %s0 = inlined_call_operand.vmem [shape: f32[2,16], index: 0, kind: input, shape index: {}]
  %s1 = inlined_call_operand.hbm [shape: f32[8,8], index: 1, kind: input, shape index: {}]
  %s2 = inlined_call_operand.vmem [shape: f32[4,32], index: 2, kind: input, shape index: {}]
  %s3 = inlined_call_operand.hbm [shape: bf16[32,32], index: 3, kind: input, shape index: {}]
  %s4 = inlined_call_operand.hbm [shape: bf16[16,32], index: 4, kind: input, shape index: {}]
  %s5 = inlined_call_operand.hbm [shape: bf16[8,32], index: 5, kind: input, shape index: {}]
  %s6 = inlined_call_operand.vmem [shape: bf16[2,32,64], index: 6, kind: input, shape index: {}]
  %s7 = inlined_call_operand.hbm [shape: bf16[2,32,32], index: 7, kind: input, shape index: {}]
  %s8 = inlined_call_operand.hbm [shape: bf16[2,32,32], index: 8, kind: input, shape index: {}]
  %s9 = inlined_call_operand.hbm [shape: bf16[2,32,32], index: 9, kind: input, shape index: {}]
  %s10 = inlined_call_operand.hbm [shape: f32[2,1,32], index: 10, kind: input, shape index: {}]
  %s11 = inlined_call_operand.hbm [shape: f32[2,1,32], index: 11, kind: input, shape index: {}]
  %s12 = inlined_call_operand.hbm [shape: f32[2,1,32], index: 12, kind: input, shape index: {}]
  %s13 = inlined_call_operand.hbm [shape: f32[2,1,32], index: 13, kind: input, shape index: {}]
  %s14 = inlined_call_operand.vmem [shape: bf16[32,20], index: 14, kind: input, shape index: {}]
  %s15 = inlined_call_operand.hbm [shape: f32[2,16], index: 15, kind: output, shape index: {0}]
  %s16 = inlined_call_operand.hbm [shape: f32[2,64], index: 16, kind: output, shape index: {1}]
  %17 = xla_tuple %s15, %s16
  %s18 = sld [smem:[#allocation0]]
  $region122: #{tpu_custom_call.1} parent=0
    _
  %s20 = ssub.s32 1, %s18
  %s21 = scalar_select 0, %s20, %s18
  $region1: #{tpu_custom_call.1} parent=0
    #allocation2 [shape = 'u8[4096]{0}', space=vmem, size = 0x1000, scoped, tag = 'input window, operand 1, single buffered']
    #allocation3 [shape = 's32[1]{0}', space=sflag, size = 0x4, scoped, tag = 'scoped memory for tpu_custom_call.1']
    #allocation4 [shape = 's32[1]{0}', space=sflag, size = 0x4, scoped, tag = 'scoped memory for tpu_custom_call.1']
    #allocation5 [shape = 'u8[8192]{0}', space=vmem, size = 0x2000, scoped, tag = 'input window, operand 3, single buffered']
    #allocation6 [shape = 's32[1]{0}', space=sflag, size = 0x4, scoped, tag = 'scoped memory for tpu_custom_call.1']
    #allocation7 [shape = 'u8[4096]{0}', space=vmem, size = 0x1000, scoped, tag = 'input window, operand 4, single buffered']
    #allocation8 [shape = 'u8[2048]{0}', space=vmem, size = 0x800, scoped, tag = 'input window, operand 5, single buffered']
    #allocation9 [shape = 's32[1]{0}', space=sflag, size = 0x4, scoped, tag = 'scoped memory for tpu_custom_call.1']
    #allocation10 [shape = 'u8[16384]{0}', space=vmem, size = 0x4000, scoped, tag = 'input window, operand 7, single buffered']
    #allocation11 [shape = 'u8[16384]{0}', space=vmem, size = 0x4000, scoped, tag = 'input window, operand 8, single buffered']
    #allocation12 [shape = 's32[1]{0}', space=sflag, size = 0x4, scoped, tag = 'scoped memory for tpu_custom_call.1']
    #allocation13 [shape = 'u8[16384]{0}', space=vmem, size = 0x4000, scoped, tag = 'input window, operand 9, single buffered']
    #allocation14 [shape = 'u8[1024]{0}', space=vmem, size = 0x400, scoped, tag = 'input window, operand 10, single buffered']
    #allocation15 [shape = 's32[1]{0}', space=sflag, size = 0x4, scoped, tag = 'scoped memory for tpu_custom_call.1']
    #allocation16 [shape = 'u8[1024]{0}', space=vmem, size = 0x400, scoped, tag = 'input window, operand 11, single buffered']
    #allocation17 [shape = 'u8[1024]{0}', space=vmem, size = 0x400, scoped, tag = 'input window, operand 12, single buffered']
    #allocation18 [shape = 's32[1]{0}', space=sflag, size = 0x4, scoped, tag = 'scoped memory for tpu_custom_call.1']
    #allocation19 [shape = 'u8[1024]{0}', space=vmem, size = 0x400, scoped, tag = 'input window, operand 13, single buffered']
    #allocation20 [shape = 'u8[1024]{0}', space=vmem, size = 0x400, scoped, tag = 'output window, operand 0, single buffered']
    #allocation21 [shape = 'u8[1024]{0}', space=vmem, size = 0x400, scoped, tag = 'output window, operand 1, single buffered']
    #allocation22 [shape = 's32[1]{0}', space=sflag, size = 0x4, scoped, tag = 'scoped memory for tpu_custom_call.1']
    %22 = vsyncpa [#allocation3], 0
    %23 = vsyncpa [#allocation6], 0
    %24 = vsyncpa [#allocation9], 0
    %25 = vsyncpa [#allocation12], 0
    %26 = vsyncpa [#allocation15], 0
    %27 = vsyncpa [#allocation18], 0
    %28 = vsyncpa [#allocation4], 0
    %29 = vsyncpa [#allocation22], 0
    // Predicated region
    $region2: #{tpu_custom_call.1} parent=1 // pred_check
      _
    $region3: #{tpu_custom_call.1} parent=1 // pred_check_branch
      %31 = sbr.rel (0) target = $region5
    $region4: #{tpu_custom_call.1} parent=1 // pred_region
      _
    $region5: #{tpu_custom_call.1} parent=1 // pred_fallthru
      _
    // Predicated region
    $region6: #{tpu_custom_call.1} parent=1 // pred_check
      _
    $region7: #{tpu_custom_call.1} parent=1 // pred_check_branch
      %33 = sbr.rel (0) target = $region9
    $region8: #{tpu_custom_call.1} parent=1 // pred_region
      %s35 = ssub.s32 128, 128
      %36 = vsyncadd [#allocation3], %s35
      %s38 = sshll.u32 [#allocation2], 4
      %s39 = int_to_ptr.vmem [resolvable:$true] %s38
      %41 = dma.hbm_to_vmem [thread:$0]  %s1, 128, %s39, [#allocation3]
    $region9: #{tpu_custom_call.1} parent=1 // pred_fallthru
      _
    // Predicated region
    $region10: #{tpu_custom_call.1} parent=1 // pred_check
      _
    $region11: #{tpu_custom_call.1} parent=1 // pred_check_branch
      %43 = sbr.rel (0) target = $region13
    $region12: #{tpu_custom_call.1} parent=1 // pred_region
      _
    $region13: #{tpu_custom_call.1} parent=1 // pred_fallthru
      _
    // Predicated region
    $region14: #{tpu_custom_call.1} parent=1 // pred_check
      _
    $region15: #{tpu_custom_call.1} parent=1 // pred_check_branch
      %45 = sbr.rel (0) target = $region17
    $region16: #{tpu_custom_call.1} parent=1 // pred_region
      %s47 = ssub.s32 256, 256
      %48 = vsyncadd [#allocation6], %s47
      %s49 = sshll.u32 [#allocation5], 4
      %s50 = int_to_ptr.vmem [resolvable:$true] %s49
      %55 = dma.hbm_to_vmem [thread:$0]  %s3, 256, %s50, [#allocation6], 64, 64, 4
    $region17: #{tpu_custom_call.1} parent=1 // pred_fallthru
      _
    // Predicated region
    $region18: #{tpu_custom_call.1} parent=1 // pred_check
      _
    $region19: #{tpu_custom_call.1} parent=1 // pred_check_branch
      %57 = sbr.rel (0) target = $region21
    $region20: #{tpu_custom_call.1} parent=1 // pred_region
      %s59 = ssub.s32 128, 128
      %60 = vsyncadd [#allocation6], %s59
      %s61 = sshll.u32 [#allocation7], 4
      %s62 = int_to_ptr.vmem [resolvable:$true] %s61
      %67 = dma.hbm_to_vmem [thread:$0]  %s4, 128, %s62, [#allocation6], 64, 64, 4
    $region21: #{tpu_custom_call.1} parent=1 // pred_fallthru
      _
    // Predicated region
    $region22: #{tpu_custom_call.1} parent=1 // pred_check
      _
    $region23: #{tpu_custom_call.1} parent=1 // pred_check_branch
      %69 = sbr.rel (0) target = $region25
    $region24: #{tpu_custom_call.1} parent=1 // pred_region
      %s71 = ssub.s32 64, 64
      %72 = vsyncadd [#allocation9], %s71
      %s74 = sshll.u32 [#allocation8], 4
      %s75 = int_to_ptr.vmem [resolvable:$true] %s74
      %77 = dma.hbm_to_vmem [thread:$0]  %s5, 64, %s75, [#allocation9]
    $region25: #{tpu_custom_call.1} parent=1 // pred_fallthru
      _
    // Predicated region
    $region26: #{tpu_custom_call.1} parent=1 // pred_check
      _
    $region27: #{tpu_custom_call.1} parent=1 // pred_check_branch
      %79 = sbr.rel (0) target = $region29
    $region28: #{tpu_custom_call.1} parent=1 // pred_region
      _
    $region29: #{tpu_custom_call.1} parent=1 // pred_fallthru
      _
    // Predicated region
    $region30: #{tpu_custom_call.1} parent=1 // pred_check
      _
    $region31: #{tpu_custom_call.1} parent=1 // pred_check_branch
      %81 = sbr.rel (0) target = $region33
    $region32: #{tpu_custom_call.1} parent=1 // pred_region
      %s83 = ssub.s32 512, 512
      %84 = vsyncadd [#allocation9], %s83
      %s85 = sshll.u32 [#allocation10], 4
      %s86 = int_to_ptr.vmem [resolvable:$true] %s85
      %91 = dma.hbm_to_vmem [thread:$0]  %s7, 512, %s86, [#allocation9], 64, 64, 4
    $region33: #{tpu_custom_call.1} parent=1 // pred_fallthru
      _
    // Predicated region
    $region34: #{tpu_custom_call.1} parent=1 // pred_check
      _
    $region35: #{tpu_custom_call.1} parent=1 // pred_check_branch
      %93 = sbr.rel (0) target = $region37
    $region36: #{tpu_custom_call.1} parent=1 // pred_region
      %s95 = ssub.s32 512, 512
      %96 = vsyncadd [#allocation12], %s95
      %s97 = sshll.u32 [#allocation11], 4
      %s98 = int_to_ptr.vmem [resolvable:$true] %s97
      %103 = dma.hbm_to_vmem [thread:$0]  %s8, 512, %s98, [#allocation12], 64, 64, 4
    $region37: #{tpu_custom_call.1} parent=1 // pred_fallthru
      _
    // Predicated region
    $region38: #{tpu_custom_call.1} parent=1 // pred_check
      _
    $region39: #{tpu_custom_call.1} parent=1 // pred_check_branch
      %105 = sbr.rel (0) target = $region41
    $region40: #{tpu_custom_call.1} parent=1 // pred_region
      %s107 = ssub.s32 512, 512
      %108 = vsyncadd [#allocation12], %s107
      %s109 = sshll.u32 [#allocation13], 4
      %s110 = int_to_ptr.vmem [resolvable:$true] %s109
      %115 = dma.hbm_to_vmem [thread:$0]  %s9, 512, %s110, [#allocation12], 64, 64, 4
    $region41: #{tpu_custom_call.1} parent=1 // pred_fallthru
      _
    // Predicated region
    $region42: #{tpu_custom_call.1} parent=1 // pred_check
      _
    $region43: #{tpu_custom_call.1} parent=1 // pred_check_branch
      %117 = sbr.rel (0) target = $region45
    $region44: #{tpu_custom_call.1} parent=1 // pred_region
      %s119 = ssub.s32 32, 32
      %120 = vsyncadd [#allocation15], %s119
      %s121 = sshll.u32 [#allocation14], 4
      %s122 = int_to_ptr.vmem [resolvable:$true] %s121
      %127 = dma.hbm_to_vmem [thread:$0]  %s10, 32, %s122, [#allocation15], 16, 16, 1
    $region45: #{tpu_custom_call.1} parent=1 // pred_fallthru
      _
    // Predicated region
    $region46: #{tpu_custom_call.1} parent=1 // pred_check
      _
    $region47: #{tpu_custom_call.1} parent=1 // pred_check_branch
      %129 = sbr.rel (0) target = $region49
    $region48: #{tpu_custom_call.1} parent=1 // pred_region
      %s131 = ssub.s32 32, 32
      %132 = vsyncadd [#allocation15], %s131
      %s133 = sshll.u32 [#allocation16], 4
      %s134 = int_to_ptr.vmem [resolvable:$true] %s133
      %139 = dma.hbm_to_vmem [thread:$0]  %s11, 32, %s134, [#allocation15], 16, 16, 1
    $region49: #{tpu_custom_call.1} parent=1 // pred_fallthru
      _
    // Predicated region
    $region50: #{tpu_custom_call.1} parent=1 // pred_check
      _
    $region51: #{tpu_custom_call.1} parent=1 // pred_check_branch
      %141 = sbr.rel (0) target = $region53
    $region52: #{tpu_custom_call.1} parent=1 // pred_region
      %s143 = ssub.s32 32, 32
      %144 = vsyncadd [#allocation18], %s143
      %s145 = sshll.u32 [#allocation17], 4
      %s146 = int_to_ptr.vmem [resolvable:$true] %s145
      %151 = dma.hbm_to_vmem [thread:$0]  %s12, 32, %s146, [#allocation18], 16, 16, 1
    $region53: #{tpu_custom_call.1} parent=1 // pred_fallthru
      _
    // Predicated region
    $region54: #{tpu_custom_call.1} parent=1 // pred_check
      _
    $region55: #{tpu_custom_call.1} parent=1 // pred_check_branch
      %153 = sbr.rel (0) target = $region57
    $region56: #{tpu_custom_call.1} parent=1 // pred_region
      %s155 = ssub.s32 32, 32
      %156 = vsyncadd [#allocation18], %s155
      %s157 = sshll.u32 [#allocation19], 4
      %s158 = int_to_ptr.vmem [resolvable:$true] %s157
      %163 = dma.hbm_to_vmem [thread:$0]  %s13, 32, %s158, [#allocation18], 16, 16, 1
    $region57: #{tpu_custom_call.1} parent=1 // pred_fallthru
      _
    // Predicated region
    $region58: #{tpu_custom_call.1} parent=1 // pred_check
      _
    $region59: #{tpu_custom_call.1} parent=1 // pred_check_branch
      %165 = sbr.rel (0) target = $region61
    $region60: #{tpu_custom_call.1} parent=1 // pred_region
      _
    $region61: #{tpu_custom_call.1} parent=1 // pred_fallthru
      _
    // Predicated region
    $region62: #{tpu_custom_call.1} parent=1 // pred_check
      _
    $region63: #{tpu_custom_call.1} parent=1 // pred_check_branch
      %167 = sbr.rel (0) target = $region65
    $region64: #{tpu_custom_call.1} parent=1 // pred_region
      %168 = dma.done [#allocation3], 128
    $region65: #{tpu_custom_call.1} parent=1 // pred_fallthru
      _
    // Predicated region
    $region66: #{tpu_custom_call.1} parent=1 // pred_check
      _
    $region67: #{tpu_custom_call.1} parent=1 // pred_check_branch
      %170 = sbr.rel (0) target = $region69
    $region68: #{tpu_custom_call.1} parent=1 // pred_region
      %171 = dma.done [#allocation6], 256
    $region69: #{tpu_custom_call.1} parent=1 // pred_fallthru
      _
    // Predicated region
    $region70: #{tpu_custom_call.1} parent=1 // pred_check
      _
    $region71: #{tpu_custom_call.1} parent=1 // pred_check_branch
      %173 = sbr.rel (0) target = $region73
    $region72: #{tpu_custom_call.1} parent=1 // pred_region
      %174 = dma.done [#allocation6], 128
    $region73: #{tpu_custom_call.1} parent=1 // pred_fallthru
      _
    // Predicated region
    $region74: #{tpu_custom_call.1} parent=1 // pred_check
      _
    $region75: #{tpu_custom_call.1} parent=1 // pred_check_branch
      %176 = sbr.rel (0) target = $region77
    $region76: #{tpu_custom_call.1} parent=1 // pred_region
      %177 = dma.done [#allocation9], 64
    $region77: #{tpu_custom_call.1} parent=1 // pred_fallthru
      _
    // Predicated region
    $region78: #{tpu_custom_call.1} parent=1 // pred_check
      _
    $region79: #{tpu_custom_call.1} parent=1 // pred_check_branch
      %179 = sbr.rel (0) target = $region81
    $region80: #{tpu_custom_call.1} parent=1 // pred_region
      %180 = dma.done [#allocation9], 512
    $region81: #{tpu_custom_call.1} parent=1 // pred_fallthru
      _
    // Predicated region
    $region82: #{tpu_custom_call.1} parent=1 // pred_check
      _
    $region83: #{tpu_custom_call.1} parent=1 // pred_check_branch
      %182 = sbr.rel (0) target = $region85
    $region84: #{tpu_custom_call.1} parent=1 // pred_region
      %183 = dma.done [#allocation12], 512
    $region85: #{tpu_custom_call.1} parent=1 // pred_fallthru
      _
    // Predicated region
    $region86: #{tpu_custom_call.1} parent=1 // pred_check
      _
    $region87: #{tpu_custom_call.1} parent=1 // pred_check_branch
      %185 = sbr.rel (0) target = $region89
    $region88: #{tpu_custom_call.1} parent=1 // pred_region
      %186 = dma.done [#allocation12], 512
    $region89: #{tpu_custom_call.1} parent=1 // pred_fallthru
      _
    // Predicated region
    $region90: #{tpu_custom_call.1} parent=1 // pred_check
      _
    $region91: #{tpu_custom_call.1} parent=1 // pred_check_branch
      %188 = sbr.rel (0) target = $region93
    $region92: #{tpu_custom_call.1} parent=1 // pred_region
      %189 = dma.done [#allocation15], 32
    $region93: #{tpu_custom_call.1} parent=1 // pred_fallthru
      _
    // Predicated region
    $region94: #{tpu_custom_call.1} parent=1 // pred_check
      _
    $region95: #{tpu_custom_call.1} parent=1 // pred_check_branch
      %191 = sbr.rel (0) target = $region97
    $region96: #{tpu_custom_call.1} parent=1 // pred_region
      %192 = dma.done [#allocation15], 32
    $region97: #{tpu_custom_call.1} parent=1 // pred_fallthru
      _
    // Predicated region
    $region98: #{tpu_custom_call.1} parent=1 // pred_check
      _
    $region99: #{tpu_custom_call.1} parent=1 // pred_check_branch
      %194 = sbr.rel (0) target = $region101
    $region100: #{tpu_custom_call.1} parent=1 // pred_region
      %195 = dma.done [#allocation18], 32
    $region101: #{tpu_custom_call.1} parent=1 // pred_fallthru
      _
    // Predicated region
    $region102: #{tpu_custom_call.1} parent=1 // pred_check
      _
    $region103: #{tpu_custom_call.1} parent=1 // pred_check_branch
      %197 = sbr.rel (0) target = $region105
    $region104: #{tpu_custom_call.1} parent=1 // pred_region
      %198 = dma.done [#allocation18], 32
    $region105: #{tpu_custom_call.1} parent=1 // pred_fallthru
      _
    %v200 = vld [vmem:[#allocation7] sm:$0xf]
    %v201 = vld [vmem:[#allocation7 + $0x4] sm:$0xf]
    %v202 = vld [vmem:[#allocation8] sm:$0xf]
    %v203 = vld [vmem:[%s14] sm:$0xf]
    %v204 = vld [vmem:[%s14 + $0x4] sm:$0xf]
    %v205 = vld [vmem:[%s14 + $0x8] sm:$0xf]
    %v206 = vld [vmem:[%s14 + $0xc] sm:$0xf]
    %v207 = vld [vmem:[#allocation5] sm:$0xf]
    %v208 = vld [vmem:[#allocation5 + $0x4] sm:$0xf]
    %v209 = vld [vmem:[#allocation5 + $0x8] sm:$0xf]
    %v210 = vld [vmem:[#allocation5 + $0xc] sm:$0xf]
    %v211 = vld [vmem:[%s2] sm:$0xf]
    %v212 = vld [vmem:[%s6] sm:$0xf]
    %v213 = vld [vmem:[%s6 + $0x4] sm:$0xf]
    %v214 = vld [vmem:[%s6 + $0x8] sm:$0xf]
    %v215 = vld [vmem:[%s6 + $0xc] sm:$0xf]
    %s216 = scalar_lea.vmem %s6, 16
    %v217 = vld [vmem:[%s216] sm:$0xf]
    %v218 = vld [vmem:[%s216 + $0x4] sm:$0xf]
    %v219 = vld [vmem:[%s216 + $0x8] sm:$0xf]
    %v220 = vld [vmem:[%s216 + $0xc] sm:$0xf]
    %v221 = vld [vmem:[#allocation10] sm:$0xf]
    %v222 = vld [vmem:[#allocation10 + $0x4] sm:$0xf]
    %v223 = vld [vmem:[#allocation10 + $0x8] sm:$0xf]
    %v224 = vld [vmem:[#allocation10 + $0xc] sm:$0xf]
    %s225 = scalar_lea.vmem [#allocation10], 16
    %v226 = vld [vmem:[%s225] sm:$0xf]
    %v227 = vld [vmem:[%s225 + $0x4] sm:$0xf]
    %v228 = vld [vmem:[%s225 + $0x8] sm:$0xf]
    %v229 = vld [vmem:[%s225 + $0xc] sm:$0xf]
    %v230 = vld [vmem:[#allocation11] sm:$0xf]
    %v231 = vld [vmem:[#allocation11 + $0x4] sm:$0xf]
    %v232 = vld [vmem:[#allocation11 + $0x8] sm:$0xf]
    %v233 = vld [vmem:[#allocation11 + $0xc] sm:$0xf]
    %s234 = scalar_lea.vmem [#allocation11], 16
    %v235 = vld [vmem:[%s234] sm:$0xf]
    %v236 = vld [vmem:[%s234 + $0x4] sm:$0xf]
    %v237 = vld [vmem:[%s234 + $0x8] sm:$0xf]
    %v238 = vld [vmem:[%s234 + $0xc] sm:$0xf]
    %v239 = vld [vmem:[#allocation13] sm:$0xf]
    %v240 = vld [vmem:[#allocation13 + $0x4] sm:$0xf]
    %v241 = vld [vmem:[#allocation13 + $0x8] sm:$0xf]
    %v242 = vld [vmem:[#allocation13 + $0xc] sm:$0xf]
    %s243 = scalar_lea.vmem [#allocation13], 16
    %v244 = vld [vmem:[%s243] sm:$0xf]
    %v245 = vld [vmem:[%s243 + $0x4] sm:$0xf]
    %v246 = vld [vmem:[%s243 + $0x8] sm:$0xf]
    %v247 = vld [vmem:[%s243 + $0xc] sm:$0xf]
    %v248 = vld [vmem:[#allocation14] sm:$0x1]
    %s249 = scalar_lea.vmem [#allocation14], 1
    %v250 = vld [vmem:[%s249] sm:$0x1]
    %v251 = vld [vmem:[#allocation16] sm:$0x1]
    %s252 = scalar_lea.vmem [#allocation16], 1
    %v253 = vld [vmem:[%s252] sm:$0x1]
    %v254 = vld [vmem:[#allocation17] sm:$0x1]
    %s255 = scalar_lea.vmem [#allocation17], 1
    %v256 = vld [vmem:[%s255] sm:$0x1]
    %v257 = vld [vmem:[#allocation19] sm:$0x1]
    %s258 = scalar_lea.vmem [#allocation19], 1
    %v259 = vld [vmem:[%s258] sm:$0x1]
    %v260 = vld [vmem:[#allocation2] sm:$0xff]
    %v261 = vpack.c.bf16 %v260, %v260
    %vm262 = vcmask 64512
    %v264 = vsel %vm262, %v261, 0
    %vm266 = vcmask 1043456
    %v268 = vsel %vm266, %v202, 0
    %270 = vmatprep.subr.bf16.mxu0 0
    %271 = vmatpush1.bf16.msra.mxu0 0
    %272 = vmatprep.subr.bf16.mxu0 0
    %273 = vmatpush1.bf16.msra.mxu0 0
    %274 = vmatprep.subr.bf16.mxu0 0
    %275 = vmatpush1.bf16.msra.mxu0 0
    %276 = vmatprep.subr.bf16.mxu0 0
    %277 = vmatpush1.bf16.msra.mxu0 0
    %278 = vmatprep.subr.bf16.mxu0 0
    %279 = vmatpush1.bf16.msra.mxu0 0
    %280 = vmatprep.subr.bf16.mxu0 0
    %281 = vmatpush1.bf16.msra.mxu0 0
    %282 = vmatprep.subr.bf16.mxu0 0
    %283 = vmatpush1.bf16.msra.mxu0 0
    %284 = vmatprep.subr.bf16.mxu0 0
    %285 = vmatpush1.bf16.msra.mxu0 %v268
    %286 = vmatprep.subr.bf16.mxu0 0
    %287 = vmatpush2.bf16.msra.mxu0 0
    %288 = vmatprep.subr.bf16.mxu0 0
    %289 = vmatpush2.bf16.msra.mxu0 0
    %290 = vmatprep.subr.bf16.mxu0 0
    %291 = vmatpush2.bf16.msra.mxu0 0
    %292 = vmatprep.subr.bf16.mxu0 0
    %293 = vmatpush2.bf16.msra.mxu0 0
    %294 = vmatprep.subr.bf16.mxu0 0
    %295 = vmatpush2.bf16.msra.mxu0 0
    %296 = vmatprep.subr.bf16.mxu0 0
    %297 = vmatpush2.bf16.msra.mxu0 0
    %298 = vmatprep.subr.bf16.mxu0 0
    %299 = vmatpush2.bf16.msra.mxu0 0
    %300 = vmatprep.subr.bf16.mxu0 0
    %301 = vmatpush2.bf16.msra.mxu0 0
    %302 = vmatprep.mubr.bf16.mxu0 0
    %303 = vmatmul.mubr.bf16.gmra.mxu0 %v264
    %v304 = vpop.f32.mrf.mxu0
    %v305 = vadd.f32 0.0, %v304
    %v306 = vpop.f32.mrf.mxu0
    %v307 = vpop.f32.mrf.mxu0
    %v308 = vpop.f32.mrf.mxu0
    %309 = vdwg.mxu0
    %v310 = vtanh.pop %v305
    %v311 = vld [vmem:[%s0] sm:$0x3]
    %v312 = vpack.c.bf16 %v311, %v311
    %v315 = vunpack.c.l.b16 %v200
    %v316 = vunpack.c.l.b16 %v201
    %v317 = vpack.c.b16 %v316, %v315
    %vm319 = vcmask 130048
    %v321 = vsel %vm319, %v312, 0
    %323 = vmatprep.subr.bf16.mxu0 0
    %324 = vmatpush1.bf16.msra.mxu0 0
    %325 = vmatprep.subr.bf16.mxu0 0
    %326 = vmatpush1.bf16.msra.mxu0 0
    %327 = vmatprep.subr.bf16.mxu0 0
    %328 = vmatpush1.bf16.msra.mxu0 0
    %329 = vmatprep.subr.bf16.mxu0 0
    %330 = vmatpush1.bf16.msra.mxu0 0
    %331 = vmatprep.subr.bf16.mxu0 0
    %332 = vmatpush1.bf16.msra.mxu0 0
    %333 = vmatprep.subr.bf16.mxu0 0
    %334 = vmatpush1.bf16.msra.mxu0 0
    %335 = vmatprep.subr.bf16.mxu0 0
    %336 = vmatpush1.bf16.msra.mxu0 0
    %337 = vmatprep.subr.bf16.mxu0 0
    %338 = vmatpush1.bf16.msra.mxu0 %v317
    %339 = vmatprep.subr.bf16.mxu0 0
    %340 = vmatpush2.bf16.msra.mxu0 0
    %341 = vmatprep.subr.bf16.mxu0 0
    %342 = vmatpush2.bf16.msra.mxu0 0
    %343 = vmatprep.subr.bf16.mxu0 0
    %344 = vmatpush2.bf16.msra.mxu0 0
    %345 = vmatprep.subr.bf16.mxu0 0
    %346 = vmatpush2.bf16.msra.mxu0 0
    %347 = vmatprep.subr.bf16.mxu0 0
    %348 = vmatpush2.bf16.msra.mxu0 0
    %349 = vmatprep.subr.bf16.mxu0 0
    %350 = vmatpush2.bf16.msra.mxu0 0
    %351 = vmatprep.subr.bf16.mxu0 0
    %352 = vmatpush2.bf16.msra.mxu0 0
    %353 = vmatprep.subr.bf16.mxu0 0
    %354 = vmatpush2.bf16.msra.mxu0 0
    %355 = vmatprep.mubr.bf16.mxu0 0
    %356 = vmatmul.mubr.bf16.gmra.mxu0 %v321
    %v357 = vpop.f32.mrf.mxu0
    %v358 = vadd.f32 0.0, %v357
    %v359 = vpop.f32.mrf.mxu0
    %v360 = vpop.f32.mrf.mxu0
    %v361 = vpop.f32.mrf.mxu0
    %362 = vdwg.mxu0
    %v363 = vtanh.pop %v358
    %v365 = vrot.slane %v310, 7
    %v368 = vrot.slane %v363, 7
    %v370 = vrot.slane %v310, 6
    %vm372 = vcmask 1040384
    %v373 = vsel %vm372, %v363, %v365
    %vm374 = vcmask 1041408
    %v375 = vsel %vm374, %v373, %v368
    %vm376 = vcmask 1042432
    %v377 = vsel %vm376, %v375, %v370
    %v378 = vadd.f32 %v377, %v211
    %v379 = vpack.c.bf16 %v378, %v378
    %v384 = vunpack.c.l.b16 %v221
    %v385 = vunpack.c.l.b16 %v222
    %v386 = vunpack.c.l.b16 %v223
    %v387 = vunpack.c.l.b16 %v224
    %v388 = vpack.c.b16 %v385, %v384
    %v389 = vpack.c.b16 %v387, %v386
    %vm392 = vcmask 261120
    %v394 = vsel %vm392, %v379, 0
    %396 = vmatprep.subr.bf16.mxu0 0
    %397 = vmatpush1.bf16.msra.mxu0 0
    %398 = vmatprep.subr.bf16.mxu0 0
    %399 = vmatpush1.bf16.msra.mxu0 0
    %400 = vmatprep.subr.bf16.mxu0 0
    %401 = vmatpush1.bf16.msra.mxu0 0
    %402 = vmatprep.subr.bf16.mxu0 0
    %403 = vmatpush1.bf16.msra.mxu0 0
    %404 = vmatprep.subr.bf16.mxu0 0
    %405 = vmatpush1.bf16.msra.mxu0 0
    %406 = vmatprep.subr.bf16.mxu0 0
    %407 = vmatpush1.bf16.msra.mxu0 0
    %408 = vmatprep.subr.bf16.mxu0 0
    %409 = vmatpush1.bf16.msra.mxu0 %v389
    %410 = vmatprep.subr.bf16.mxu0 0
    %411 = vmatpush1.bf16.msra.mxu0 %v388
    %412 = vmatprep.subr.bf16.mxu0 0
    %413 = vmatpush2.bf16.msra.mxu0 0
    %414 = vmatprep.subr.bf16.mxu0 0
    %415 = vmatpush2.bf16.msra.mxu0 0
    %416 = vmatprep.subr.bf16.mxu0 0
    %417 = vmatpush2.bf16.msra.mxu0 0
    %418 = vmatprep.subr.bf16.mxu0 0
    %419 = vmatpush2.bf16.msra.mxu0 0
    %420 = vmatprep.subr.bf16.mxu0 0
    %421 = vmatpush2.bf16.msra.mxu0 0
    %422 = vmatprep.subr.bf16.mxu0 0
    %423 = vmatpush2.bf16.msra.mxu0 0
    %424 = vmatprep.subr.bf16.mxu0 0
    %425 = vmatpush2.bf16.msra.mxu0 0
    %426 = vmatprep.subr.bf16.mxu0 0
    %427 = vmatpush2.bf16.msra.mxu0 0
    %428 = vmatprep.mubr.bf16.mxu0 0
    %429 = vmatmul.mubr.bf16.gmra.mxu0 %v394
    %v430 = vpop.f32.mrf.mxu0
    %v431 = vadd.f32 0.0, %v430
    %v432 = vpop.f32.mrf.mxu0
    %v433 = vpop.f32.mrf.mxu0
    %v434 = vpop.f32.mrf.mxu0
    %435 = vdwg.mxu0
    %v437 = vrot.slane %v431, 2
    %v439 = vrot.slane %v431, 6
    %v441 = vsel %vm374, %v437, %v439
    %v442 = vadd.f32 %v431, %v441
    %v443 = vmul.f32 %v442, 0.5
    %v444 = vpack.c.bf16 %v443, %v443
    %v449 = vunpack.c.l.b16 %v230
    %v450 = vunpack.c.l.b16 %v231
    %v451 = vunpack.c.l.b16 %v232
    %v452 = vunpack.c.l.b16 %v233
    %v453 = vpack.c.b16 %v450, %v449
    %v454 = vpack.c.b16 %v452, %v451
    %v458 = vsel %vm392, %v444, 0
    %460 = vmatprep.subr.bf16.mxu0 0
    %461 = vmatpush1.bf16.msra.mxu0 0
    %462 = vmatprep.subr.bf16.mxu0 0
    %463 = vmatpush1.bf16.msra.mxu0 0
    %464 = vmatprep.subr.bf16.mxu0 0
    %465 = vmatpush1.bf16.msra.mxu0 0
    %466 = vmatprep.subr.bf16.mxu0 0
    %467 = vmatpush1.bf16.msra.mxu0 0
    %468 = vmatprep.subr.bf16.mxu0 0
    %469 = vmatpush1.bf16.msra.mxu0 0
    %470 = vmatprep.subr.bf16.mxu0 0
    %471 = vmatpush1.bf16.msra.mxu0 0
    %472 = vmatprep.subr.bf16.mxu0 0
    %473 = vmatpush1.bf16.msra.mxu0 %v454
    %474 = vmatprep.subr.bf16.mxu0 0
    %475 = vmatpush1.bf16.msra.mxu0 %v453
    %476 = vmatprep.subr.bf16.mxu0 0
    %477 = vmatpush2.bf16.msra.mxu0 0
    %478 = vmatprep.subr.bf16.mxu0 0
    %479 = vmatpush2.bf16.msra.mxu0 0
    %480 = vmatprep.subr.bf16.mxu0 0
    %481 = vmatpush2.bf16.msra.mxu0 0
    %482 = vmatprep.subr.bf16.mxu0 0
    %483 = vmatpush2.bf16.msra.mxu0 0
    %484 = vmatprep.subr.bf16.mxu0 0
    %485 = vmatpush2.bf16.msra.mxu0 0
    %486 = vmatprep.subr.bf16.mxu0 0
    %487 = vmatpush2.bf16.msra.mxu0 0
    %488 = vmatprep.subr.bf16.mxu0 0
    %489 = vmatpush2.bf16.msra.mxu0 0
    %490 = vmatprep.subr.bf16.mxu0 0
    %491 = vmatpush2.bf16.msra.mxu0 0
    %492 = vmatprep.mubr.bf16.mxu0 0
    %493 = vmatmul.mubr.bf16.gmra.mxu0 %v458
    %v494 = vpop.f32.mrf.mxu0
    %v495 = vadd.f32 0.0, %v494
    %v496 = vpop.f32.mrf.mxu0
    %v497 = vpop.f32.mrf.mxu0
    %v498 = vpop.f32.mrf.mxu0
    %499 = vdwg.mxu0
    %v500 = vadd.f32 %v378, %v495
    %vm501 = vcmask 257024
    %v502 = vsel %vm501, %v500, 0.0
    %503 = vadd.xlane.f32.xlu0 %v502
    %v504 = vpop.xlane.xlu0 %503
    %v505 = vrcp.pop 32.0
    %v506 = vmul.f32 %v504, %v505
    %v507 = vsub.f32 %v500, %v506
    %v508 = vmul.f32 %v507, %v507
    %v509 = vsel %vm501, %v508, 0.0
    %510 = vadd.xlane.f32.xlu0 %v509
    %v511 = vpop.xlane.xlu0 %510
    %v512 = vmul.f32 %v511, %v505
    %v513 = vadd.f32 %v512, 1e-05
    %v514 = vrsqrt.pop %v513
    %v515 = vmul.f32 %v507, %v514
    %v517 = vlaneseq
    %v518 = vshrl.u32 %v517, 7
    %v519 = vsub.s32 0, %v518
    %v520 = vrot.slane %v248, %v519
    %v522 = vmul.f32 %v515, %v520
    %v524 = vlaneseq
    %v525 = vshrl.u32 %v524, 7
    %v526 = vsub.s32 0, %v525
    %v527 = vrot.slane %v251, %v526
    %v529 = vadd.f32 %v522, %v527
    %v530 = vpack.c.bf16 %v529, %v529
    %v535 = vunpack.c.l.b16 %v239
    %v536 = vunpack.c.l.b16 %v240
    %v537 = vunpack.c.l.b16 %v241
    %v538 = vunpack.c.l.b16 %v242
    %v539 = vpack.c.b16 %v536, %v535
    %v540 = vpack.c.b16 %v538, %v537
    %v544 = vsel %vm392, %v530, 0
    %546 = vmatprep.subr.bf16.mxu0 0
    %547 = vmatpush1.bf16.msra.mxu0 0
    %548 = vmatprep.subr.bf16.mxu0 0
    %549 = vmatpush1.bf16.msra.mxu0 0
    %550 = vmatprep.subr.bf16.mxu0 0
    %551 = vmatpush1.bf16.msra.mxu0 0
    %552 = vmatprep.subr.bf16.mxu0 0
    %553 = vmatpush1.bf16.msra.mxu0 0
    %554 = vmatprep.subr.bf16.mxu0 0
    %555 = vmatpush1.bf16.msra.mxu0 0
    %556 = vmatprep.subr.bf16.mxu0 0
    %557 = vmatpush1.bf16.msra.mxu0 0
    %558 = vmatprep.subr.bf16.mxu0 0
    %559 = vmatpush1.bf16.msra.mxu0 %v540
    %560 = vmatprep.subr.bf16.mxu0 0
    %561 = vmatpush1.bf16.msra.mxu0 %v539
    %562 = vmatprep.subr.bf16.mxu0 0
    %563 = vmatpush2.bf16.msra.mxu0 0
    %564 = vmatprep.subr.bf16.mxu0 0
    %565 = vmatpush2.bf16.msra.mxu0 0
    %566 = vmatprep.subr.bf16.mxu0 0
    %567 = vmatpush2.bf16.msra.mxu0 0
    %568 = vmatprep.subr.bf16.mxu0 0
    %569 = vmatpush2.bf16.msra.mxu0 0
    %570 = vmatprep.subr.bf16.mxu0 0
    %571 = vmatpush2.bf16.msra.mxu0 0
    %572 = vmatprep.subr.bf16.mxu0 0
    %573 = vmatpush2.bf16.msra.mxu0 0
    %574 = vmatprep.subr.bf16.mxu0 0
    %575 = vmatpush2.bf16.msra.mxu0 0
    %576 = vmatprep.subr.bf16.mxu0 0
    %577 = vmatpush2.bf16.msra.mxu0 0
    %578 = vmatprep.mubr.bf16.mxu0 0
    %579 = vmatmul.mubr.bf16.gmra.mxu0 %v544
    %v580 = vpop.f32.mrf.mxu0
    %v581 = vadd.f32 0.0, %v580
    %v582 = vpop.f32.mrf.mxu0
    %v583 = vpop.f32.mrf.mxu0
    %v584 = vpop.f32.mrf.mxu0
    %585 = vdwg.mxu0
    %v586 = vadd.f32 %v529, %v581
    %v587 = vsel %vm501, %v586, 0.0
    %588 = vadd.xlane.f32.xlu0 %v587
    %v589 = vpop.xlane.xlu0 %588
    %v590 = vmul.f32 %v589, %v505
    %v591 = vsub.f32 %v586, %v590
    %v592 = vmul.f32 %v591, %v591
    %v593 = vsel %vm501, %v592, 0.0
    %594 = vadd.xlane.f32.xlu0 %v593
    %v595 = vpop.xlane.xlu0 %594
    %v596 = vmul.f32 %v595, %v505
    %v597 = vadd.f32 %v596, 1e-05
    %v598 = vrsqrt.pop %v597
    %v599 = vmul.f32 %v591, %v598
    %v601 = vlaneseq
    %v602 = vshrl.u32 %v601, 7
    %v603 = vsub.s32 0, %v602
    %v604 = vrot.slane %v254, %v603
    %v606 = vmul.f32 %v599, %v604
    %v608 = vlaneseq
    %v609 = vshrl.u32 %v608, 7
    %v610 = vsub.s32 0, %v609
    %v611 = vrot.slane %v257, %v610
    %v613 = vadd.f32 %v606, %v611
    %v614 = vpack.c.bf16 %v613, %v613
    %v619 = vunpack.c.l.b16 %v226
    %v620 = vunpack.c.l.b16 %v227
    %v621 = vunpack.c.l.b16 %v228
    %v622 = vunpack.c.l.b16 %v229
    %v623 = vpack.c.b16 %v620, %v619
    %v624 = vpack.c.b16 %v622, %v621
    %v628 = vsel %vm392, %v614, 0
    %630 = vmatprep.subr.bf16.mxu0 0
    %631 = vmatpush1.bf16.msra.mxu0 0
    %632 = vmatprep.subr.bf16.mxu0 0
    %633 = vmatpush1.bf16.msra.mxu0 0
    %634 = vmatprep.subr.bf16.mxu0 0
    %635 = vmatpush1.bf16.msra.mxu0 0
    %636 = vmatprep.subr.bf16.mxu0 0
    %637 = vmatpush1.bf16.msra.mxu0 0
    %638 = vmatprep.subr.bf16.mxu0 0
    %639 = vmatpush1.bf16.msra.mxu0 0
    %640 = vmatprep.subr.bf16.mxu0 0
    %641 = vmatpush1.bf16.msra.mxu0 0
    %642 = vmatprep.subr.bf16.mxu0 0
    %643 = vmatpush1.bf16.msra.mxu0 %v624
    %644 = vmatprep.subr.bf16.mxu0 0
    %645 = vmatpush1.bf16.msra.mxu0 %v623
    %646 = vmatprep.subr.bf16.mxu0 0
    %647 = vmatpush2.bf16.msra.mxu0 0
    %648 = vmatprep.subr.bf16.mxu0 0
    %649 = vmatpush2.bf16.msra.mxu0 0
    %650 = vmatprep.subr.bf16.mxu0 0
    %651 = vmatpush2.bf16.msra.mxu0 0
    %652 = vmatprep.subr.bf16.mxu0 0
    %653 = vmatpush2.bf16.msra.mxu0 0
    %654 = vmatprep.subr.bf16.mxu0 0
    %655 = vmatpush2.bf16.msra.mxu0 0
    %656 = vmatprep.subr.bf16.mxu0 0
    %657 = vmatpush2.bf16.msra.mxu0 0
    %658 = vmatprep.subr.bf16.mxu0 0
    %659 = vmatpush2.bf16.msra.mxu0 0
    %660 = vmatprep.subr.bf16.mxu0 0
    %661 = vmatpush2.bf16.msra.mxu0 0
    %662 = vmatprep.mubr.bf16.mxu0 0
    %663 = vmatmul.mubr.bf16.gmra.mxu0 %v628
    %v664 = vpop.f32.mrf.mxu0
    %v665 = vadd.f32 0.0, %v664
    %v666 = vpop.f32.mrf.mxu0
    %v667 = vpop.f32.mrf.mxu0
    %v668 = vpop.f32.mrf.mxu0
    %669 = vdwg.mxu0
    %v671 = vrot.slane %v665, 2
    %v673 = vrot.slane %v665, 6
    %v675 = vsel %vm374, %v671, %v673
    %v676 = vadd.f32 %v665, %v675
    %v677 = vmul.f32 %v676, 0.5
    %v678 = vpack.c.bf16 %v677, %v677
    %v683 = vunpack.c.l.b16 %v235
    %v684 = vunpack.c.l.b16 %v236
    %v685 = vunpack.c.l.b16 %v237
    %v686 = vunpack.c.l.b16 %v238
    %v687 = vpack.c.b16 %v684, %v683
    %v688 = vpack.c.b16 %v686, %v685
    %v692 = vsel %vm392, %v678, 0
    %694 = vmatprep.subr.bf16.mxu0 0
    %695 = vmatpush1.bf16.msra.mxu0 0
    %696 = vmatprep.subr.bf16.mxu0 0
    %697 = vmatpush1.bf16.msra.mxu0 0
    %698 = vmatprep.subr.bf16.mxu0 0
    %699 = vmatpush1.bf16.msra.mxu0 0
    %700 = vmatprep.subr.bf16.mxu0 0
    %701 = vmatpush1.bf16.msra.mxu0 0
    %702 = vmatprep.subr.bf16.mxu0 0
    %703 = vmatpush1.bf16.msra.mxu0 0
    %704 = vmatprep.subr.bf16.mxu0 0
    %705 = vmatpush1.bf16.msra.mxu0 0
    %706 = vmatprep.subr.bf16.mxu0 0
    %707 = vmatpush1.bf16.msra.mxu0 %v688
    %708 = vmatprep.subr.bf16.mxu0 0
    %709 = vmatpush1.bf16.msra.mxu0 %v687
    %710 = vmatprep.subr.bf16.mxu0 0
    %711 = vmatpush2.bf16.msra.mxu0 0
    %712 = vmatprep.subr.bf16.mxu0 0
    %713 = vmatpush2.bf16.msra.mxu0 0
    %714 = vmatprep.subr.bf16.mxu0 0
    %715 = vmatpush2.bf16.msra.mxu0 0
    %716 = vmatprep.subr.bf16.mxu0 0
    %717 = vmatpush2.bf16.msra.mxu0 0
    %718 = vmatprep.subr.bf16.mxu0 0
    %719 = vmatpush2.bf16.msra.mxu0 0
    %720 = vmatprep.subr.bf16.mxu0 0
    %721 = vmatpush2.bf16.msra.mxu0 0
    %722 = vmatprep.subr.bf16.mxu0 0
    %723 = vmatpush2.bf16.msra.mxu0 0
    %724 = vmatprep.subr.bf16.mxu0 0
    %725 = vmatpush2.bf16.msra.mxu0 0
    %726 = vmatprep.mubr.bf16.mxu0 0
    %727 = vmatmul.mubr.bf16.gmra.mxu0 %v692
    %v728 = vpop.f32.mrf.mxu0
    %v729 = vadd.f32 0.0, %v728
    %v730 = vpop.f32.mrf.mxu0
    %v731 = vpop.f32.mrf.mxu0
    %v732 = vpop.f32.mrf.mxu0
    %733 = vdwg.mxu0
    %v734 = vadd.f32 %v613, %v729
    %v735 = vsel %vm501, %v734, 0.0
    %736 = vadd.xlane.f32.xlu0 %v735
    %v737 = vpop.xlane.xlu0 %736
    %v738 = vmul.f32 %v737, %v505
    %v739 = vsub.f32 %v734, %v738
    %v740 = vmul.f32 %v739, %v739
    %v741 = vsel %vm501, %v740, 0.0
    %742 = vadd.xlane.f32.xlu0 %v741
    %v743 = vpop.xlane.xlu0 %742
    %v744 = vmul.f32 %v743, %v505
    %v745 = vadd.f32 %v744, 1e-05
    %v746 = vrsqrt.pop %v745
    %v747 = vmul.f32 %v739, %v746
    %v749 = vlaneseq
    %v750 = vshrl.u32 %v749, 7
    %v751 = vsub.s32 0, %v750
    %v752 = vrot.slane %v250, %v751
    %v754 = vmul.f32 %v747, %v752
    %v756 = vlaneseq
    %v757 = vshrl.u32 %v756, 7
    %v758 = vsub.s32 0, %v757
    %v759 = vrot.slane %v253, %v758
    %v761 = vadd.f32 %v754, %v759
    %v762 = vpack.c.bf16 %v761, %v761
    %v767 = vunpack.c.l.b16 %v244
    %v768 = vunpack.c.l.b16 %v245
    %v769 = vunpack.c.l.b16 %v246
    %v770 = vunpack.c.l.b16 %v247
    %v771 = vpack.c.b16 %v768, %v767
    %v772 = vpack.c.b16 %v770, %v769
    %v776 = vsel %vm392, %v762, 0
    %778 = vmatprep.subr.bf16.mxu0 0
    %779 = vmatpush1.bf16.msra.mxu0 0
    %780 = vmatprep.subr.bf16.mxu0 0
    %781 = vmatpush1.bf16.msra.mxu0 0
    %782 = vmatprep.subr.bf16.mxu0 0
    %783 = vmatpush1.bf16.msra.mxu0 0
    %784 = vmatprep.subr.bf16.mxu0 0
    %785 = vmatpush1.bf16.msra.mxu0 0
    %786 = vmatprep.subr.bf16.mxu0 0
    %787 = vmatpush1.bf16.msra.mxu0 0
    %788 = vmatprep.subr.bf16.mxu0 0
    %789 = vmatpush1.bf16.msra.mxu0 0
    %790 = vmatprep.subr.bf16.mxu0 0
    %791 = vmatpush1.bf16.msra.mxu0 %v772
    %792 = vmatprep.subr.bf16.mxu0 0
    %793 = vmatpush1.bf16.msra.mxu0 %v771
    %794 = vmatprep.subr.bf16.mxu0 0
    %795 = vmatpush2.bf16.msra.mxu0 0
    %796 = vmatprep.subr.bf16.mxu0 0
    %797 = vmatpush2.bf16.msra.mxu0 0
    %798 = vmatprep.subr.bf16.mxu0 0
    %799 = vmatpush2.bf16.msra.mxu0 0
    %800 = vmatprep.subr.bf16.mxu0 0
    %801 = vmatpush2.bf16.msra.mxu0 0
    %802 = vmatprep.subr.bf16.mxu0 0
    %803 = vmatpush2.bf16.msra.mxu0 0
    %804 = vmatprep.subr.bf16.mxu0 0
    %805 = vmatpush2.bf16.msra.mxu0 0
    %806 = vmatprep.subr.bf16.mxu0 0
    %807 = vmatpush2.bf16.msra.mxu0 0
    %808 = vmatprep.subr.bf16.mxu0 0
    %809 = vmatpush2.bf16.msra.mxu0 0
    %810 = vmatprep.mubr.bf16.mxu0 0
    %811 = vmatmul.mubr.bf16.gmra.mxu0 %v776
    %v812 = vpop.f32.mrf.mxu0
    %v813 = vadd.f32 0.0, %v812
    %v814 = vpop.f32.mrf.mxu0
    %v815 = vpop.f32.mrf.mxu0
    %v816 = vpop.f32.mrf.mxu0
    %817 = vdwg.mxu0
    %v818 = vadd.f32 %v761, %v813
    %v819 = vsel %vm501, %v818, 0.0
    %820 = vadd.xlane.f32.xlu0 %v819
    %v821 = vpop.xlane.xlu0 %820
    %v822 = vmul.f32 %v821, %v505
    %v823 = vsub.f32 %v818, %v822
    %v824 = vmul.f32 %v823, %v823
    %v825 = vsel %vm501, %v824, 0.0
    %826 = vadd.xlane.f32.xlu0 %v825
    %v827 = vpop.xlane.xlu0 %826
    %v828 = vmul.f32 %v827, %v505
    %v829 = vadd.f32 %v828, 1e-05
    %v830 = vrsqrt.pop %v829
    %v831 = vmul.f32 %v823, %v830
    %v833 = vlaneseq
    %v834 = vshrl.u32 %v833, 7
    %v835 = vsub.s32 0, %v834
    %v836 = vrot.slane %v256, %v835
    %v838 = vmul.f32 %v831, %v836
    %v840 = vlaneseq
    %v841 = vshrl.u32 %v840, 7
    %v842 = vsub.s32 0, %v841
    %v843 = vrot.slane %v259, %v842
    %v845 = vadd.f32 %v838, %v843
    %v846 = vpack.c.bf16 %v845, %v845
    %v851 = vunpack.c.l.b16 %v203
    %v852 = vunpack.c.l.b16 %v204
    %v853 = vunpack.c.l.b16 %v205
    %v854 = vunpack.c.l.b16 %v206
    %v855 = vpack.c.b16 %v852, %v851
    %v856 = vpack.c.b16 %v854, %v853
    %v860 = vsel %vm392, %v846, 0
    %862 = vmatprep.subr.bf16.mxu0 0
    %863 = vmatpush1.bf16.msra.mxu0 0
    %864 = vmatprep.subr.bf16.mxu0 0
    %865 = vmatpush1.bf16.msra.mxu0 0
    %866 = vmatprep.subr.bf16.mxu0 0
    %867 = vmatpush1.bf16.msra.mxu0 0
    %868 = vmatprep.subr.bf16.mxu0 0
    %869 = vmatpush1.bf16.msra.mxu0 0
    %870 = vmatprep.subr.bf16.mxu0 0
    %871 = vmatpush1.bf16.msra.mxu0 0
    %872 = vmatprep.subr.bf16.mxu0 0
    %873 = vmatpush1.bf16.msra.mxu0 0
    %874 = vmatprep.subr.bf16.mxu0 0
    %875 = vmatpush1.bf16.msra.mxu0 %v856
    %876 = vmatprep.subr.bf16.mxu0 0
    %877 = vmatpush1.bf16.msra.mxu0 %v855
    %878 = vmatprep.subr.bf16.mxu0 0
    %879 = vmatpush2.bf16.msra.mxu0 0
    %880 = vmatprep.subr.bf16.mxu0 0
    %881 = vmatpush2.bf16.msra.mxu0 0
    %882 = vmatprep.subr.bf16.mxu0 0
    %883 = vmatpush2.bf16.msra.mxu0 0
    %884 = vmatprep.subr.bf16.mxu0 0
    %885 = vmatpush2.bf16.msra.mxu0 0
    %886 = vmatprep.subr.bf16.mxu0 0
    %887 = vmatpush2.bf16.msra.mxu0 0
    %888 = vmatprep.subr.bf16.mxu0 0
    %889 = vmatpush2.bf16.msra.mxu0 0
    %890 = vmatprep.subr.bf16.mxu0 0
    %891 = vmatpush2.bf16.msra.mxu0 0
    %892 = vmatprep.subr.bf16.mxu0 0
    %893 = vmatpush2.bf16.msra.mxu0 0
    %894 = vmatprep.mubr.bf16.mxu0 0
    %895 = vmatmul.mubr.bf16.gmra.mxu0 %v860
    %v896 = vpop.f32.mrf.mxu0
    %v897 = vadd.f32 0.0, %v896
    %v898 = vpop.f32.mrf.mxu0
    %v899 = vpop.f32.mrf.mxu0
    %v900 = vpop.f32.mrf.mxu0
    %901 = vdwg.mxu0
    %v902 = vsub.f32 0.0, %v897
    %v903 = vmul.f32 %v902, 1.442695
    %v904 = vpow.pop %v903
    %v905 = vadd.f32 %v904, 1.0
    %v906 = vrcp.pop %v905
    %v907 = vmul.f32 1.0, %v906
    %v908 = vtanh.pop %v897
    %v909 = vpack.c.bf16 %v908, %v908
    %v911 = vrot.slane %v909, 1
    %912 = vrot.lane.b32.xlu0 %v911, 124
    %v913 = vpop.permute.xlu0 %912
    %v915 = vsel %vm319, %v913, 0
    %917 = vmatprep.subr.bf16.mxu0 0
    %918 = vmatpush1.bf16.msra.mxu0 0
    %919 = vmatprep.subr.bf16.mxu0 0
    %920 = vmatpush1.bf16.msra.mxu0 0
    %921 = vmatprep.subr.bf16.mxu0 0
    %922 = vmatpush1.bf16.msra.mxu0 0
    %923 = vmatprep.subr.bf16.mxu0 0
    %924 = vmatpush1.bf16.msra.mxu0 0
    %925 = vmatprep.subr.bf16.mxu0 0
    %926 = vmatpush1.bf16.msra.mxu0 0
    %927 = vmatprep.subr.bf16.mxu0 0
    %928 = vmatpush1.bf16.msra.mxu0 0
    %929 = vmatprep.subr.bf16.mxu0 0
    %930 = vmatpush1.bf16.msra.mxu0 0
    %931 = vmatprep.subr.bf16.mxu0 0
    %932 = vmatpush1.bf16.msra.mxu0 %v317
    %933 = vmatprep.subr.bf16.mxu0 0
    %934 = vmatpush2.bf16.msra.mxu0 0
    %935 = vmatprep.subr.bf16.mxu0 0
    %936 = vmatpush2.bf16.msra.mxu0 0
    %937 = vmatprep.subr.bf16.mxu0 0
    %938 = vmatpush2.bf16.msra.mxu0 0
    %939 = vmatprep.subr.bf16.mxu0 0
    %940 = vmatpush2.bf16.msra.mxu0 0
    %941 = vmatprep.subr.bf16.mxu0 0
    %942 = vmatpush2.bf16.msra.mxu0 0
    %943 = vmatprep.subr.bf16.mxu0 0
    %944 = vmatpush2.bf16.msra.mxu0 0
    %945 = vmatprep.subr.bf16.mxu0 0
    %946 = vmatpush2.bf16.msra.mxu0 0
    %947 = vmatprep.subr.bf16.mxu0 0
    %948 = vmatpush2.bf16.msra.mxu0 0
    %949 = vmatprep.mubr.bf16.mxu0 0
    %950 = vmatmul.mubr.bf16.gmra.mxu0 %v915
    %v951 = vpop.f32.mrf.mxu0
    %v952 = vadd.f32 0.0, %v951
    %v953 = vpop.f32.mrf.mxu0
    %v954 = vpop.f32.mrf.mxu0
    %v955 = vpop.f32.mrf.mxu0
    %956 = vdwg.mxu0
    %v957 = vtanh.pop %v952
    %v958 = vrot.slane %v310, 1
    %v961 = vrot.slane %v957, 7
    %v963 = vsel %vm372, %v957, %v958
    %v964 = vsel %vm374, %v963, %v961
    %v965 = vsel %vm376, %v964, %v310
    %v966 = vadd.f32 %v965, %v211
    %v967 = vpack.c.bf16 %v966, %v966
    %v969 = vsel %vm392, %v967, 0
    %971 = vmatprep.subr.bf16.mxu0 0
    %972 = vmatpush1.bf16.msra.mxu0 0
    %973 = vmatprep.subr.bf16.mxu0 0
    %974 = vmatpush1.bf16.msra.mxu0 0
    %975 = vmatprep.subr.bf16.mxu0 0
    %976 = vmatpush1.bf16.msra.mxu0 0
    %977 = vmatprep.subr.bf16.mxu0 0
    %978 = vmatpush1.bf16.msra.mxu0 0
    %979 = vmatprep.subr.bf16.mxu0 0
    %980 = vmatpush1.bf16.msra.mxu0 0
    %981 = vmatprep.subr.bf16.mxu0 0
    %982 = vmatpush1.bf16.msra.mxu0 0
    %983 = vmatprep.subr.bf16.mxu0 0
    %984 = vmatpush1.bf16.msra.mxu0 %v389
    %985 = vmatprep.subr.bf16.mxu0 0
    %986 = vmatpush1.bf16.msra.mxu0 %v388
    %987 = vmatprep.subr.bf16.mxu0 0
    %988 = vmatpush2.bf16.msra.mxu0 0
    %989 = vmatprep.subr.bf16.mxu0 0
    %990 = vmatpush2.bf16.msra.mxu0 0
    %991 = vmatprep.subr.bf16.mxu0 0
    %992 = vmatpush2.bf16.msra.mxu0 0
    %993 = vmatprep.subr.bf16.mxu0 0
    %994 = vmatpush2.bf16.msra.mxu0 0
    %995 = vmatprep.subr.bf16.mxu0 0
    %996 = vmatpush2.bf16.msra.mxu0 0
    %997 = vmatprep.subr.bf16.mxu0 0
    %998 = vmatpush2.bf16.msra.mxu0 0
    %999 = vmatprep.subr.bf16.mxu0 0
    %1000 = vmatpush2.bf16.msra.mxu0 0
    %1001 = vmatprep.subr.bf16.mxu0 0
    %1002 = vmatpush2.bf16.msra.mxu0 0
    %1003 = vmatprep.mubr.bf16.mxu0 0
    %1004 = vmatmul.mubr.bf16.gmra.mxu0 %v969
    %v1005 = vpop.f32.mrf.mxu0
    %v1006 = vadd.f32 0.0, %v1005
    %v1007 = vpop.f32.mrf.mxu0
    %v1008 = vpop.f32.mrf.mxu0
    %v1009 = vpop.f32.mrf.mxu0
    %1010 = vdwg.mxu0
    %v1012 = vrot.slane %v1006, 2
    %v1014 = vrot.slane %v1006, 6
    %v1016 = vsel %vm374, %v1012, %v1014
    %v1021 = vunpack.c.l.b16 %v212
    %v1022 = vunpack.c.l.b16 %v213
    %v1023 = vunpack.c.l.b16 %v214
    %v1024 = vunpack.c.l.b16 %v215
    %v1025 = vpack.c.b16 %v1022, %v1021
    %v1026 = vpack.c.b16 %v1024, %v1023
    %1029 = vmatprep.subr.bf16.mxu0 0
    %1030 = vmatpush1.bf16.msra.mxu0 0
    %1031 = vmatprep.subr.bf16.mxu0 0
    %1032 = vmatpush1.bf16.msra.mxu0 0
    %1033 = vmatprep.subr.bf16.mxu0 0
    %1034 = vmatpush1.bf16.msra.mxu0 0
    %1035 = vmatprep.subr.bf16.mxu0 0
    %1036 = vmatpush1.bf16.msra.mxu0 0
    %1037 = vmatprep.subr.bf16.mxu0 0
    %1038 = vmatpush1.bf16.msra.mxu0 0
    %1039 = vmatprep.subr.bf16.mxu0 0
    %1040 = vmatpush1.bf16.msra.mxu0 0
    %1041 = vmatprep.subr.bf16.mxu0 0
    %1042 = vmatpush1.bf16.msra.mxu0 %v1026
    %1043 = vmatprep.subr.bf16.mxu0 0
    %1044 = vmatpush1.bf16.msra.mxu0 %v1025
    %1045 = vmatprep.subr.bf16.mxu0 0
    %1046 = vmatpush2.bf16.msra.mxu0 0
    %1047 = vmatprep.subr.bf16.mxu0 0
    %1048 = vmatpush2.bf16.msra.mxu0 0
    %1049 = vmatprep.subr.bf16.mxu0 0
    %1050 = vmatpush2.bf16.msra.mxu0 0
    %1051 = vmatprep.subr.bf16.mxu0 0
    %1052 = vmatpush2.bf16.msra.mxu0 0
    %1053 = vmatprep.subr.bf16.mxu0 0
    %1054 = vmatpush2.bf16.msra.mxu0 0
    %1055 = vmatprep.subr.bf16.mxu0 0
    %1056 = vmatpush2.bf16.msra.mxu0 0
    %1057 = vmatprep.subr.bf16.mxu0 0
    %1058 = vmatpush2.bf16.msra.mxu0 0
    %1059 = vmatprep.subr.bf16.mxu0 0
    %1060 = vmatpush2.bf16.msra.mxu0 0
    %1061 = vmatprep.mubr.bf16.mxu0 0
    %1062 = vmatmul.mubr.bf16.gmra.mxu0 %v628
    %v1063 = vpop.f32.mrf.mxu0
    %v1064 = vadd.f32 0.0, %v1063
    %v1065 = vpop.f32.mrf.mxu0
    %v1066 = vpop.f32.mrf.mxu0
    %v1067 = vpop.f32.mrf.mxu0
    %1068 = vdwg.mxu0
    %v1070 = vrot.slane %v1064, 2
    %v1072 = vrot.slane %v1064, 6
    %v1074 = vsel %vm374, %v1070, %v1072
    %v1075 = vsub.f32 %v1074, %v1064
    %1077 = vrot.lane.b32.xlu0 %v1075, 96
    %v1078 = vpop.permute.xlu0 %1077
    %v1080 = vmul.f32 %v1064, %v1078
    %v1081 = vpack.c.bf16 %v1080, %v1080
    %v1086 = vunpack.c.l.b16 %v207
    %v1087 = vunpack.c.l.b16 %v208
    %v1088 = vunpack.c.l.b16 %v209
    %v1089 = vunpack.c.l.b16 %v210
    %v1090 = vpack.c.b16 %v1087, %v1086
    %v1091 = vpack.c.b16 %v1089, %v1088
    %v1095 = vsel %vm392, %v1081, 0
    %1097 = vmatprep.subr.bf16.mxu0 0
    %1098 = vmatpush1.bf16.msra.mxu0 0
    %1099 = vmatprep.subr.bf16.mxu0 0
    %1100 = vmatpush1.bf16.msra.mxu0 0
    %1101 = vmatprep.subr.bf16.mxu0 0
    %1102 = vmatpush1.bf16.msra.mxu0 0
    %1103 = vmatprep.subr.bf16.mxu0 0
    %1104 = vmatpush1.bf16.msra.mxu0 0
    %1105 = vmatprep.subr.bf16.mxu0 0
    %1106 = vmatpush1.bf16.msra.mxu0 0
    %1107 = vmatprep.subr.bf16.mxu0 0
    %1108 = vmatpush1.bf16.msra.mxu0 0
    %1109 = vmatprep.subr.bf16.mxu0 0
    %1110 = vmatpush1.bf16.msra.mxu0 %v1091
    %1111 = vmatprep.subr.bf16.mxu0 0
    %1112 = vmatpush1.bf16.msra.mxu0 %v1090
    %1113 = vmatprep.subr.bf16.mxu0 0
    %1114 = vmatpush2.bf16.msra.mxu0 0
    %1115 = vmatprep.subr.bf16.mxu0 0
    %1116 = vmatpush2.bf16.msra.mxu0 0
    %1117 = vmatprep.subr.bf16.mxu0 0
    %1118 = vmatpush2.bf16.msra.mxu0 0
    %1119 = vmatprep.subr.bf16.mxu0 0
    %1120 = vmatpush2.bf16.msra.mxu0 0
    %1121 = vmatprep.subr.bf16.mxu0 0
    %1122 = vmatpush2.bf16.msra.mxu0 0
    %1123 = vmatprep.subr.bf16.mxu0 0
    %1124 = vmatpush2.bf16.msra.mxu0 0
    %1125 = vmatprep.subr.bf16.mxu0 0
    %1126 = vmatpush2.bf16.msra.mxu0 0
    %1127 = vmatprep.subr.bf16.mxu0 0
    %1128 = vmatpush2.bf16.msra.mxu0 0
    %1129 = vmatprep.mubr.bf16.mxu0 0
    %1130 = vmatmul.mubr.bf16.gmra.mxu0 %v1095
    %v1131 = vpop.f32.mrf.mxu0
    %v1132 = vadd.f32 0.0, %v1131
    %v1133 = vpop.f32.mrf.mxu0
    %v1134 = vpop.f32.mrf.mxu0
    %v1135 = vpop.f32.mrf.mxu0
    %1136 = vdwg.mxu0
    %v1137 = vmul.f32 %v1132, 0.35355338
    %v1138 = vsub.f32 0.0, %v1137
    %v1139 = vmul.f32 %v1138, 1.442695
    %v1140 = vpow.pop %v1139
    %v1141 = vadd.f32 %v1140, 1.0
    %v1142 = vrcp.pop %v1141
    %v1143 = vsub.f32 %v1016, %v1006
    %v1144 = vmul.f32 %v1142, %v1143
    %v1145 = vadd.f32 %v1006, %v1144
    %v1146 = vpack.c.bf16 %v1145, %v1145
    %v1148 = vsel %vm392, %v1146, 0
    %1150 = vmatprep.subr.bf16.mxu0 0
    %1151 = vmatpush1.bf16.msra.mxu0 0
    %1152 = vmatprep.subr.bf16.mxu0 0
    %1153 = vmatpush1.bf16.msra.mxu0 0
    %1154 = vmatprep.subr.bf16.mxu0 0
    %1155 = vmatpush1.bf16.msra.mxu0 0
    %1156 = vmatprep.subr.bf16.mxu0 0
    %1157 = vmatpush1.bf16.msra.mxu0 0
    %1158 = vmatprep.subr.bf16.mxu0 0
    %1159 = vmatpush1.bf16.msra.mxu0 0
    %1160 = vmatprep.subr.bf16.mxu0 0
    %1161 = vmatpush1.bf16.msra.mxu0 0
    %1162 = vmatprep.subr.bf16.mxu0 0
    %1163 = vmatpush1.bf16.msra.mxu0 %v454
    %1164 = vmatprep.subr.bf16.mxu0 0
    %1165 = vmatpush1.bf16.msra.mxu0 %v453
    %1166 = vmatprep.subr.bf16.mxu0 0
    %1167 = vmatpush2.bf16.msra.mxu0 0
    %1168 = vmatprep.subr.bf16.mxu0 0
    %1169 = vmatpush2.bf16.msra.mxu0 0
    %1170 = vmatprep.subr.bf16.mxu0 0
    %1171 = vmatpush2.bf16.msra.mxu0 0
    %1172 = vmatprep.subr.bf16.mxu0 0
    %1173 = vmatpush2.bf16.msra.mxu0 0
    %1174 = vmatprep.subr.bf16.mxu0 0
    %1175 = vmatpush2.bf16.msra.mxu0 0
    %1176 = vmatprep.subr.bf16.mxu0 0
    %1177 = vmatpush2.bf16.msra.mxu0 0
    %1178 = vmatprep.subr.bf16.mxu0 0
    %1179 = vmatpush2.bf16.msra.mxu0 0
    %1180 = vmatprep.subr.bf16.mxu0 0
    %1181 = vmatpush2.bf16.msra.mxu0 0
    %1182 = vmatprep.mubr.bf16.mxu0 0
    %1183 = vmatmul.mubr.bf16.gmra.mxu0 %v1148
    %v1184 = vpop.f32.mrf.mxu0
    %v1185 = vadd.f32 0.0, %v1184
    %v1186 = vpop.f32.mrf.mxu0
    %v1187 = vpop.f32.mrf.mxu0
    %v1188 = vpop.f32.mrf.mxu0
    %1189 = vdwg.mxu0
    %v1190 = vadd.f32 %v966, %v1185
    %v1191 = vsel %vm501, %v1190, 0.0
    %1192 = vadd.xlane.f32.xlu0 %v1191
    %v1193 = vpop.xlane.xlu0 %1192
    %v1194 = vmul.f32 %v1193, %v505
    %v1195 = vsub.f32 %v1190, %v1194
    %v1196 = vmul.f32 %v1195, %v1195
    %v1197 = vsel %vm501, %v1196, 0.0
    %1198 = vadd.xlane.f32.xlu0 %v1197
    %v1199 = vpop.xlane.xlu0 %1198
    %v1200 = vmul.f32 %v1199, %v505
    %v1201 = vadd.f32 %v1200, 1e-05
    %v1202 = vrsqrt.pop %v1201
    %v1203 = vmul.f32 %v1195, %v1202
    %v1204 = vmul.f32 %v1203, %v520
    %v1205 = vadd.f32 %v1204, %v527
    %v1206 = vpack.c.bf16 %v1205, %v1205
    %v1208 = vsel %vm392, %v1206, 0
    %1210 = vmatprep.subr.bf16.mxu0 0
    %1211 = vmatpush1.bf16.msra.mxu0 0
    %1212 = vmatprep.subr.bf16.mxu0 0
    %1213 = vmatpush1.bf16.msra.mxu0 0
    %1214 = vmatprep.subr.bf16.mxu0 0
    %1215 = vmatpush1.bf16.msra.mxu0 0
    %1216 = vmatprep.subr.bf16.mxu0 0
    %1217 = vmatpush1.bf16.msra.mxu0 0
    %1218 = vmatprep.subr.bf16.mxu0 0
    %1219 = vmatpush1.bf16.msra.mxu0 0
    %1220 = vmatprep.subr.bf16.mxu0 0
    %1221 = vmatpush1.bf16.msra.mxu0 0
    %1222 = vmatprep.subr.bf16.mxu0 0
    %1223 = vmatpush1.bf16.msra.mxu0 %v540
    %1224 = vmatprep.subr.bf16.mxu0 0
    %1225 = vmatpush1.bf16.msra.mxu0 %v539
    %1226 = vmatprep.subr.bf16.mxu0 0
    %1227 = vmatpush2.bf16.msra.mxu0 0
    %1228 = vmatprep.subr.bf16.mxu0 0
    %1229 = vmatpush2.bf16.msra.mxu0 0
    %1230 = vmatprep.subr.bf16.mxu0 0
    %1231 = vmatpush2.bf16.msra.mxu0 0
    %1232 = vmatprep.subr.bf16.mxu0 0
    %1233 = vmatpush2.bf16.msra.mxu0 0
    %1234 = vmatprep.subr.bf16.mxu0 0
    %1235 = vmatpush2.bf16.msra.mxu0 0
    %1236 = vmatprep.subr.bf16.mxu0 0
    %1237 = vmatpush2.bf16.msra.mxu0 0
    %1238 = vmatprep.subr.bf16.mxu0 0
    %1239 = vmatpush2.bf16.msra.mxu0 0
    %1240 = vmatprep.subr.bf16.mxu0 0
    %1241 = vmatpush2.bf16.msra.mxu0 0
    %1242 = vmatprep.mubr.bf16.mxu0 0
    %1243 = vmatmul.mubr.bf16.gmra.mxu0 %v1208
    %v1244 = vpop.f32.mrf.mxu0
    %v1245 = vadd.f32 0.0, %v1244
    %v1246 = vpop.f32.mrf.mxu0
    %v1247 = vpop.f32.mrf.mxu0
    %v1248 = vpop.f32.mrf.mxu0
    %1249 = vdwg.mxu0
    %v1250 = vadd.f32 %v1205, %v1245
    %v1251 = vsel %vm501, %v1250, 0.0
    %1252 = vadd.xlane.f32.xlu0 %v1251
    %v1253 = vpop.xlane.xlu0 %1252
    %v1254 = vmul.f32 %v1253, %v505
    %v1255 = vsub.f32 %v1250, %v1254
    %v1256 = vmul.f32 %v1255, %v1255
    %v1257 = vsel %vm501, %v1256, 0.0
    %1258 = vadd.xlane.f32.xlu0 %v1257
    %v1259 = vpop.xlane.xlu0 %1258
    %v1260 = vmul.f32 %v1259, %v505
    %v1261 = vadd.f32 %v1260, 1e-05
    %v1262 = vrsqrt.pop %v1261
    %v1263 = vmul.f32 %v1255, %v1262
    %v1264 = vmul.f32 %v1263, %v604
    %v1265 = vadd.f32 %v1264, %v611
    %v1266 = vpack.c.bf16 %v1265, %v1265
    %v1268 = vsel %vm392, %v1266, 0
    %1270 = vmatprep.subr.bf16.mxu0 0
    %1271 = vmatpush1.bf16.msra.mxu0 0
    %1272 = vmatprep.subr.bf16.mxu0 0
    %1273 = vmatpush1.bf16.msra.mxu0 0
    %1274 = vmatprep.subr.bf16.mxu0 0
    %1275 = vmatpush1.bf16.msra.mxu0 0
    %1276 = vmatprep.subr.bf16.mxu0 0
    %1277 = vmatpush1.bf16.msra.mxu0 0
    %1278 = vmatprep.subr.bf16.mxu0 0
    %1279 = vmatpush1.bf16.msra.mxu0 0
    %1280 = vmatprep.subr.bf16.mxu0 0
    %1281 = vmatpush1.bf16.msra.mxu0 0
    %1282 = vmatprep.subr.bf16.mxu0 0
    %1283 = vmatpush1.bf16.msra.mxu0 %v624
    %1284 = vmatprep.subr.bf16.mxu0 0
    %1285 = vmatpush1.bf16.msra.mxu0 %v623
    %1286 = vmatprep.subr.bf16.mxu0 0
    %1287 = vmatpush2.bf16.msra.mxu0 0
    %1288 = vmatprep.subr.bf16.mxu0 0
    %1289 = vmatpush2.bf16.msra.mxu0 0
    %1290 = vmatprep.subr.bf16.mxu0 0
    %1291 = vmatpush2.bf16.msra.mxu0 0
    %1292 = vmatprep.subr.bf16.mxu0 0
    %1293 = vmatpush2.bf16.msra.mxu0 0
    %1294 = vmatprep.subr.bf16.mxu0 0
    %1295 = vmatpush2.bf16.msra.mxu0 0
    %1296 = vmatprep.subr.bf16.mxu0 0
    %1297 = vmatpush2.bf16.msra.mxu0 0
    %1298 = vmatprep.subr.bf16.mxu0 0
    %1299 = vmatpush2.bf16.msra.mxu0 0
    %1300 = vmatprep.subr.bf16.mxu0 0
    %1301 = vmatpush2.bf16.msra.mxu0 0
    %1302 = vmatprep.mubr.bf16.mxu0 0
    %1303 = vmatmul.mubr.bf16.gmra.mxu0 %v1268
    %v1304 = vpop.f32.mrf.mxu0
    %v1305 = vadd.f32 0.0, %v1304
    %v1306 = vpop.f32.mrf.mxu0
    %v1307 = vpop.f32.mrf.mxu0
    %v1308 = vpop.f32.mrf.mxu0
    %1309 = vdwg.mxu0
    %v1311 = vrot.slane %v1305, 2
    %v1313 = vrot.slane %v1305, 6
    %v1315 = vsel %vm374, %v1311, %v1313
    %v1320 = vunpack.c.l.b16 %v217
    %v1321 = vunpack.c.l.b16 %v218
    %v1322 = vunpack.c.l.b16 %v219
    %v1323 = vunpack.c.l.b16 %v220
    %v1324 = vpack.c.b16 %v1321, %v1320
    %v1325 = vpack.c.b16 %v1323, %v1322
    %1328 = vmatprep.subr.bf16.mxu0 0
    %1329 = vmatpush1.bf16.msra.mxu0 0
    %1330 = vmatprep.subr.bf16.mxu0 0
    %1331 = vmatpush1.bf16.msra.mxu0 0
    %1332 = vmatprep.subr.bf16.mxu0 0
    %1333 = vmatpush1.bf16.msra.mxu0 0
    %1334 = vmatprep.subr.bf16.mxu0 0
    %1335 = vmatpush1.bf16.msra.mxu0 0
    %1336 = vmatprep.subr.bf16.mxu0 0
    %1337 = vmatpush1.bf16.msra.mxu0 0
    %1338 = vmatprep.subr.bf16.mxu0 0
    %1339 = vmatpush1.bf16.msra.mxu0 0
    %1340 = vmatprep.subr.bf16.mxu0 0
    %1341 = vmatpush1.bf16.msra.mxu0 %v1325
    %1342 = vmatprep.subr.bf16.mxu0 0
    %1343 = vmatpush1.bf16.msra.mxu0 %v1324
    %1344 = vmatprep.subr.bf16.mxu0 0
    %1345 = vmatpush2.bf16.msra.mxu0 0
    %1346 = vmatprep.subr.bf16.mxu0 0
    %1347 = vmatpush2.bf16.msra.mxu0 0
    %1348 = vmatprep.subr.bf16.mxu0 0
    %1349 = vmatpush2.bf16.msra.mxu0 0
    %1350 = vmatprep.subr.bf16.mxu0 0
    %1351 = vmatpush2.bf16.msra.mxu0 0
    %1352 = vmatprep.subr.bf16.mxu0 0
    %1353 = vmatpush2.bf16.msra.mxu0 0
    %1354 = vmatprep.subr.bf16.mxu0 0
    %1355 = vmatpush2.bf16.msra.mxu0 0
    %1356 = vmatprep.subr.bf16.mxu0 0
    %1357 = vmatpush2.bf16.msra.mxu0 0
    %1358 = vmatprep.subr.bf16.mxu0 0
    %1359 = vmatpush2.bf16.msra.mxu0 0
    %1360 = vmatprep.mubr.bf16.mxu0 0
    %1361 = vmatmul.mubr.bf16.gmra.mxu0 %v860
    %v1362 = vpop.f32.mrf.mxu0
    %v1363 = vadd.f32 0.0, %v1362
    %v1364 = vpop.f32.mrf.mxu0
    %v1365 = vpop.f32.mrf.mxu0
    %v1366 = vpop.f32.mrf.mxu0
    %1367 = vdwg.mxu0
    %v1369 = vrot.slane %v1363, 2
    %v1371 = vrot.slane %v1363, 6
    %v1373 = vsel %vm374, %v1369, %v1371
    %v1374 = vsub.f32 %v1373, %v1363
    %1376 = vrot.lane.b32.xlu0 %v1374, 96
    %v1377 = vpop.permute.xlu0 %1376
    %v1379 = vmul.f32 %v1363, %v1377
    %v1380 = vpack.c.bf16 %v1379, %v1379
    %v1382 = vsel %vm392, %v1380, 0
    %1384 = vmatprep.subr.bf16.mxu0 0
    %1385 = vmatpush1.bf16.msra.mxu0 0
    %1386 = vmatprep.subr.bf16.mxu0 0
    %1387 = vmatpush1.bf16.msra.mxu0 0
    %1388 = vmatprep.subr.bf16.mxu0 0
    %1389 = vmatpush1.bf16.msra.mxu0 0
    %1390 = vmatprep.subr.bf16.mxu0 0
    %1391 = vmatpush1.bf16.msra.mxu0 0
    %1392 = vmatprep.subr.bf16.mxu0 0
    %1393 = vmatpush1.bf16.msra.mxu0 0
    %1394 = vmatprep.subr.bf16.mxu0 0
    %1395 = vmatpush1.bf16.msra.mxu0 0
    %1396 = vmatprep.subr.bf16.mxu0 0
    %1397 = vmatpush1.bf16.msra.mxu0 %v1091
    %1398 = vmatprep.subr.bf16.mxu0 0
    %1399 = vmatpush1.bf16.msra.mxu0 %v1090
    %1400 = vmatprep.subr.bf16.mxu0 0
    %1401 = vmatpush2.bf16.msra.mxu0 0
    %1402 = vmatprep.subr.bf16.mxu0 0
    %1403 = vmatpush2.bf16.msra.mxu0 0
    %1404 = vmatprep.subr.bf16.mxu0 0
    %1405 = vmatpush2.bf16.msra.mxu0 0
    %1406 = vmatprep.subr.bf16.mxu0 0
    %1407 = vmatpush2.bf16.msra.mxu0 0
    %1408 = vmatprep.subr.bf16.mxu0 0
    %1409 = vmatpush2.bf16.msra.mxu0 0
    %1410 = vmatprep.subr.bf16.mxu0 0
    %1411 = vmatpush2.bf16.msra.mxu0 0
    %1412 = vmatprep.subr.bf16.mxu0 0
    %1413 = vmatpush2.bf16.msra.mxu0 0
    %1414 = vmatprep.subr.bf16.mxu0 0
    %1415 = vmatpush2.bf16.msra.mxu0 0
    %1416 = vmatprep.mubr.bf16.mxu0 0
    %1417 = vmatmul.mubr.bf16.gmra.mxu0 %v1382
    %v1418 = vpop.f32.mrf.mxu0
    %v1419 = vadd.f32 0.0, %v1418
    %v1420 = vpop.f32.mrf.mxu0
    %v1421 = vpop.f32.mrf.mxu0
    %v1422 = vpop.f32.mrf.mxu0
    %1423 = vdwg.mxu0
    %v1424 = vmul.f32 %v1419, 0.35355338
    %v1425 = vsub.f32 0.0, %v1424
    %v1426 = vmul.f32 %v1425, 1.442695
    %v1427 = vpow.pop %v1426
    %v1428 = vadd.f32 %v1427, 1.0
    %v1429 = vrcp.pop %v1428
    %v1430 = vsub.f32 %v1315, %v1305
    %v1431 = vmul.f32 %v1429, %v1430
    %v1432 = vadd.f32 %v1305, %v1431
    %v1433 = vpack.c.bf16 %v1432, %v1432
    %v1435 = vsel %vm392, %v1433, 0
    %1437 = vmatprep.subr.bf16.mxu0 0
    %1438 = vmatpush1.bf16.msra.mxu0 0
    %1439 = vmatprep.subr.bf16.mxu0 0
    %1440 = vmatpush1.bf16.msra.mxu0 0
    %1441 = vmatprep.subr.bf16.mxu0 0
    %1442 = vmatpush1.bf16.msra.mxu0 0
    %1443 = vmatprep.subr.bf16.mxu0 0
    %1444 = vmatpush1.bf16.msra.mxu0 0
    %1445 = vmatprep.subr.bf16.mxu0 0
    %1446 = vmatpush1.bf16.msra.mxu0 0
    %1447 = vmatprep.subr.bf16.mxu0 0
    %1448 = vmatpush1.bf16.msra.mxu0 0
    %1449 = vmatprep.subr.bf16.mxu0 0
    %1450 = vmatpush1.bf16.msra.mxu0 %v688
    %1451 = vmatprep.subr.bf16.mxu0 0
    %1452 = vmatpush1.bf16.msra.mxu0 %v687
    %1453 = vmatprep.subr.bf16.mxu0 0
    %1454 = vmatpush2.bf16.msra.mxu0 0
    %1455 = vmatprep.subr.bf16.mxu0 0
    %1456 = vmatpush2.bf16.msra.mxu0 0
    %1457 = vmatprep.subr.bf16.mxu0 0
    %1458 = vmatpush2.bf16.msra.mxu0 0
    %1459 = vmatprep.subr.bf16.mxu0 0
    %1460 = vmatpush2.bf16.msra.mxu0 0
    %1461 = vmatprep.subr.bf16.mxu0 0
    %1462 = vmatpush2.bf16.msra.mxu0 0
    %1463 = vmatprep.subr.bf16.mxu0 0
    %1464 = vmatpush2.bf16.msra.mxu0 0
    %1465 = vmatprep.subr.bf16.mxu0 0
    %1466 = vmatpush2.bf16.msra.mxu0 0
    %1467 = vmatprep.subr.bf16.mxu0 0
    %1468 = vmatpush2.bf16.msra.mxu0 0
    %1469 = vmatprep.mubr.bf16.mxu0 0
    %1470 = vmatmul.mubr.bf16.gmra.mxu0 %v1435
    %v1471 = vpop.f32.mrf.mxu0
    %v1472 = vadd.f32 0.0, %v1471
    %v1473 = vpop.f32.mrf.mxu0
    %v1474 = vpop.f32.mrf.mxu0
    %v1475 = vpop.f32.mrf.mxu0
    %1476 = vdwg.mxu0
    %v1477 = vadd.f32 %v1265, %v1472
    %v1478 = vsel %vm501, %v1477, 0.0
    %1479 = vadd.xlane.f32.xlu0 %v1478
    %v1480 = vpop.xlane.xlu0 %1479
    %v1481 = vmul.f32 %v1480, %v505
    %v1482 = vsub.f32 %v1477, %v1481
    %v1483 = vmul.f32 %v1482, %v1482
    %v1484 = vsel %vm501, %v1483, 0.0
    %1485 = vadd.xlane.f32.xlu0 %v1484
    %v1486 = vpop.xlane.xlu0 %1485
    %v1487 = vmul.f32 %v1486, %v505
    %v1488 = vadd.f32 %v1487, 1e-05
    %v1489 = vrsqrt.pop %v1488
    %v1490 = vmul.f32 %v1482, %v1489
    %v1491 = vmul.f32 %v1490, %v752
    %v1492 = vadd.f32 %v1491, %v759
    %v1493 = vpack.c.bf16 %v1492, %v1492
    %v1495 = vsel %vm392, %v1493, 0
    %1497 = vmatprep.subr.bf16.mxu0 0
    %1498 = vmatpush1.bf16.msra.mxu0 0
    %1499 = vmatprep.subr.bf16.mxu0 0
    %1500 = vmatpush1.bf16.msra.mxu0 0
    %1501 = vmatprep.subr.bf16.mxu0 0
    %1502 = vmatpush1.bf16.msra.mxu0 0
    %1503 = vmatprep.subr.bf16.mxu0 0
    %1504 = vmatpush1.bf16.msra.mxu0 0
    %1505 = vmatprep.subr.bf16.mxu0 0
    %1506 = vmatpush1.bf16.msra.mxu0 0
    %1507 = vmatprep.subr.bf16.mxu0 0
    %1508 = vmatpush1.bf16.msra.mxu0 0
    %1509 = vmatprep.subr.bf16.mxu0 0
    %1510 = vmatpush1.bf16.msra.mxu0 %v772
    %1511 = vmatprep.subr.bf16.mxu0 0
    %1512 = vmatpush1.bf16.msra.mxu0 %v771
    %1513 = vmatprep.subr.bf16.mxu0 0
    %1514 = vmatpush2.bf16.msra.mxu0 0
    %1515 = vmatprep.subr.bf16.mxu0 0
    %1516 = vmatpush2.bf16.msra.mxu0 0
    %1517 = vmatprep.subr.bf16.mxu0 0
    %1518 = vmatpush2.bf16.msra.mxu0 0
    %1519 = vmatprep.subr.bf16.mxu0 0
    %1520 = vmatpush2.bf16.msra.mxu0 0
    %1521 = vmatprep.subr.bf16.mxu0 0
    %1522 = vmatpush2.bf16.msra.mxu0 0
    %1523 = vmatprep.subr.bf16.mxu0 0
    %1524 = vmatpush2.bf16.msra.mxu0 0
    %1525 = vmatprep.subr.bf16.mxu0 0
    %1526 = vmatpush2.bf16.msra.mxu0 0
    %1527 = vmatprep.subr.bf16.mxu0 0
    %1528 = vmatpush2.bf16.msra.mxu0 0
    %1529 = vmatprep.mubr.bf16.mxu0 0
    %1530 = vmatmul.mubr.bf16.gmra.mxu0 %v1495
    %v1531 = vpop.f32.mrf.mxu0
    %v1532 = vadd.f32 0.0, %v1531
    %v1533 = vpop.f32.mrf.mxu0
    %v1534 = vpop.f32.mrf.mxu0
    %v1535 = vpop.f32.mrf.mxu0
    %1536 = vdwg.mxu0
    %v1537 = vadd.f32 %v1492, %v1532
    %v1538 = vsel %vm501, %v1537, 0.0
    %1539 = vadd.xlane.f32.xlu0 %v1538
    %v1540 = vpop.xlane.xlu0 %1539
    %v1541 = vmul.f32 %v1540, %v505
    %v1542 = vsub.f32 %v1537, %v1541
    %v1543 = vmul.f32 %v1542, %v1542
    %v1544 = vsel %vm501, %v1543, 0.0
    %1545 = vadd.xlane.f32.xlu0 %v1544
    %v1546 = vpop.xlane.xlu0 %1545
    %v1547 = vmul.f32 %v1546, %v505
    %v1548 = vadd.f32 %v1547, 1e-05
    %v1549 = vrsqrt.pop %v1548
    %v1550 = vmul.f32 %v1542, %v1549
    %v1551 = vmul.f32 %v1550, %v836
    %v1552 = vadd.f32 %v1551, %v843
    %v1553 = vpack.c.bf16 %v1552, %v1552
    %v1555 = vsel %vm392, %v1553, 0
    %1557 = vmatprep.subr.bf16.mxu0 0
    %1558 = vmatpush1.bf16.msra.mxu0 0
    %1559 = vmatprep.subr.bf16.mxu0 0
    %1560 = vmatpush1.bf16.msra.mxu0 0
    %1561 = vmatprep.subr.bf16.mxu0 0
    %1562 = vmatpush1.bf16.msra.mxu0 0
    %1563 = vmatprep.subr.bf16.mxu0 0
    %1564 = vmatpush1.bf16.msra.mxu0 0
    %1565 = vmatprep.subr.bf16.mxu0 0
    %1566 = vmatpush1.bf16.msra.mxu0 0
    %1567 = vmatprep.subr.bf16.mxu0 0
    %1568 = vmatpush1.bf16.msra.mxu0 0
    %1569 = vmatprep.subr.bf16.mxu0 0
    %1570 = vmatpush1.bf16.msra.mxu0 %v856
    %1571 = vmatprep.subr.bf16.mxu0 0
    %1572 = vmatpush1.bf16.msra.mxu0 %v855
    %1573 = vmatprep.subr.bf16.mxu0 0
    %1574 = vmatpush2.bf16.msra.mxu0 0
    %1575 = vmatprep.subr.bf16.mxu0 0
    %1576 = vmatpush2.bf16.msra.mxu0 0
    %1577 = vmatprep.subr.bf16.mxu0 0
    %1578 = vmatpush2.bf16.msra.mxu0 0
    %1579 = vmatprep.subr.bf16.mxu0 0
    %1580 = vmatpush2.bf16.msra.mxu0 0
    %1581 = vmatprep.subr.bf16.mxu0 0
    %1582 = vmatpush2.bf16.msra.mxu0 0
    %1583 = vmatprep.subr.bf16.mxu0 0
    %1584 = vmatpush2.bf16.msra.mxu0 0
    %1585 = vmatprep.subr.bf16.mxu0 0
    %1586 = vmatpush2.bf16.msra.mxu0 0
    %1587 = vmatprep.subr.bf16.mxu0 0
    %1588 = vmatpush2.bf16.msra.mxu0 0
    %1589 = vmatprep.mubr.bf16.mxu0 0
    %1590 = vmatmul.mubr.bf16.gmra.mxu0 %v1555
    %v1591 = vpop.f32.mrf.mxu0
    %v1592 = vadd.f32 0.0, %v1591
    %v1593 = vpop.f32.mrf.mxu0
    %v1594 = vpop.f32.mrf.mxu0
    %v1595 = vpop.f32.mrf.mxu0
    %1596 = vdwg.mxu0
    %v1597 = vsub.f32 0.0, %v1592
    %v1598 = vmul.f32 %v1597, 1.442695
    %v1599 = vpow.pop %v1598
    %v1600 = vadd.f32 %v1599, 1.0
    %v1601 = vrcp.pop %v1600
    %v1602 = vmul.f32 1.0, %v1601
    %v1603 = vtanh.pop %v1592
    %v1604 = vpack.c.bf16 %v1603, %v1603
    %v1606 = vrot.slane %v1604, 1
    %1607 = vrot.lane.b32.xlu0 %v1606, 124
    %v1608 = vpop.permute.xlu0 %1607
    %v1610 = vsel %vm319, %v1608, 0
    %1612 = vmatprep.subr.bf16.mxu0 0
    %1613 = vmatpush1.bf16.msra.mxu0 0
    %1614 = vmatprep.subr.bf16.mxu0 0
    %1615 = vmatpush1.bf16.msra.mxu0 0
    %1616 = vmatprep.subr.bf16.mxu0 0
    %1617 = vmatpush1.bf16.msra.mxu0 0
    %1618 = vmatprep.subr.bf16.mxu0 0
    %1619 = vmatpush1.bf16.msra.mxu0 0
    %1620 = vmatprep.subr.bf16.mxu0 0
    %1621 = vmatpush1.bf16.msra.mxu0 0
    %1622 = vmatprep.subr.bf16.mxu0 0
    %1623 = vmatpush1.bf16.msra.mxu0 0
    %1624 = vmatprep.subr.bf16.mxu0 0
    %1625 = vmatpush1.bf16.msra.mxu0 0
    %1626 = vmatprep.subr.bf16.mxu0 0
    %1627 = vmatpush1.bf16.msra.mxu0 %v317
    %1628 = vmatprep.subr.bf16.mxu0 0
    %1629 = vmatpush2.bf16.msra.mxu0 0
    %1630 = vmatprep.subr.bf16.mxu0 0
    %1631 = vmatpush2.bf16.msra.mxu0 0
    %1632 = vmatprep.subr.bf16.mxu0 0
    %1633 = vmatpush2.bf16.msra.mxu0 0
    %1634 = vmatprep.subr.bf16.mxu0 0
    %1635 = vmatpush2.bf16.msra.mxu0 0
    %1636 = vmatprep.subr.bf16.mxu0 0
    %1637 = vmatpush2.bf16.msra.mxu0 0
    %1638 = vmatprep.subr.bf16.mxu0 0
    %1639 = vmatpush2.bf16.msra.mxu0 0
    %1640 = vmatprep.subr.bf16.mxu0 0
    %1641 = vmatpush2.bf16.msra.mxu0 0
    %1642 = vmatprep.subr.bf16.mxu0 0
    %1643 = vmatpush2.bf16.msra.mxu0 0
    %1644 = vmatprep.mubr.bf16.mxu0 0
    %1645 = vmatmul.mubr.bf16.gmra.mxu0 %v1610
    %v1646 = vpop.f32.mrf.mxu0
    %v1647 = vadd.f32 0.0, %v1646
    %v1648 = vpop.f32.mrf.mxu0
    %v1649 = vpop.f32.mrf.mxu0
    %v1650 = vpop.f32.mrf.mxu0
    %1651 = vdwg.mxu0
    %v1652 = vtanh.pop %v1647
    %v1653 = vrot.slane %v310, 3
    %v1656 = vrot.slane %v1652, 7
    %v1658 = vrot.slane %v310, 2
    %v1660 = vsel %vm372, %v1652, %v1653
    %v1661 = vsel %vm374, %v1660, %v1656
    %v1662 = vsel %vm376, %v1661, %v1658
    %v1663 = vadd.f32 %v1662, %v211
    %v1664 = vpack.c.bf16 %v1663, %v1663
    %v1666 = vsel %vm392, %v1664, 0
    %1668 = vmatprep.subr.bf16.mxu0 0
    %1669 = vmatpush1.bf16.msra.mxu0 0
    %1670 = vmatprep.subr.bf16.mxu0 0
    %1671 = vmatpush1.bf16.msra.mxu0 0
    %1672 = vmatprep.subr.bf16.mxu0 0
    %1673 = vmatpush1.bf16.msra.mxu0 0
    %1674 = vmatprep.subr.bf16.mxu0 0
    %1675 = vmatpush1.bf16.msra.mxu0 0
    %1676 = vmatprep.subr.bf16.mxu0 0
    %1677 = vmatpush1.bf16.msra.mxu0 0
    %1678 = vmatprep.subr.bf16.mxu0 0
    %1679 = vmatpush1.bf16.msra.mxu0 0
    %1680 = vmatprep.subr.bf16.mxu0 0
    %1681 = vmatpush1.bf16.msra.mxu0 %v389
    %1682 = vmatprep.subr.bf16.mxu0 0
    %1683 = vmatpush1.bf16.msra.mxu0 %v388
    %1684 = vmatprep.subr.bf16.mxu0 0
    %1685 = vmatpush2.bf16.msra.mxu0 0
    %1686 = vmatprep.subr.bf16.mxu0 0
    %1687 = vmatpush2.bf16.msra.mxu0 0
    %1688 = vmatprep.subr.bf16.mxu0 0
    %1689 = vmatpush2.bf16.msra.mxu0 0
    %1690 = vmatprep.subr.bf16.mxu0 0
    %1691 = vmatpush2.bf16.msra.mxu0 0
    %1692 = vmatprep.subr.bf16.mxu0 0
    %1693 = vmatpush2.bf16.msra.mxu0 0
    %1694 = vmatprep.subr.bf16.mxu0 0
    %1695 = vmatpush2.bf16.msra.mxu0 0
    %1696 = vmatprep.subr.bf16.mxu0 0
    %1697 = vmatpush2.bf16.msra.mxu0 0
    %1698 = vmatprep.subr.bf16.mxu0 0
    %1699 = vmatpush2.bf16.msra.mxu0 0
    %1700 = vmatprep.mubr.bf16.mxu0 0
    %1701 = vmatmul.mubr.bf16.gmra.mxu0 %v1666
    %v1702 = vpop.f32.mrf.mxu0
    %v1703 = vadd.f32 0.0, %v1702
    %v1704 = vpop.f32.mrf.mxu0
    %v1705 = vpop.f32.mrf.mxu0
    %v1706 = vpop.f32.mrf.mxu0
    %1707 = vdwg.mxu0
    %v1709 = vrot.slane %v1703, 2
    %v1711 = vrot.slane %v1703, 6
    %v1713 = vsel %vm374, %v1709, %v1711
    %1714 = vmatprep.subr.bf16.mxu0 0
    %1715 = vmatpush1.bf16.msra.mxu0 0
    %1716 = vmatprep.subr.bf16.mxu0 0
    %1717 = vmatpush1.bf16.msra.mxu0 0
    %1718 = vmatprep.subr.bf16.mxu0 0
    %1719 = vmatpush1.bf16.msra.mxu0 0
    %1720 = vmatprep.subr.bf16.mxu0 0
    %1721 = vmatpush1.bf16.msra.mxu0 0
    %1722 = vmatprep.subr.bf16.mxu0 0
    %1723 = vmatpush1.bf16.msra.mxu0 0
    %1724 = vmatprep.subr.bf16.mxu0 0
    %1725 = vmatpush1.bf16.msra.mxu0 0
    %1726 = vmatprep.subr.bf16.mxu0 0
    %1727 = vmatpush1.bf16.msra.mxu0 %v1026
    %1728 = vmatprep.subr.bf16.mxu0 0
    %1729 = vmatpush1.bf16.msra.mxu0 %v1025
    %1730 = vmatprep.subr.bf16.mxu0 0
    %1731 = vmatpush2.bf16.msra.mxu0 0
    %1732 = vmatprep.subr.bf16.mxu0 0
    %1733 = vmatpush2.bf16.msra.mxu0 0
    %1734 = vmatprep.subr.bf16.mxu0 0
    %1735 = vmatpush2.bf16.msra.mxu0 0
    %1736 = vmatprep.subr.bf16.mxu0 0
    %1737 = vmatpush2.bf16.msra.mxu0 0
    %1738 = vmatprep.subr.bf16.mxu0 0
    %1739 = vmatpush2.bf16.msra.mxu0 0
    %1740 = vmatprep.subr.bf16.mxu0 0
    %1741 = vmatpush2.bf16.msra.mxu0 0
    %1742 = vmatprep.subr.bf16.mxu0 0
    %1743 = vmatpush2.bf16.msra.mxu0 0
    %1744 = vmatprep.subr.bf16.mxu0 0
    %1745 = vmatpush2.bf16.msra.mxu0 0
    %1746 = vmatprep.mubr.bf16.mxu0 0
    %1747 = vmatmul.mubr.bf16.gmra.mxu0 %v1268
    %v1748 = vpop.f32.mrf.mxu0
    %v1749 = vadd.f32 0.0, %v1748
    %v1750 = vpop.f32.mrf.mxu0
    %v1751 = vpop.f32.mrf.mxu0
    %v1752 = vpop.f32.mrf.mxu0
    %1753 = vdwg.mxu0
    %v1755 = vrot.slane %v1749, 2
    %v1757 = vrot.slane %v1749, 6
    %v1759 = vsel %vm374, %v1755, %v1757
    %v1760 = vsub.f32 %v1759, %v1749
    %1762 = vrot.lane.b32.xlu0 %v1760, 96
    %v1763 = vpop.permute.xlu0 %1762
    %v1765 = vmul.f32 %v1749, %v1763
    %v1766 = vpack.c.bf16 %v1765, %v1765
    %v1768 = vsel %vm392, %v1766, 0
    %1770 = vmatprep.subr.bf16.mxu0 0
    %1771 = vmatpush1.bf16.msra.mxu0 0
    %1772 = vmatprep.subr.bf16.mxu0 0
    %1773 = vmatpush1.bf16.msra.mxu0 0
    %1774 = vmatprep.subr.bf16.mxu0 0
    %1775 = vmatpush1.bf16.msra.mxu0 0
    %1776 = vmatprep.subr.bf16.mxu0 0
    %1777 = vmatpush1.bf16.msra.mxu0 0
    %1778 = vmatprep.subr.bf16.mxu0 0
    %1779 = vmatpush1.bf16.msra.mxu0 0
    %1780 = vmatprep.subr.bf16.mxu0 0
    %1781 = vmatpush1.bf16.msra.mxu0 0
    %1782 = vmatprep.subr.bf16.mxu0 0
    %1783 = vmatpush1.bf16.msra.mxu0 %v1091
    %1784 = vmatprep.subr.bf16.mxu0 0
    %1785 = vmatpush1.bf16.msra.mxu0 %v1090
    %1786 = vmatprep.subr.bf16.mxu0 0
    %1787 = vmatpush2.bf16.msra.mxu0 0
    %1788 = vmatprep.subr.bf16.mxu0 0
    %1789 = vmatpush2.bf16.msra.mxu0 0
    %1790 = vmatprep.subr.bf16.mxu0 0
    %1791 = vmatpush2.bf16.msra.mxu0 0
    %1792 = vmatprep.subr.bf16.mxu0 0
    %1793 = vmatpush2.bf16.msra.mxu0 0
    %1794 = vmatprep.subr.bf16.mxu0 0
    %1795 = vmatpush2.bf16.msra.mxu0 0
    %1796 = vmatprep.subr.bf16.mxu0 0
    %1797 = vmatpush2.bf16.msra.mxu0 0
    %1798 = vmatprep.subr.bf16.mxu0 0
    %1799 = vmatpush2.bf16.msra.mxu0 0
    %1800 = vmatprep.subr.bf16.mxu0 0
    %1801 = vmatpush2.bf16.msra.mxu0 0
    %1802 = vmatprep.mubr.bf16.mxu0 0
    %1803 = vmatmul.mubr.bf16.gmra.mxu0 %v1768
    %v1804 = vpop.f32.mrf.mxu0
    %v1805 = vadd.f32 0.0, %v1804
    %v1806 = vpop.f32.mrf.mxu0
    %v1807 = vpop.f32.mrf.mxu0
    %v1808 = vpop.f32.mrf.mxu0
    %1809 = vdwg.mxu0
    %v1810 = vmul.f32 %v1805, 0.35355338
    %v1811 = vsub.f32 0.0, %v1810
    %v1812 = vmul.f32 %v1811, 1.442695
    %v1813 = vpow.pop %v1812
    %v1814 = vadd.f32 %v1813, 1.0
    %v1815 = vrcp.pop %v1814
    %v1816 = vsub.f32 %v1713, %v1703
    %v1817 = vmul.f32 %v1815, %v1816
    %v1818 = vadd.f32 %v1703, %v1817
    %v1819 = vpack.c.bf16 %v1818, %v1818
    %v1821 = vsel %vm392, %v1819, 0
    %1823 = vmatprep.subr.bf16.mxu0 0
    %1824 = vmatpush1.bf16.msra.mxu0 0
    %1825 = vmatprep.subr.bf16.mxu0 0
    %1826 = vmatpush1.bf16.msra.mxu0 0
    %1827 = vmatprep.subr.bf16.mxu0 0
    %1828 = vmatpush1.bf16.msra.mxu0 0
    %1829 = vmatprep.subr.bf16.mxu0 0
    %1830 = vmatpush1.bf16.msra.mxu0 0
    %1831 = vmatprep.subr.bf16.mxu0 0
    %1832 = vmatpush1.bf16.msra.mxu0 0
    %1833 = vmatprep.subr.bf16.mxu0 0
    %1834 = vmatpush1.bf16.msra.mxu0 0
    %1835 = vmatprep.subr.bf16.mxu0 0
    %1836 = vmatpush1.bf16.msra.mxu0 %v454
    %1837 = vmatprep.subr.bf16.mxu0 0
    %1838 = vmatpush1.bf16.msra.mxu0 %v453
    %1839 = vmatprep.subr.bf16.mxu0 0
    %1840 = vmatpush2.bf16.msra.mxu0 0
    %1841 = vmatprep.subr.bf16.mxu0 0
    %1842 = vmatpush2.bf16.msra.mxu0 0
    %1843 = vmatprep.subr.bf16.mxu0 0
    %1844 = vmatpush2.bf16.msra.mxu0 0
    %1845 = vmatprep.subr.bf16.mxu0 0
    %1846 = vmatpush2.bf16.msra.mxu0 0
    %1847 = vmatprep.subr.bf16.mxu0 0
    %1848 = vmatpush2.bf16.msra.mxu0 0
    %1849 = vmatprep.subr.bf16.mxu0 0
    %1850 = vmatpush2.bf16.msra.mxu0 0
    %1851 = vmatprep.subr.bf16.mxu0 0
    %1852 = vmatpush2.bf16.msra.mxu0 0
    %1853 = vmatprep.subr.bf16.mxu0 0
    %1854 = vmatpush2.bf16.msra.mxu0 0
    %1855 = vmatprep.mubr.bf16.mxu0 0
    %1856 = vmatmul.mubr.bf16.gmra.mxu0 %v1821
    %v1857 = vpop.f32.mrf.mxu0
    %v1858 = vadd.f32 0.0, %v1857
    %v1859 = vpop.f32.mrf.mxu0
    %v1860 = vpop.f32.mrf.mxu0
    %v1861 = vpop.f32.mrf.mxu0
    %1862 = vdwg.mxu0
    %v1863 = vadd.f32 %v1663, %v1858
    %v1864 = vsel %vm501, %v1863, 0.0
    %1865 = vadd.xlane.f32.xlu0 %v1864
    %v1866 = vpop.xlane.xlu0 %1865
    %v1867 = vmul.f32 %v1866, %v505
    %v1868 = vsub.f32 %v1863, %v1867
    %v1869 = vmul.f32 %v1868, %v1868
    %v1870 = vsel %vm501, %v1869, 0.0
    %1871 = vadd.xlane.f32.xlu0 %v1870
    %v1872 = vpop.xlane.xlu0 %1871
    %v1873 = vmul.f32 %v1872, %v505
    %v1874 = vadd.f32 %v1873, 1e-05
    %v1875 = vrsqrt.pop %v1874
    %v1876 = vmul.f32 %v1868, %v1875
    %v1877 = vmul.f32 %v1876, %v520
    %v1878 = vadd.f32 %v1877, %v527
    %v1879 = vpack.c.bf16 %v1878, %v1878
    %v1881 = vsel %vm392, %v1879, 0
    %1883 = vmatprep.subr.bf16.mxu0 0
    %1884 = vmatpush1.bf16.msra.mxu0 0
    %1885 = vmatprep.subr.bf16.mxu0 0
    %1886 = vmatpush1.bf16.msra.mxu0 0
    %1887 = vmatprep.subr.bf16.mxu0 0
    %1888 = vmatpush1.bf16.msra.mxu0 0
    %1889 = vmatprep.subr.bf16.mxu0 0
    %1890 = vmatpush1.bf16.msra.mxu0 0
    %1891 = vmatprep.subr.bf16.mxu0 0
    %1892 = vmatpush1.bf16.msra.mxu0 0
    %1893 = vmatprep.subr.bf16.mxu0 0
    %1894 = vmatpush1.bf16.msra.mxu0 0
    %1895 = vmatprep.subr.bf16.mxu0 0
    %1896 = vmatpush1.bf16.msra.mxu0 %v540
    %1897 = vmatprep.subr.bf16.mxu0 0
    %1898 = vmatpush1.bf16.msra.mxu0 %v539
    %1899 = vmatprep.subr.bf16.mxu0 0
    %1900 = vmatpush2.bf16.msra.mxu0 0
    %1901 = vmatprep.subr.bf16.mxu0 0
    %1902 = vmatpush2.bf16.msra.mxu0 0
    %1903 = vmatprep.subr.bf16.mxu0 0
    %1904 = vmatpush2.bf16.msra.mxu0 0
    %1905 = vmatprep.subr.bf16.mxu0 0
    %1906 = vmatpush2.bf16.msra.mxu0 0
    %1907 = vmatprep.subr.bf16.mxu0 0
    %1908 = vmatpush2.bf16.msra.mxu0 0
    %1909 = vmatprep.subr.bf16.mxu0 0
    %1910 = vmatpush2.bf16.msra.mxu0 0
    %1911 = vmatprep.subr.bf16.mxu0 0
    %1912 = vmatpush2.bf16.msra.mxu0 0
    %1913 = vmatprep.subr.bf16.mxu0 0
    %1914 = vmatpush2.bf16.msra.mxu0 0
    %1915 = vmatprep.mubr.bf16.mxu0 0
    %1916 = vmatmul.mubr.bf16.gmra.mxu0 %v1881
    %v1917 = vpop.f32.mrf.mxu0
    %v1918 = vadd.f32 0.0, %v1917
    %v1919 = vpop.f32.mrf.mxu0
    %v1920 = vpop.f32.mrf.mxu0
    %v1921 = vpop.f32.mrf.mxu0
    %1922 = vdwg.mxu0
    %v1923 = vadd.f32 %v1878, %v1918
    %v1924 = vsel %vm501, %v1923, 0.0
    %1925 = vadd.xlane.f32.xlu0 %v1924
    %v1926 = vpop.xlane.xlu0 %1925
    %v1927 = vmul.f32 %v1926, %v505
    %v1928 = vsub.f32 %v1923, %v1927
    %v1929 = vmul.f32 %v1928, %v1928
    %v1930 = vsel %vm501, %v1929, 0.0
    %1931 = vadd.xlane.f32.xlu0 %v1930
    %v1932 = vpop.xlane.xlu0 %1931
    %v1933 = vmul.f32 %v1932, %v505
    %v1934 = vadd.f32 %v1933, 1e-05
    %v1935 = vrsqrt.pop %v1934
    %v1936 = vmul.f32 %v1928, %v1935
    %v1937 = vmul.f32 %v1936, %v604
    %v1938 = vadd.f32 %v1937, %v611
    %v1939 = vpack.c.bf16 %v1938, %v1938
    %v1941 = vsel %vm392, %v1939, 0
    %1943 = vmatprep.subr.bf16.mxu0 0
    %1944 = vmatpush1.bf16.msra.mxu0 0
    %1945 = vmatprep.subr.bf16.mxu0 0
    %1946 = vmatpush1.bf16.msra.mxu0 0
    %1947 = vmatprep.subr.bf16.mxu0 0
    %1948 = vmatpush1.bf16.msra.mxu0 0
    %1949 = vmatprep.subr.bf16.mxu0 0
    %1950 = vmatpush1.bf16.msra.mxu0 0
    %1951 = vmatprep.subr.bf16.mxu0 0
    %1952 = vmatpush1.bf16.msra.mxu0 0
    %1953 = vmatprep.subr.bf16.mxu0 0
    %1954 = vmatpush1.bf16.msra.mxu0 0
    %1955 = vmatprep.subr.bf16.mxu0 0
    %1956 = vmatpush1.bf16.msra.mxu0 %v624
    %1957 = vmatprep.subr.bf16.mxu0 0
    %1958 = vmatpush1.bf16.msra.mxu0 %v623
    %1959 = vmatprep.subr.bf16.mxu0 0
    %1960 = vmatpush2.bf16.msra.mxu0 0
    %1961 = vmatprep.subr.bf16.mxu0 0
    %1962 = vmatpush2.bf16.msra.mxu0 0
    %1963 = vmatprep.subr.bf16.mxu0 0
    %1964 = vmatpush2.bf16.msra.mxu0 0
    %1965 = vmatprep.subr.bf16.mxu0 0
    %1966 = vmatpush2.bf16.msra.mxu0 0
    %1967 = vmatprep.subr.bf16.mxu0 0
    %1968 = vmatpush2.bf16.msra.mxu0 0
    %1969 = vmatprep.subr.bf16.mxu0 0
    %1970 = vmatpush2.bf16.msra.mxu0 0
    %1971 = vmatprep.subr.bf16.mxu0 0
    %1972 = vmatpush2.bf16.msra.mxu0 0
    %1973 = vmatprep.subr.bf16.mxu0 0
    %1974 = vmatpush2.bf16.msra.mxu0 0
    %1975 = vmatprep.mubr.bf16.mxu0 0
    %1976 = vmatmul.mubr.bf16.gmra.mxu0 %v1941
    %v1977 = vpop.f32.mrf.mxu0
    %v1978 = vadd.f32 0.0, %v1977
    %v1979 = vpop.f32.mrf.mxu0
    %v1980 = vpop.f32.mrf.mxu0
    %v1981 = vpop.f32.mrf.mxu0
    %1982 = vdwg.mxu0
    %v1984 = vrot.slane %v1978, 2
    %v1986 = vrot.slane %v1978, 6
    %v1988 = vsel %vm374, %v1984, %v1986
    %1989 = vmatprep.subr.bf16.mxu0 0
    %1990 = vmatpush1.bf16.msra.mxu0 0
    %1991 = vmatprep.subr.bf16.mxu0 0
    %1992 = vmatpush1.bf16.msra.mxu0 0
    %1993 = vmatprep.subr.bf16.mxu0 0
    %1994 = vmatpush1.bf16.msra.mxu0 0
    %1995 = vmatprep.subr.bf16.mxu0 0
    %1996 = vmatpush1.bf16.msra.mxu0 0
    %1997 = vmatprep.subr.bf16.mxu0 0
    %1998 = vmatpush1.bf16.msra.mxu0 0
    %1999 = vmatprep.subr.bf16.mxu0 0
    %2000 = vmatpush1.bf16.msra.mxu0 0
    %2001 = vmatprep.subr.bf16.mxu0 0
    %2002 = vmatpush1.bf16.msra.mxu0 %v1325
    %2003 = vmatprep.subr.bf16.mxu0 0
    %2004 = vmatpush1.bf16.msra.mxu0 %v1324
    %2005 = vmatprep.subr.bf16.mxu0 0
    %2006 = vmatpush2.bf16.msra.mxu0 0
    %2007 = vmatprep.subr.bf16.mxu0 0
    %2008 = vmatpush2.bf16.msra.mxu0 0
    %2009 = vmatprep.subr.bf16.mxu0 0
    %2010 = vmatpush2.bf16.msra.mxu0 0
    %2011 = vmatprep.subr.bf16.mxu0 0
    %2012 = vmatpush2.bf16.msra.mxu0 0
    %2013 = vmatprep.subr.bf16.mxu0 0
    %2014 = vmatpush2.bf16.msra.mxu0 0
    %2015 = vmatprep.subr.bf16.mxu0 0
    %2016 = vmatpush2.bf16.msra.mxu0 0
    %2017 = vmatprep.subr.bf16.mxu0 0
    %2018 = vmatpush2.bf16.msra.mxu0 0
    %2019 = vmatprep.subr.bf16.mxu0 0
    %2020 = vmatpush2.bf16.msra.mxu0 0
    %2021 = vmatprep.mubr.bf16.mxu0 0
    %2022 = vmatmul.mubr.bf16.gmra.mxu0 %v1555
    %v2023 = vpop.f32.mrf.mxu0
    %v2024 = vadd.f32 0.0, %v2023
    %v2025 = vpop.f32.mrf.mxu0
    %v2026 = vpop.f32.mrf.mxu0
    %v2027 = vpop.f32.mrf.mxu0
    %2028 = vdwg.mxu0
    %v2030 = vrot.slane %v2024, 2
    %v2032 = vrot.slane %v2024, 6
    %v2034 = vsel %vm374, %v2030, %v2032
    %v2035 = vsub.f32 %v2034, %v2024
    %2037 = vrot.lane.b32.xlu0 %v2035, 96
    %v2038 = vpop.permute.xlu0 %2037
    %v2040 = vmul.f32 %v2024, %v2038
    %v2041 = vpack.c.bf16 %v2040, %v2040
    %v2043 = vsel %vm392, %v2041, 0
    %2045 = vmatprep.subr.bf16.mxu0 0
    %2046 = vmatpush1.bf16.msra.mxu0 0
    %2047 = vmatprep.subr.bf16.mxu0 0
    %2048 = vmatpush1.bf16.msra.mxu0 0
    %2049 = vmatprep.subr.bf16.mxu0 0
    %2050 = vmatpush1.bf16.msra.mxu0 0
    %2051 = vmatprep.subr.bf16.mxu0 0
    %2052 = vmatpush1.bf16.msra.mxu0 0
    %2053 = vmatprep.subr.bf16.mxu0 0
    %2054 = vmatpush1.bf16.msra.mxu0 0
    %2055 = vmatprep.subr.bf16.mxu0 0
    %2056 = vmatpush1.bf16.msra.mxu0 0
    %2057 = vmatprep.subr.bf16.mxu0 0
    %2058 = vmatpush1.bf16.msra.mxu0 %v1091
    %2059 = vmatprep.subr.bf16.mxu0 0
    %2060 = vmatpush1.bf16.msra.mxu0 %v1090
    %2061 = vmatprep.subr.bf16.mxu0 0
    %2062 = vmatpush2.bf16.msra.mxu0 0
    %2063 = vmatprep.subr.bf16.mxu0 0
    %2064 = vmatpush2.bf16.msra.mxu0 0
    %2065 = vmatprep.subr.bf16.mxu0 0
    %2066 = vmatpush2.bf16.msra.mxu0 0
    %2067 = vmatprep.subr.bf16.mxu0 0
    %2068 = vmatpush2.bf16.msra.mxu0 0
    %2069 = vmatprep.subr.bf16.mxu0 0
    %2070 = vmatpush2.bf16.msra.mxu0 0
    %2071 = vmatprep.subr.bf16.mxu0 0
    %2072 = vmatpush2.bf16.msra.mxu0 0
    %2073 = vmatprep.subr.bf16.mxu0 0
    %2074 = vmatpush2.bf16.msra.mxu0 0
    %2075 = vmatprep.subr.bf16.mxu0 0
    %2076 = vmatpush2.bf16.msra.mxu0 0
    %2077 = vmatprep.mubr.bf16.mxu0 0
    %2078 = vmatmul.mubr.bf16.gmra.mxu0 %v2043
    %v2079 = vpop.f32.mrf.mxu0
    %v2080 = vadd.f32 0.0, %v2079
    %v2081 = vpop.f32.mrf.mxu0
    %v2082 = vpop.f32.mrf.mxu0
    %v2083 = vpop.f32.mrf.mxu0
    %2084 = vdwg.mxu0
    %v2085 = vmul.f32 %v2080, 0.35355338
    %v2086 = vsub.f32 0.0, %v2085
    %v2087 = vmul.f32 %v2086, 1.442695
    %v2088 = vpow.pop %v2087
    %v2089 = vadd.f32 %v2088, 1.0
    %v2090 = vrcp.pop %v2089
    %v2091 = vsub.f32 %v1988, %v1978
    %v2092 = vmul.f32 %v2090, %v2091
    %v2093 = vadd.f32 %v1978, %v2092
    %v2094 = vpack.c.bf16 %v2093, %v2093
    %v2096 = vsel %vm392, %v2094, 0
    %2098 = vmatprep.subr.bf16.mxu0 0
    %2099 = vmatpush1.bf16.msra.mxu0 0
    %2100 = vmatprep.subr.bf16.mxu0 0
    %2101 = vmatpush1.bf16.msra.mxu0 0
    %2102 = vmatprep.subr.bf16.mxu0 0
    %2103 = vmatpush1.bf16.msra.mxu0 0
    %2104 = vmatprep.subr.bf16.mxu0 0
    %2105 = vmatpush1.bf16.msra.mxu0 0
    %2106 = vmatprep.subr.bf16.mxu0 0
    %2107 = vmatpush1.bf16.msra.mxu0 0
    %2108 = vmatprep.subr.bf16.mxu0 0
    %2109 = vmatpush1.bf16.msra.mxu0 0
    %2110 = vmatprep.subr.bf16.mxu0 0
    %2111 = vmatpush1.bf16.msra.mxu0 %v688
    %2112 = vmatprep.subr.bf16.mxu0 0
    %2113 = vmatpush1.bf16.msra.mxu0 %v687
    %2114 = vmatprep.subr.bf16.mxu0 0
    %2115 = vmatpush2.bf16.msra.mxu0 0
    %2116 = vmatprep.subr.bf16.mxu0 0
    %2117 = vmatpush2.bf16.msra.mxu0 0
    %2118 = vmatprep.subr.bf16.mxu0 0
    %2119 = vmatpush2.bf16.msra.mxu0 0
    %2120 = vmatprep.subr.bf16.mxu0 0
    %2121 = vmatpush2.bf16.msra.mxu0 0
    %2122 = vmatprep.subr.bf16.mxu0 0
    %2123 = vmatpush2.bf16.msra.mxu0 0
    %2124 = vmatprep.subr.bf16.mxu0 0
    %2125 = vmatpush2.bf16.msra.mxu0 0
    %2126 = vmatprep.subr.bf16.mxu0 0
    %2127 = vmatpush2.bf16.msra.mxu0 0
    %2128 = vmatprep.subr.bf16.mxu0 0
    %2129 = vmatpush2.bf16.msra.mxu0 0
    %2130 = vmatprep.mubr.bf16.mxu0 0
    %2131 = vmatmul.mubr.bf16.gmra.mxu0 %v2096
    %v2132 = vpop.f32.mrf.mxu0
    %v2133 = vadd.f32 0.0, %v2132
    %v2134 = vpop.f32.mrf.mxu0
    %v2135 = vpop.f32.mrf.mxu0
    %v2136 = vpop.f32.mrf.mxu0
    %2137 = vdwg.mxu0
    %v2138 = vadd.f32 %v1938, %v2133
    %v2139 = vsel %vm501, %v2138, 0.0
    %2140 = vadd.xlane.f32.xlu0 %v2139
    %v2141 = vpop.xlane.xlu0 %2140
    %v2142 = vmul.f32 %v2141, %v505
    %v2143 = vsub.f32 %v2138, %v2142
    %v2144 = vmul.f32 %v2143, %v2143
    %v2145 = vsel %vm501, %v2144, 0.0
    %2146 = vadd.xlane.f32.xlu0 %v2145
    %v2147 = vpop.xlane.xlu0 %2146
    %v2148 = vmul.f32 %v2147, %v505
    %v2149 = vadd.f32 %v2148, 1e-05
    %v2150 = vrsqrt.pop %v2149
    %v2151 = vmul.f32 %v2143, %v2150
    %v2152 = vmul.f32 %v2151, %v752
    %v2153 = vadd.f32 %v2152, %v759
    %v2154 = vpack.c.bf16 %v2153, %v2153
    %v2156 = vsel %vm392, %v2154, 0
    %2158 = vmatprep.subr.bf16.mxu0 0
    %2159 = vmatpush1.bf16.msra.mxu0 0
    %2160 = vmatprep.subr.bf16.mxu0 0
    %2161 = vmatpush1.bf16.msra.mxu0 0
    %2162 = vmatprep.subr.bf16.mxu0 0
    %2163 = vmatpush1.bf16.msra.mxu0 0
    %2164 = vmatprep.subr.bf16.mxu0 0
    %2165 = vmatpush1.bf16.msra.mxu0 0
    %2166 = vmatprep.subr.bf16.mxu0 0
    %2167 = vmatpush1.bf16.msra.mxu0 0
    %2168 = vmatprep.subr.bf16.mxu0 0
    %2169 = vmatpush1.bf16.msra.mxu0 0
    %2170 = vmatprep.subr.bf16.mxu0 0
    %2171 = vmatpush1.bf16.msra.mxu0 %v772
    %2172 = vmatprep.subr.bf16.mxu0 0
    %2173 = vmatpush1.bf16.msra.mxu0 %v771
    %2174 = vmatprep.subr.bf16.mxu0 0
    %2175 = vmatpush2.bf16.msra.mxu0 0
    %2176 = vmatprep.subr.bf16.mxu0 0
    %2177 = vmatpush2.bf16.msra.mxu0 0
    %2178 = vmatprep.subr.bf16.mxu0 0
    %2179 = vmatpush2.bf16.msra.mxu0 0
    %2180 = vmatprep.subr.bf16.mxu0 0
    %2181 = vmatpush2.bf16.msra.mxu0 0
    %2182 = vmatprep.subr.bf16.mxu0 0
    %2183 = vmatpush2.bf16.msra.mxu0 0
    %2184 = vmatprep.subr.bf16.mxu0 0
    %2185 = vmatpush2.bf16.msra.mxu0 0
    %2186 = vmatprep.subr.bf16.mxu0 0
    %2187 = vmatpush2.bf16.msra.mxu0 0
    %2188 = vmatprep.subr.bf16.mxu0 0
    %2189 = vmatpush2.bf16.msra.mxu0 0
    %2190 = vmatprep.mubr.bf16.mxu0 0
    %2191 = vmatmul.mubr.bf16.gmra.mxu0 %v2156
    %v2192 = vpop.f32.mrf.mxu0
    %v2193 = vadd.f32 0.0, %v2192
    %v2194 = vpop.f32.mrf.mxu0
    %v2195 = vpop.f32.mrf.mxu0
    %v2196 = vpop.f32.mrf.mxu0
    %2197 = vdwg.mxu0
    %v2198 = vadd.f32 %v2153, %v2193
    %v2199 = vsel %vm501, %v2198, 0.0
    %2200 = vadd.xlane.f32.xlu0 %v2199
    %v2201 = vpop.xlane.xlu0 %2200
    %v2202 = vmul.f32 %v2201, %v505
    %v2203 = vsub.f32 %v2198, %v2202
    %v2204 = vmul.f32 %v2203, %v2203
    %v2205 = vsel %vm501, %v2204, 0.0
    %2206 = vadd.xlane.f32.xlu0 %v2205
    %v2207 = vpop.xlane.xlu0 %2206
    %v2208 = vmul.f32 %v2207, %v505
    %v2209 = vadd.f32 %v2208, 1e-05
    %v2210 = vrsqrt.pop %v2209
    %v2211 = vmul.f32 %v2203, %v2210
    %v2212 = vmul.f32 %v2211, %v836
    %v2213 = vadd.f32 %v2212, %v843
    %v2214 = vpack.c.bf16 %v2213, %v2213
    %v2216 = vsel %vm392, %v2214, 0
    %2218 = vmatprep.subr.bf16.mxu0 0
    %2219 = vmatpush1.bf16.msra.mxu0 0
    %2220 = vmatprep.subr.bf16.mxu0 0
    %2221 = vmatpush1.bf16.msra.mxu0 0
    %2222 = vmatprep.subr.bf16.mxu0 0
    %2223 = vmatpush1.bf16.msra.mxu0 0
    %2224 = vmatprep.subr.bf16.mxu0 0
    %2225 = vmatpush1.bf16.msra.mxu0 0
    %2226 = vmatprep.subr.bf16.mxu0 0
    %2227 = vmatpush1.bf16.msra.mxu0 0
    %2228 = vmatprep.subr.bf16.mxu0 0
    %2229 = vmatpush1.bf16.msra.mxu0 0
    %2230 = vmatprep.subr.bf16.mxu0 0
    %2231 = vmatpush1.bf16.msra.mxu0 %v856
    %2232 = vmatprep.subr.bf16.mxu0 0
    %2233 = vmatpush1.bf16.msra.mxu0 %v855
    %2234 = vmatprep.subr.bf16.mxu0 0
    %2235 = vmatpush2.bf16.msra.mxu0 0
    %2236 = vmatprep.subr.bf16.mxu0 0
    %2237 = vmatpush2.bf16.msra.mxu0 0
    %2238 = vmatprep.subr.bf16.mxu0 0
    %2239 = vmatpush2.bf16.msra.mxu0 0
    %2240 = vmatprep.subr.bf16.mxu0 0
    %2241 = vmatpush2.bf16.msra.mxu0 0
    %2242 = vmatprep.subr.bf16.mxu0 0
    %2243 = vmatpush2.bf16.msra.mxu0 0
    %2244 = vmatprep.subr.bf16.mxu0 0
    %2245 = vmatpush2.bf16.msra.mxu0 0
    %2246 = vmatprep.subr.bf16.mxu0 0
    %2247 = vmatpush2.bf16.msra.mxu0 0
    %2248 = vmatprep.subr.bf16.mxu0 0
    %2249 = vmatpush2.bf16.msra.mxu0 0
    %2250 = vmatprep.mubr.bf16.mxu0 0
    %2251 = vmatmul.mubr.bf16.gmra.mxu0 %v2216
    %v2252 = vpop.f32.mrf.mxu0
    %v2253 = vadd.f32 0.0, %v2252
    %v2254 = vpop.f32.mrf.mxu0
    %v2255 = vpop.f32.mrf.mxu0
    %v2256 = vpop.f32.mrf.mxu0
    %2257 = vdwg.mxu0
    %v2258 = vsub.f32 0.0, %v2253
    %v2259 = vmul.f32 %v2258, 1.442695
    %v2260 = vpow.pop %v2259
    %v2261 = vadd.f32 %v2260, 1.0
    %v2262 = vrcp.pop %v2261
    %v2263 = vmul.f32 1.0, %v2262
    %v2264 = vtanh.pop %v2253
    %v2265 = vpack.c.bf16 %v2264, %v2264
    %v2267 = vrot.slane %v2265, 1
    %2268 = vrot.lane.b32.xlu0 %v2267, 124
    %v2269 = vpop.permute.xlu0 %2268
    %v2271 = vsel %vm319, %v2269, 0
    %2273 = vmatprep.subr.bf16.mxu0 0
    %2274 = vmatpush1.bf16.msra.mxu0 0
    %2275 = vmatprep.subr.bf16.mxu0 0
    %2276 = vmatpush1.bf16.msra.mxu0 0
    %2277 = vmatprep.subr.bf16.mxu0 0
    %2278 = vmatpush1.bf16.msra.mxu0 0
    %2279 = vmatprep.subr.bf16.mxu0 0
    %2280 = vmatpush1.bf16.msra.mxu0 0
    %2281 = vmatprep.subr.bf16.mxu0 0
    %2282 = vmatpush1.bf16.msra.mxu0 0
    %2283 = vmatprep.subr.bf16.mxu0 0
    %2284 = vmatpush1.bf16.msra.mxu0 0
    %2285 = vmatprep.subr.bf16.mxu0 0
    %2286 = vmatpush1.bf16.msra.mxu0 0
    %2287 = vmatprep.subr.bf16.mxu0 0
    %2288 = vmatpush1.bf16.msra.mxu0 %v317
    %2289 = vmatprep.subr.bf16.mxu0 0
    %2290 = vmatpush2.bf16.msra.mxu0 0
    %2291 = vmatprep.subr.bf16.mxu0 0
    %2292 = vmatpush2.bf16.msra.mxu0 0
    %2293 = vmatprep.subr.bf16.mxu0 0
    %2294 = vmatpush2.bf16.msra.mxu0 0
    %2295 = vmatprep.subr.bf16.mxu0 0
    %2296 = vmatpush2.bf16.msra.mxu0 0
    %2297 = vmatprep.subr.bf16.mxu0 0
    %2298 = vmatpush2.bf16.msra.mxu0 0
    %2299 = vmatprep.subr.bf16.mxu0 0
    %2300 = vmatpush2.bf16.msra.mxu0 0
    %2301 = vmatprep.subr.bf16.mxu0 0
    %2302 = vmatpush2.bf16.msra.mxu0 0
    %2303 = vmatprep.subr.bf16.mxu0 0
    %2304 = vmatpush2.bf16.msra.mxu0 0
    %2305 = vmatprep.mubr.bf16.mxu0 0
    %2306 = vmatmul.mubr.bf16.gmra.mxu0 %v2271
    %v2307 = vpop.f32.mrf.mxu0
    %v2308 = vadd.f32 0.0, %v2307
    %v2309 = vpop.f32.mrf.mxu0
    %v2310 = vpop.f32.mrf.mxu0
    %v2311 = vpop.f32.mrf.mxu0
    %2312 = vdwg.mxu0
    %v2313 = vtanh.pop %v2308
    %v2314 = vrot.slane %v310, 5
    %v2317 = vrot.slane %v2313, 7
    %v2319 = vrot.slane %v310, 4
    %v2321 = vsel %vm372, %v2313, %v2314
    %v2322 = vsel %vm374, %v2321, %v2317
    %v2323 = vsel %vm376, %v2322, %v2319
    %v2324 = vadd.f32 %v2323, %v211
    %v2325 = vpack.c.bf16 %v2324, %v2324
    %v2327 = vsel %vm392, %v2325, 0
    %2329 = vmatprep.subr.bf16.mxu0 0
    %2330 = vmatpush1.bf16.msra.mxu0 0
    %2331 = vmatprep.subr.bf16.mxu0 0
    %2332 = vmatpush1.bf16.msra.mxu0 0
    %2333 = vmatprep.subr.bf16.mxu0 0
    %2334 = vmatpush1.bf16.msra.mxu0 0
    %2335 = vmatprep.subr.bf16.mxu0 0
    %2336 = vmatpush1.bf16.msra.mxu0 0
    %2337 = vmatprep.subr.bf16.mxu0 0
    %2338 = vmatpush1.bf16.msra.mxu0 0
    %2339 = vmatprep.subr.bf16.mxu0 0
    %2340 = vmatpush1.bf16.msra.mxu0 0
    %2341 = vmatprep.subr.bf16.mxu0 0
    %2342 = vmatpush1.bf16.msra.mxu0 %v389
    %2343 = vmatprep.subr.bf16.mxu0 0
    %2344 = vmatpush1.bf16.msra.mxu0 %v388
    %2345 = vmatprep.subr.bf16.mxu0 0
    %2346 = vmatpush2.bf16.msra.mxu0 0
    %2347 = vmatprep.subr.bf16.mxu0 0
    %2348 = vmatpush2.bf16.msra.mxu0 0
    %2349 = vmatprep.subr.bf16.mxu0 0
    %2350 = vmatpush2.bf16.msra.mxu0 0
    %2351 = vmatprep.subr.bf16.mxu0 0
    %2352 = vmatpush2.bf16.msra.mxu0 0
    %2353 = vmatprep.subr.bf16.mxu0 0
    %2354 = vmatpush2.bf16.msra.mxu0 0
    %2355 = vmatprep.subr.bf16.mxu0 0
    %2356 = vmatpush2.bf16.msra.mxu0 0
    %2357 = vmatprep.subr.bf16.mxu0 0
    %2358 = vmatpush2.bf16.msra.mxu0 0
    %2359 = vmatprep.subr.bf16.mxu0 0
    %2360 = vmatpush2.bf16.msra.mxu0 0
    %2361 = vmatprep.mubr.bf16.mxu0 0
    %2362 = vmatmul.mubr.bf16.gmra.mxu0 %v2327
    %v2363 = vpop.f32.mrf.mxu0
    %v2364 = vadd.f32 0.0, %v2363
    %v2365 = vpop.f32.mrf.mxu0
    %v2366 = vpop.f32.mrf.mxu0
    %v2367 = vpop.f32.mrf.mxu0
    %2368 = vdwg.mxu0
    %v2370 = vrot.slane %v2364, 2
    %v2372 = vrot.slane %v2364, 6
    %v2374 = vsel %vm374, %v2370, %v2372
    %2375 = vmatprep.subr.bf16.mxu0 0
    %2376 = vmatpush1.bf16.msra.mxu0 0
    %2377 = vmatprep.subr.bf16.mxu0 0
    %2378 = vmatpush1.bf16.msra.mxu0 0
    %2379 = vmatprep.subr.bf16.mxu0 0
    %2380 = vmatpush1.bf16.msra.mxu0 0
    %2381 = vmatprep.subr.bf16.mxu0 0
    %2382 = vmatpush1.bf16.msra.mxu0 0
    %2383 = vmatprep.subr.bf16.mxu0 0
    %2384 = vmatpush1.bf16.msra.mxu0 0
    %2385 = vmatprep.subr.bf16.mxu0 0
    %2386 = vmatpush1.bf16.msra.mxu0 0
    %2387 = vmatprep.subr.bf16.mxu0 0
    %2388 = vmatpush1.bf16.msra.mxu0 %v1026
    %2389 = vmatprep.subr.bf16.mxu0 0
    %2390 = vmatpush1.bf16.msra.mxu0 %v1025
    %2391 = vmatprep.subr.bf16.mxu0 0
    %2392 = vmatpush2.bf16.msra.mxu0 0
    %2393 = vmatprep.subr.bf16.mxu0 0
    %2394 = vmatpush2.bf16.msra.mxu0 0
    %2395 = vmatprep.subr.bf16.mxu0 0
    %2396 = vmatpush2.bf16.msra.mxu0 0
    %2397 = vmatprep.subr.bf16.mxu0 0
    %2398 = vmatpush2.bf16.msra.mxu0 0
    %2399 = vmatprep.subr.bf16.mxu0 0
    %2400 = vmatpush2.bf16.msra.mxu0 0
    %2401 = vmatprep.subr.bf16.mxu0 0
    %2402 = vmatpush2.bf16.msra.mxu0 0
    %2403 = vmatprep.subr.bf16.mxu0 0
    %2404 = vmatpush2.bf16.msra.mxu0 0
    %2405 = vmatprep.subr.bf16.mxu0 0
    %2406 = vmatpush2.bf16.msra.mxu0 0
    %2407 = vmatprep.mubr.bf16.mxu0 0
    %2408 = vmatmul.mubr.bf16.gmra.mxu0 %v1941
    %v2409 = vpop.f32.mrf.mxu0
    %v2410 = vadd.f32 0.0, %v2409
    %v2411 = vpop.f32.mrf.mxu0
    %v2412 = vpop.f32.mrf.mxu0
    %v2413 = vpop.f32.mrf.mxu0
    %2414 = vdwg.mxu0
    %v2416 = vrot.slane %v2410, 2
    %v2418 = vrot.slane %v2410, 6
    %v2420 = vsel %vm374, %v2416, %v2418
    %v2421 = vsub.f32 %v2420, %v2410
    %2423 = vrot.lane.b32.xlu0 %v2421, 96
    %v2424 = vpop.permute.xlu0 %2423
    %v2426 = vmul.f32 %v2410, %v2424
    %v2427 = vpack.c.bf16 %v2426, %v2426
    %v2429 = vsel %vm392, %v2427, 0
    %2431 = vmatprep.subr.bf16.mxu0 0
    %2432 = vmatpush1.bf16.msra.mxu0 0
    %2433 = vmatprep.subr.bf16.mxu0 0
    %2434 = vmatpush1.bf16.msra.mxu0 0
    %2435 = vmatprep.subr.bf16.mxu0 0
    %2436 = vmatpush1.bf16.msra.mxu0 0
    %2437 = vmatprep.subr.bf16.mxu0 0
    %2438 = vmatpush1.bf16.msra.mxu0 0
    %2439 = vmatprep.subr.bf16.mxu0 0
    %2440 = vmatpush1.bf16.msra.mxu0 0
    %2441 = vmatprep.subr.bf16.mxu0 0
    %2442 = vmatpush1.bf16.msra.mxu0 0
    %2443 = vmatprep.subr.bf16.mxu0 0
    %2444 = vmatpush1.bf16.msra.mxu0 %v1091
    %2445 = vmatprep.subr.bf16.mxu0 0
    %2446 = vmatpush1.bf16.msra.mxu0 %v1090
    %2447 = vmatprep.subr.bf16.mxu0 0
    %2448 = vmatpush2.bf16.msra.mxu0 0
    %2449 = vmatprep.subr.bf16.mxu0 0
    %2450 = vmatpush2.bf16.msra.mxu0 0
    %2451 = vmatprep.subr.bf16.mxu0 0
    %2452 = vmatpush2.bf16.msra.mxu0 0
    %2453 = vmatprep.subr.bf16.mxu0 0
    %2454 = vmatpush2.bf16.msra.mxu0 0
    %2455 = vmatprep.subr.bf16.mxu0 0
    %2456 = vmatpush2.bf16.msra.mxu0 0
    %2457 = vmatprep.subr.bf16.mxu0 0
    %2458 = vmatpush2.bf16.msra.mxu0 0
    %2459 = vmatprep.subr.bf16.mxu0 0
    %2460 = vmatpush2.bf16.msra.mxu0 0
    %2461 = vmatprep.subr.bf16.mxu0 0
    %2462 = vmatpush2.bf16.msra.mxu0 0
    %2463 = vmatprep.mubr.bf16.mxu0 0
    %2464 = vmatmul.mubr.bf16.gmra.mxu0 %v2429
    %v2465 = vpop.f32.mrf.mxu0
    %v2466 = vadd.f32 0.0, %v2465
    %v2467 = vpop.f32.mrf.mxu0
    %v2468 = vpop.f32.mrf.mxu0
    %v2469 = vpop.f32.mrf.mxu0
    %2470 = vdwg.mxu0
    %v2471 = vmul.f32 %v2466, 0.35355338
    %v2472 = vsub.f32 0.0, %v2471
    %v2473 = vmul.f32 %v2472, 1.442695
    %v2474 = vpow.pop %v2473
    %v2475 = vadd.f32 %v2474, 1.0
    %v2476 = vrcp.pop %v2475
    %v2477 = vsub.f32 %v2374, %v2364
    %v2478 = vmul.f32 %v2476, %v2477
    %v2479 = vadd.f32 %v2364, %v2478
    %v2480 = vpack.c.bf16 %v2479, %v2479
    %v2482 = vsel %vm392, %v2480, 0
    %2484 = vmatprep.subr.bf16.mxu0 0
    %2485 = vmatpush1.bf16.msra.mxu0 0
    %2486 = vmatprep.subr.bf16.mxu0 0
    %2487 = vmatpush1.bf16.msra.mxu0 0
    %2488 = vmatprep.subr.bf16.mxu0 0
    %2489 = vmatpush1.bf16.msra.mxu0 0
    %2490 = vmatprep.subr.bf16.mxu0 0
    %2491 = vmatpush1.bf16.msra.mxu0 0
    %2492 = vmatprep.subr.bf16.mxu0 0
    %2493 = vmatpush1.bf16.msra.mxu0 0
    %2494 = vmatprep.subr.bf16.mxu0 0
    %2495 = vmatpush1.bf16.msra.mxu0 0
    %2496 = vmatprep.subr.bf16.mxu0 0
    %2497 = vmatpush1.bf16.msra.mxu0 %v454
    %2498 = vmatprep.subr.bf16.mxu0 0
    %2499 = vmatpush1.bf16.msra.mxu0 %v453
    %2500 = vmatprep.subr.bf16.mxu0 0
    %2501 = vmatpush2.bf16.msra.mxu0 0
    %2502 = vmatprep.subr.bf16.mxu0 0
    %2503 = vmatpush2.bf16.msra.mxu0 0
    %2504 = vmatprep.subr.bf16.mxu0 0
    %2505 = vmatpush2.bf16.msra.mxu0 0
    %2506 = vmatprep.subr.bf16.mxu0 0
    %2507 = vmatpush2.bf16.msra.mxu0 0
    %2508 = vmatprep.subr.bf16.mxu0 0
    %2509 = vmatpush2.bf16.msra.mxu0 0
    %2510 = vmatprep.subr.bf16.mxu0 0
    %2511 = vmatpush2.bf16.msra.mxu0 0
    %2512 = vmatprep.subr.bf16.mxu0 0
    %2513 = vmatpush2.bf16.msra.mxu0 0
    %2514 = vmatprep.subr.bf16.mxu0 0
    %2515 = vmatpush2.bf16.msra.mxu0 0
    %2516 = vmatprep.mubr.bf16.mxu0 0
    %2517 = vmatmul.mubr.bf16.gmra.mxu0 %v2482
    %v2518 = vpop.f32.mrf.mxu0
    %v2519 = vadd.f32 0.0, %v2518
    %v2520 = vpop.f32.mrf.mxu0
    %v2521 = vpop.f32.mrf.mxu0
    %v2522 = vpop.f32.mrf.mxu0
    %2523 = vdwg.mxu0
    %v2524 = vadd.f32 %v2324, %v2519
    %v2525 = vsel %vm501, %v2524, 0.0
    %2526 = vadd.xlane.f32.xlu0 %v2525
    %v2527 = vpop.xlane.xlu0 %2526
    %v2528 = vmul.f32 %v2527, %v505
    %v2529 = vsub.f32 %v2524, %v2528
    %v2530 = vmul.f32 %v2529, %v2529
    %v2531 = vsel %vm501, %v2530, 0.0
    %2532 = vadd.xlane.f32.xlu0 %v2531
    %v2533 = vpop.xlane.xlu0 %2532
    %v2534 = vmul.f32 %v2533, %v505
    %v2535 = vadd.f32 %v2534, 1e-05
    %v2536 = vrsqrt.pop %v2535
    %v2537 = vmul.f32 %v2529, %v2536
    %v2538 = vmul.f32 %v2537, %v520
    %v2539 = vadd.f32 %v2538, %v527
    %v2540 = vpack.c.bf16 %v2539, %v2539
    %v2542 = vsel %vm392, %v2540, 0
    %2544 = vmatprep.subr.bf16.mxu0 0
    %2545 = vmatpush1.bf16.msra.mxu0 0
    %2546 = vmatprep.subr.bf16.mxu0 0
    %2547 = vmatpush1.bf16.msra.mxu0 0
    %2548 = vmatprep.subr.bf16.mxu0 0
    %2549 = vmatpush1.bf16.msra.mxu0 0
    %2550 = vmatprep.subr.bf16.mxu0 0
    %2551 = vmatpush1.bf16.msra.mxu0 0
    %2552 = vmatprep.subr.bf16.mxu0 0
    %2553 = vmatpush1.bf16.msra.mxu0 0
    %2554 = vmatprep.subr.bf16.mxu0 0
    %2555 = vmatpush1.bf16.msra.mxu0 0
    %2556 = vmatprep.subr.bf16.mxu0 0
    %2557 = vmatpush1.bf16.msra.mxu0 %v540
    %2558 = vmatprep.subr.bf16.mxu0 0
    %2559 = vmatpush1.bf16.msra.mxu0 %v539
    %2560 = vmatprep.subr.bf16.mxu0 0
    %2561 = vmatpush2.bf16.msra.mxu0 0
    %2562 = vmatprep.subr.bf16.mxu0 0
    %2563 = vmatpush2.bf16.msra.mxu0 0
    %2564 = vmatprep.subr.bf16.mxu0 0
    %2565 = vmatpush2.bf16.msra.mxu0 0
    %2566 = vmatprep.subr.bf16.mxu0 0
    %2567 = vmatpush2.bf16.msra.mxu0 0
    %2568 = vmatprep.subr.bf16.mxu0 0
    %2569 = vmatpush2.bf16.msra.mxu0 0
    %2570 = vmatprep.subr.bf16.mxu0 0
    %2571 = vmatpush2.bf16.msra.mxu0 0
    %2572 = vmatprep.subr.bf16.mxu0 0
    %2573 = vmatpush2.bf16.msra.mxu0 0
    %2574 = vmatprep.subr.bf16.mxu0 0
    %2575 = vmatpush2.bf16.msra.mxu0 0
    %2576 = vmatprep.mubr.bf16.mxu0 0
    %2577 = vmatmul.mubr.bf16.gmra.mxu0 %v2542
    %v2578 = vpop.f32.mrf.mxu0
    %v2579 = vadd.f32 0.0, %v2578
    %v2580 = vpop.f32.mrf.mxu0
    %v2581 = vpop.f32.mrf.mxu0
    %v2582 = vpop.f32.mrf.mxu0
    %2583 = vdwg.mxu0
    %v2584 = vadd.f32 %v2539, %v2579
    %v2585 = vsel %vm501, %v2584, 0.0
    %2586 = vadd.xlane.f32.xlu0 %v2585
    %v2587 = vpop.xlane.xlu0 %2586
    %v2588 = vmul.f32 %v2587, %v505
    %v2589 = vsub.f32 %v2584, %v2588
    %v2590 = vmul.f32 %v2589, %v2589
    %v2591 = vsel %vm501, %v2590, 0.0
    %2592 = vadd.xlane.f32.xlu0 %v2591
    %v2593 = vpop.xlane.xlu0 %2592
    %v2594 = vmul.f32 %v2593, %v505
    %v2595 = vadd.f32 %v2594, 1e-05
    %v2596 = vrsqrt.pop %v2595
    %v2597 = vmul.f32 %v2589, %v2596
    %v2598 = vmul.f32 %v2597, %v604
    %v2599 = vadd.f32 %v2598, %v611
    %v2600 = vpack.c.bf16 %v2599, %v2599
    %v2602 = vsel %vm392, %v2600, 0
    %2604 = vmatprep.subr.bf16.mxu0 0
    %2605 = vmatpush1.bf16.msra.mxu0 0
    %2606 = vmatprep.subr.bf16.mxu0 0
    %2607 = vmatpush1.bf16.msra.mxu0 0
    %2608 = vmatprep.subr.bf16.mxu0 0
    %2609 = vmatpush1.bf16.msra.mxu0 0
    %2610 = vmatprep.subr.bf16.mxu0 0
    %2611 = vmatpush1.bf16.msra.mxu0 0
    %2612 = vmatprep.subr.bf16.mxu0 0
    %2613 = vmatpush1.bf16.msra.mxu0 0
    %2614 = vmatprep.subr.bf16.mxu0 0
    %2615 = vmatpush1.bf16.msra.mxu0 0
    %2616 = vmatprep.subr.bf16.mxu0 0
    %2617 = vmatpush1.bf16.msra.mxu0 %v624
    %2618 = vmatprep.subr.bf16.mxu0 0
    %2619 = vmatpush1.bf16.msra.mxu0 %v623
    %2620 = vmatprep.subr.bf16.mxu0 0
    %2621 = vmatpush2.bf16.msra.mxu0 0
    %2622 = vmatprep.subr.bf16.mxu0 0
    %2623 = vmatpush2.bf16.msra.mxu0 0
    %2624 = vmatprep.subr.bf16.mxu0 0
    %2625 = vmatpush2.bf16.msra.mxu0 0
    %2626 = vmatprep.subr.bf16.mxu0 0
    %2627 = vmatpush2.bf16.msra.mxu0 0
    %2628 = vmatprep.subr.bf16.mxu0 0
    %2629 = vmatpush2.bf16.msra.mxu0 0
    %2630 = vmatprep.subr.bf16.mxu0 0
    %2631 = vmatpush2.bf16.msra.mxu0 0
    %2632 = vmatprep.subr.bf16.mxu0 0
    %2633 = vmatpush2.bf16.msra.mxu0 0
    %2634 = vmatprep.subr.bf16.mxu0 0
    %2635 = vmatpush2.bf16.msra.mxu0 0
    %2636 = vmatprep.mubr.bf16.mxu0 0
    %2637 = vmatmul.mubr.bf16.gmra.mxu0 %v2602
    %v2638 = vpop.f32.mrf.mxu0
    %v2639 = vadd.f32 0.0, %v2638
    %v2640 = vpop.f32.mrf.mxu0
    %v2641 = vpop.f32.mrf.mxu0
    %v2642 = vpop.f32.mrf.mxu0
    %2643 = vdwg.mxu0
    %v2645 = vrot.slane %v2639, 2
    %v2647 = vrot.slane %v2639, 6
    %v2649 = vsel %vm374, %v2645, %v2647
    %2650 = vmatprep.subr.bf16.mxu0 0
    %2651 = vmatpush1.bf16.msra.mxu0 0
    %2652 = vmatprep.subr.bf16.mxu0 0
    %2653 = vmatpush1.bf16.msra.mxu0 0
    %2654 = vmatprep.subr.bf16.mxu0 0
    %2655 = vmatpush1.bf16.msra.mxu0 0
    %2656 = vmatprep.subr.bf16.mxu0 0
    %2657 = vmatpush1.bf16.msra.mxu0 0
    %2658 = vmatprep.subr.bf16.mxu0 0
    %2659 = vmatpush1.bf16.msra.mxu0 0
    %2660 = vmatprep.subr.bf16.mxu0 0
    %2661 = vmatpush1.bf16.msra.mxu0 0
    %2662 = vmatprep.subr.bf16.mxu0 0
    %2663 = vmatpush1.bf16.msra.mxu0 %v1325
    %2664 = vmatprep.subr.bf16.mxu0 0
    %2665 = vmatpush1.bf16.msra.mxu0 %v1324
    %2666 = vmatprep.subr.bf16.mxu0 0
    %2667 = vmatpush2.bf16.msra.mxu0 0
    %2668 = vmatprep.subr.bf16.mxu0 0
    %2669 = vmatpush2.bf16.msra.mxu0 0
    %2670 = vmatprep.subr.bf16.mxu0 0
    %2671 = vmatpush2.bf16.msra.mxu0 0
    %2672 = vmatprep.subr.bf16.mxu0 0
    %2673 = vmatpush2.bf16.msra.mxu0 0
    %2674 = vmatprep.subr.bf16.mxu0 0
    %2675 = vmatpush2.bf16.msra.mxu0 0
    %2676 = vmatprep.subr.bf16.mxu0 0
    %2677 = vmatpush2.bf16.msra.mxu0 0
    %2678 = vmatprep.subr.bf16.mxu0 0
    %2679 = vmatpush2.bf16.msra.mxu0 0
    %2680 = vmatprep.subr.bf16.mxu0 0
    %2681 = vmatpush2.bf16.msra.mxu0 0
    %2682 = vmatprep.mubr.bf16.mxu0 0
    %2683 = vmatmul.mubr.bf16.gmra.mxu0 %v2216
    %v2684 = vpop.f32.mrf.mxu0
    %v2685 = vadd.f32 0.0, %v2684
    %v2686 = vpop.f32.mrf.mxu0
    %v2687 = vpop.f32.mrf.mxu0
    %v2688 = vpop.f32.mrf.mxu0
    %2689 = vdwg.mxu0
    %v2691 = vrot.slane %v2685, 2
    %v2693 = vrot.slane %v2685, 6
    %v2695 = vsel %vm374, %v2691, %v2693
    %v2696 = vsub.f32 %v2695, %v2685
    %2698 = vrot.lane.b32.xlu0 %v2696, 96
    %v2699 = vpop.permute.xlu0 %2698
    %v2701 = vmul.f32 %v2685, %v2699
    %v2702 = vpack.c.bf16 %v2701, %v2701
    %v2704 = vsel %vm392, %v2702, 0
    %2706 = vmatprep.subr.bf16.mxu0 0
    %2707 = vmatpush1.bf16.msra.mxu0 0
    %2708 = vmatprep.subr.bf16.mxu0 0
    %2709 = vmatpush1.bf16.msra.mxu0 0
    %2710 = vmatprep.subr.bf16.mxu0 0
    %2711 = vmatpush1.bf16.msra.mxu0 0
    %2712 = vmatprep.subr.bf16.mxu0 0
    %2713 = vmatpush1.bf16.msra.mxu0 0
    %2714 = vmatprep.subr.bf16.mxu0 0
    %2715 = vmatpush1.bf16.msra.mxu0 0
    %2716 = vmatprep.subr.bf16.mxu0 0
    %2717 = vmatpush1.bf16.msra.mxu0 0
    %2718 = vmatprep.subr.bf16.mxu0 0
    %2719 = vmatpush1.bf16.msra.mxu0 %v1091
    %2720 = vmatprep.subr.bf16.mxu0 0
    %2721 = vmatpush1.bf16.msra.mxu0 %v1090
    %2722 = vmatprep.subr.bf16.mxu0 0
    %2723 = vmatpush2.bf16.msra.mxu0 0
    %2724 = vmatprep.subr.bf16.mxu0 0
    %2725 = vmatpush2.bf16.msra.mxu0 0
    %2726 = vmatprep.subr.bf16.mxu0 0
    %2727 = vmatpush2.bf16.msra.mxu0 0
    %2728 = vmatprep.subr.bf16.mxu0 0
    %2729 = vmatpush2.bf16.msra.mxu0 0
    %2730 = vmatprep.subr.bf16.mxu0 0
    %2731 = vmatpush2.bf16.msra.mxu0 0
    %2732 = vmatprep.subr.bf16.mxu0 0
    %2733 = vmatpush2.bf16.msra.mxu0 0
    %2734 = vmatprep.subr.bf16.mxu0 0
    %2735 = vmatpush2.bf16.msra.mxu0 0
    %2736 = vmatprep.subr.bf16.mxu0 0
    %2737 = vmatpush2.bf16.msra.mxu0 0
    %2738 = vmatprep.mubr.bf16.mxu0 0
    %2739 = vmatmul.mubr.bf16.gmra.mxu0 %v2704
    %v2740 = vpop.f32.mrf.mxu0
    %v2741 = vadd.f32 0.0, %v2740
    %v2742 = vpop.f32.mrf.mxu0
    %v2743 = vpop.f32.mrf.mxu0
    %v2744 = vpop.f32.mrf.mxu0
    %2745 = vdwg.mxu0
    %v2746 = vmul.f32 %v2741, 0.35355338
    %v2747 = vsub.f32 0.0, %v2746
    %v2748 = vmul.f32 %v2747, 1.442695
    %v2749 = vpow.pop %v2748
    %v2750 = vadd.f32 %v2749, 1.0
    %v2751 = vrcp.pop %v2750
    %v2752 = vsub.f32 %v2649, %v2639
    %v2753 = vmul.f32 %v2751, %v2752
    %v2754 = vadd.f32 %v2639, %v2753
    %v2755 = vpack.c.bf16 %v2754, %v2754
    %v2757 = vsel %vm392, %v2755, 0
    %2759 = vmatprep.subr.bf16.mxu0 0
    %2760 = vmatpush1.bf16.msra.mxu0 0
    %2761 = vmatprep.subr.bf16.mxu0 0
    %2762 = vmatpush1.bf16.msra.mxu0 0
    %2763 = vmatprep.subr.bf16.mxu0 0
    %2764 = vmatpush1.bf16.msra.mxu0 0
    %2765 = vmatprep.subr.bf16.mxu0 0
    %2766 = vmatpush1.bf16.msra.mxu0 0
    %2767 = vmatprep.subr.bf16.mxu0 0
    %2768 = vmatpush1.bf16.msra.mxu0 0
    %2769 = vmatprep.subr.bf16.mxu0 0
    %2770 = vmatpush1.bf16.msra.mxu0 0
    %2771 = vmatprep.subr.bf16.mxu0 0
    %2772 = vmatpush1.bf16.msra.mxu0 %v688
    %2773 = vmatprep.subr.bf16.mxu0 0
    %2774 = vmatpush1.bf16.msra.mxu0 %v687
    %2775 = vmatprep.subr.bf16.mxu0 0
    %2776 = vmatpush2.bf16.msra.mxu0 0
    %2777 = vmatprep.subr.bf16.mxu0 0
    %2778 = vmatpush2.bf16.msra.mxu0 0
    %2779 = vmatprep.subr.bf16.mxu0 0
    %2780 = vmatpush2.bf16.msra.mxu0 0
    %2781 = vmatprep.subr.bf16.mxu0 0
    %2782 = vmatpush2.bf16.msra.mxu0 0
    %2783 = vmatprep.subr.bf16.mxu0 0
    %2784 = vmatpush2.bf16.msra.mxu0 0
    %2785 = vmatprep.subr.bf16.mxu0 0
    %2786 = vmatpush2.bf16.msra.mxu0 0
    %2787 = vmatprep.subr.bf16.mxu0 0
    %2788 = vmatpush2.bf16.msra.mxu0 0
    %2789 = vmatprep.subr.bf16.mxu0 0
    %2790 = vmatpush2.bf16.msra.mxu0 0
    %2791 = vmatprep.mubr.bf16.mxu0 0
    %2792 = vmatmul.mubr.bf16.gmra.mxu0 %v2757
    %v2793 = vpop.f32.mrf.mxu0
    %v2794 = vadd.f32 0.0, %v2793
    %v2795 = vpop.f32.mrf.mxu0
    %v2796 = vpop.f32.mrf.mxu0
    %v2797 = vpop.f32.mrf.mxu0
    %2798 = vdwg.mxu0
    %v2799 = vadd.f32 %v2599, %v2794
    %v2800 = vsel %vm501, %v2799, 0.0
    %2801 = vadd.xlane.f32.xlu0 %v2800
    %v2802 = vpop.xlane.xlu0 %2801
    %v2803 = vmul.f32 %v2802, %v505
    %v2804 = vsub.f32 %v2799, %v2803
    %v2805 = vmul.f32 %v2804, %v2804
    %v2806 = vsel %vm501, %v2805, 0.0
    %2807 = vadd.xlane.f32.xlu0 %v2806
    %v2808 = vpop.xlane.xlu0 %2807
    %v2809 = vmul.f32 %v2808, %v505
    %v2810 = vadd.f32 %v2809, 1e-05
    %v2811 = vrsqrt.pop %v2810
    %v2812 = vmul.f32 %v2804, %v2811
    %v2813 = vmul.f32 %v2812, %v752
    %v2814 = vadd.f32 %v2813, %v759
    %v2815 = vpack.c.bf16 %v2814, %v2814
    %v2817 = vsel %vm392, %v2815, 0
    %2819 = vmatprep.subr.bf16.mxu0 0
    %2820 = vmatpush1.bf16.msra.mxu0 0
    %2821 = vmatprep.subr.bf16.mxu0 0
    %2822 = vmatpush1.bf16.msra.mxu0 0
    %2823 = vmatprep.subr.bf16.mxu0 0
    %2824 = vmatpush1.bf16.msra.mxu0 0
    %2825 = vmatprep.subr.bf16.mxu0 0
    %2826 = vmatpush1.bf16.msra.mxu0 0
    %2827 = vmatprep.subr.bf16.mxu0 0
    %2828 = vmatpush1.bf16.msra.mxu0 0
    %2829 = vmatprep.subr.bf16.mxu0 0
    %2830 = vmatpush1.bf16.msra.mxu0 0
    %2831 = vmatprep.subr.bf16.mxu0 0
    %2832 = vmatpush1.bf16.msra.mxu0 %v772
    %2833 = vmatprep.subr.bf16.mxu0 0
    %2834 = vmatpush1.bf16.msra.mxu0 %v771
    %2835 = vmatprep.subr.bf16.mxu0 0
    %2836 = vmatpush2.bf16.msra.mxu0 0
    %2837 = vmatprep.subr.bf16.mxu0 0
    %2838 = vmatpush2.bf16.msra.mxu0 0
    %2839 = vmatprep.subr.bf16.mxu0 0
    %2840 = vmatpush2.bf16.msra.mxu0 0
    %2841 = vmatprep.subr.bf16.mxu0 0
    %2842 = vmatpush2.bf16.msra.mxu0 0
    %2843 = vmatprep.subr.bf16.mxu0 0
    %2844 = vmatpush2.bf16.msra.mxu0 0
    %2845 = vmatprep.subr.bf16.mxu0 0
    %2846 = vmatpush2.bf16.msra.mxu0 0
    %2847 = vmatprep.subr.bf16.mxu0 0
    %2848 = vmatpush2.bf16.msra.mxu0 0
    %2849 = vmatprep.subr.bf16.mxu0 0
    %2850 = vmatpush2.bf16.msra.mxu0 0
    %2851 = vmatprep.mubr.bf16.mxu0 0
    %2852 = vmatmul.mubr.bf16.gmra.mxu0 %v2817
    %v2853 = vpop.f32.mrf.mxu0
    %v2854 = vadd.f32 0.0, %v2853
    %v2855 = vpop.f32.mrf.mxu0
    %v2856 = vpop.f32.mrf.mxu0
    %v2857 = vpop.f32.mrf.mxu0
    %2858 = vdwg.mxu0
    %v2859 = vadd.f32 %v2814, %v2854
    %v2860 = vsel %vm501, %v2859, 0.0
    %2861 = vadd.xlane.f32.xlu0 %v2860
    %v2862 = vpop.xlane.xlu0 %2861
    %v2863 = vmul.f32 %v2862, %v505
    %v2864 = vsub.f32 %v2859, %v2863
    %v2865 = vmul.f32 %v2864, %v2864
    %v2866 = vsel %vm501, %v2865, 0.0
    %2867 = vadd.xlane.f32.xlu0 %v2866
    %v2868 = vpop.xlane.xlu0 %2867
    %v2869 = vmul.f32 %v2868, %v505
    %v2870 = vadd.f32 %v2869, 1e-05
    %v2871 = vrsqrt.pop %v2870
    %v2872 = vmul.f32 %v2864, %v2871
    %v2873 = vmul.f32 %v2872, %v836
    %v2874 = vadd.f32 %v2873, %v843
    %v2875 = vpack.c.bf16 %v2874, %v2874
    %v2877 = vsel %vm392, %v2875, 0
    %2879 = vmatprep.subr.bf16.mxu0 0
    %2880 = vmatpush1.bf16.msra.mxu0 0
    %2881 = vmatprep.subr.bf16.mxu0 0
    %2882 = vmatpush1.bf16.msra.mxu0 0
    %2883 = vmatprep.subr.bf16.mxu0 0
    %2884 = vmatpush1.bf16.msra.mxu0 0
    %2885 = vmatprep.subr.bf16.mxu0 0
    %2886 = vmatpush1.bf16.msra.mxu0 0
    %2887 = vmatprep.subr.bf16.mxu0 0
    %2888 = vmatpush1.bf16.msra.mxu0 0
    %2889 = vmatprep.subr.bf16.mxu0 0
    %2890 = vmatpush1.bf16.msra.mxu0 0
    %2891 = vmatprep.subr.bf16.mxu0 0
    %2892 = vmatpush1.bf16.msra.mxu0 %v856
    %2893 = vmatprep.subr.bf16.mxu0 0
    %2894 = vmatpush1.bf16.msra.mxu0 %v855
    %2895 = vmatprep.subr.bf16.mxu0 0
    %2896 = vmatpush2.bf16.msra.mxu0 0
    %2897 = vmatprep.subr.bf16.mxu0 0
    %2898 = vmatpush2.bf16.msra.mxu0 0
    %2899 = vmatprep.subr.bf16.mxu0 0
    %2900 = vmatpush2.bf16.msra.mxu0 0
    %2901 = vmatprep.subr.bf16.mxu0 0
    %2902 = vmatpush2.bf16.msra.mxu0 0
    %2903 = vmatprep.subr.bf16.mxu0 0
    %2904 = vmatpush2.bf16.msra.mxu0 0
    %2905 = vmatprep.subr.bf16.mxu0 0
    %2906 = vmatpush2.bf16.msra.mxu0 0
    %2907 = vmatprep.subr.bf16.mxu0 0
    %2908 = vmatpush2.bf16.msra.mxu0 0
    %2909 = vmatprep.subr.bf16.mxu0 0
    %2910 = vmatpush2.bf16.msra.mxu0 0
    %2911 = vmatprep.mubr.bf16.mxu0 0
    %2912 = vmatmul.mubr.bf16.gmra.mxu0 %v2877
    %v2913 = vpop.f32.mrf.mxu0
    %v2914 = vadd.f32 0.0, %v2913
    %v2915 = vpop.f32.mrf.mxu0
    %v2916 = vpop.f32.mrf.mxu0
    %v2917 = vpop.f32.mrf.mxu0
    %2918 = vdwg.mxu0
    %v2919 = vsub.f32 0.0, %v2914
    %v2920 = vmul.f32 %v2919, 1.442695
    %v2921 = vpow.pop %v2920
    %v2922 = vadd.f32 %v2921, 1.0
    %v2923 = vrcp.pop %v2922
    %v2924 = vmul.f32 1.0, %v2923
    %v2925 = vtanh.pop %v2914
    %2927 = vrot.lane.b32.xlu0 %v1602, 4
    %v2928 = vpop.permute.xlu0 %2927
    %2931 = vrot.lane.b32.xlu0 %v2263, 8
    %v2932 = vpop.permute.xlu0 %2931
    %2935 = vrot.lane.b32.xlu0 %v2924, 12
    %v2936 = vpop.permute.xlu0 %2935
    %vm2938 = vcmask 31744
    %v2939 = vsel %vm2938, %v907, %v2928
    %v2940 = vsel %vm262, %v2939, %v2932
    %vm2941 = vcmask 97280
    %v2942 = vsel %vm2941, %v2940, %v2936
    %vm2943 = vcmask 123904
    %2944 = vst.msk [vmem:[#allocation20] sm:$0x3] %vm2943, %v2942
    %2946 = vrot.lane.b32.xlu0 %v908, 124
    %v2947 = vpop.permute.xlu0 %2946
    %2950 = vrot.lane.b32.xlu0 %v1603, 12
    %v2951 = vpop.permute.xlu0 %2950
    %2954 = vrot.lane.b32.xlu0 %v2264, 28
    %v2955 = vpop.permute.xlu0 %2954
    %2958 = vrot.lane.b32.xlu0 %v2925, 44
    %v2959 = vpop.permute.xlu0 %2958
    %v2961 = vsel %vm319, %v2947, %v2951
    %v2962 = vsel %vm392, %v2961, %v2955
    %vm2963 = vcmask 392192
    %v2964 = vsel %vm2963, %v2962, %v2959
    %vm2965 = vcmask 519170
    %2966 = vst.msk [vmem:[#allocation21 - $0x2] sm:$0xc] %vm2965, %v2964
    // Predicated region
    $region106: #{tpu_custom_call.1} parent=1 // pred_check
      _
    $region107: #{tpu_custom_call.1} parent=1 // pred_check_branch
      %2968 = sbr.rel (0) target = $region109
    $region108: #{tpu_custom_call.1} parent=1 // pred_region
      %s2970 = ssub.s32 32, 32
      %2971 = vsyncadd [#allocation4], %s2970
      %s2973 = sshll.u32 [#allocation20], 4
      %s2974 = int_to_ptr.vmem [resolvable:$true] %s2973
      %2976 = dma.vmem_to_hbm [thread:$0]  %s2974, 32, %s15, [#allocation4]
    $region109: #{tpu_custom_call.1} parent=1 // pred_fallthru
      _
    // Predicated region
    $region110: #{tpu_custom_call.1} parent=1 // pred_check
      _
    $region111: #{tpu_custom_call.1} parent=1 // pred_check_branch
      %2978 = sbr.rel (0) target = $region113
    $region112: #{tpu_custom_call.1} parent=1 // pred_region
      %s2980 = ssub.s32 32, 32
      %2981 = vsyncadd [#allocation22], %s2980
      %s2983 = sshll.u32 [#allocation21], 4
      %s2984 = int_to_ptr.vmem [resolvable:$true] %s2983
      %2986 = dma.vmem_to_hbm [thread:$0]  %s2984, 32, %s16, [#allocation22]
    $region113: #{tpu_custom_call.1} parent=1 // pred_fallthru
      _
    // Predicated region
    $region114: #{tpu_custom_call.1} parent=1 // pred_check
      _
    $region115: #{tpu_custom_call.1} parent=1 // pred_check_branch
      %2988 = sbr.rel (0) target = $region117
    $region116: #{tpu_custom_call.1} parent=1 // pred_region
      %2989 = dma.done [#allocation4], 32
    $region117: #{tpu_custom_call.1} parent=1 // pred_fallthru
      _
    // Predicated region
    $region118: #{tpu_custom_call.1} parent=1 // pred_check
      _
    $region119: #{tpu_custom_call.1} parent=1 // pred_check_branch
      %2991 = sbr.rel (0) target = $region121
    $region120: #{tpu_custom_call.1} parent=1 // pred_region
      %2992 = dma.done [#allocation22], 32
    $region121: #{tpu_custom_call.1} parent=1 // pred_fallthru
      _
    %2993 = vsyncpa [#allocation3], 1
    %2994 = vsyncpa [#allocation6], 1
    %2995 = vsyncpa [#allocation9], 1
    %2996 = vsyncpa [#allocation12], 1
    %2997 = vsyncpa [#allocation15], 1
    %2998 = vsyncpa [#allocation18], 1
    %2999 = vsyncpa [#allocation4], 1
    %3000 = vsyncpa [#allocation22], 1

</llo_original>
